<compile_context>
chip_gen: v5e
topology: v5e:2x2
jax: 0.10.0
libtpu: 0.0.40
codegen_flags: <defaults>
</compile_context>

<pallas_src>
import functools

import jax
import jax.numpy as jnp
import numpy as np
from jax.experimental import pallas as pl
from jax.experimental.pallas import tpu as pltpu

NEG_SLOPE_GAT = 0.2    # GATv2Conv default negative_slope
NEG_SLOPE_OUT = 0.01   # nn.LeakyReLU() default
MASK_VAL = -1e30
OUT_SLOPES = (None, NEG_SLOPE_OUT, None, NEG_SLOPE_OUT)   # self.relu after conv_2 and conv_4


def _leaky(x, slope):
    return jnp.where(x > 0, x, slope * x)


# --------------------------- fused forward (single Pallas kernel) -------------------

def fused_forward_kernel(x_ref, adj_bias_ref, eflat_ref, member_ref, member_t_ref,
                         *rest, out_slopes):
    """4 x GATv2Conv (+fused LeakyReLU after layers 2 & 4) + GlobalAttention + MLP.

    rest = 7 params per GAT layer (wl, bl, wr, br, we, att_exp, bias) * 4 layers
         + 6 head params (gw, gb, w1, b1, w2, b2) + the single output ref.
    """
    out_ref = rest[-1]
    params = rest[:-1]

    x = x_ref[...]                    # (N, Fin)
    adj_bias = adj_bias_ref[...]      # (N, N, 1): 0 on edges, -1e30 elsewhere
    eflat = eflat_ref[...]            # (N*N, E)
    member = member_ref[...]          # (G, N)
    member_t = member_t_ref[...]      # (N, G)
    n = x.shape[0]

    h = x
    for k in range(4):                # 4 GATv2 layers, statically unrolled in one trace
        wl, bl, wr, br, we, att_exp, bias = (r[...] for r in params[7 * k: 7 * k + 7])
        hc = wl.shape[-1]             # heads * out_channels

        # GATv2: x_l = W_l h + b_l, x_r = W_r h + b_r, e_ij = W_e edge_attr_ij
        xl = jnp.dot(h, wl, preferred_element_type=jnp.float32) + bl        # (N, HC)
        xr = jnp.dot(h, wr, preferred_element_type=jnp.float32) + br        # (N, HC)
        e = jnp.dot(eflat, we, preferred_element_type=jnp.float32).reshape(n, n, hc)

        # z[i, j] = LeakyReLU(x_r[dst=i] + x_l[src=j] + e[i, j])
        z = _leaky(xr[:, None, :] + xl[None, :, :] + e, NEG_SLOPE_GAT)      # (N, N, HC)

        # All-head attention logits in ONE matmul: att_exp is (HC, HC) block-structured
        # so s[:, :, h*C+c] is head h's logit replicated over that head's C lanes.
        s = jnp.dot(z.reshape(n * n, hc), att_exp,
                    preferred_element_type=jnp.float32).reshape(n, n, hc)
        s = s + adj_bias                                    # mask non-edges (additive -1e30)
        s = s - jnp.max(s, axis=1, keepdims=True)           # stabilize over sources (axis 1)
        p = jnp.exp(s)
        alpha = p * pl.reciprocal(jnp.sum(p, axis=1, keepdims=True), approx=True)

        # out[i, h*C+c] = sum_j alpha[i, j, h] * x_l[j, h*C+c]  (heads stay interleaved)
        h = jnp.sum(alpha * xl[None, :, :], axis=1) + bias                  # (N, HC)
        if out_slopes[k] is not None:                        # fused outer nn.LeakyReLU()
            h = _leaky(h, out_slopes[k])

    # GlobalAttention pooling with a per-graph masked max (numerically safe), then MLP.
    gw, gb, w1, b1, w2, b2 = (r[...] for r in params[28:34])
    gate = jnp.dot(h, gw, preferred_element_type=jnp.float32) + gb          # (N, 1)
    masked = jnp.where(member_t > 0, gate, MASK_VAL)                        # (N, G)
    gmax = jnp.max(masked, axis=0, keepdims=True)                           # (1, G)
    shift = jnp.sum(member_t * gmax, axis=1, keepdims=True)                 # (N, 1) per-node graph max
    eg = jnp.exp(gate - shift)                                              # (N, 1)
    denom = jnp.dot(member, eg, preferred_element_type=jnp.float32)         # (G, 1)
    numer = jnp.dot(member, eg * h, preferred_element_type=jnp.float32)     # (G, F)
    pooled = numer * pl.reciprocal(denom, approx=True)                      # (G, F)
    hid = _leaky(jnp.dot(pooled, w1, preferred_element_type=jnp.float32) + b1,
                 NEG_SLOPE_OUT)                                             # fc_1 + LeakyReLU
    out_ref[...] = jnp.dot(hid, w2, preferred_element_type=jnp.float32) + b2


def graph_conv_attention_forward(x, adj, eattr, member, params):
    """Whole-module forward as ONE pallas_call; all operands (<~200 KiB) stay in VMEM."""
    n = x.shape[0]
    g = member.shape[0]
    eflat = eattr.reshape(n * n, eattr.shape[-1])        # flatten once, outside the kernel
    adj_bias = jnp.where(adj > 0, 0.0, MASK_VAL)[:, :, None].astype(jnp.float32)
    member_t = member.T

    flat_params = []
    for lp in params["layers"]:
        flat_params += [lp["wl"], lp["bl"], lp["wr"], lp["br"], lp["we"],
                        lp["att_exp"], lp["bias"]]
    hp = params["head"]
    flat_params += [hp["gw"], hp["gb"], hp["w1"], hp["b1"], hp["w2"], hp["b2"]]

    vmem = pl.BlockSpec(memory_space=pltpu.MemorySpace.VMEM)
    kernel = functools.partial(fused_forward_kernel, out_slopes=OUT_SLOPES)
    return pl.pallas_call(
        kernel,
        out_shape=jax.ShapeDtypeStruct((g, 1), jnp.float32),
        in_specs=[vmem] * (5 + len(flat_params)),
        out_specs=vmem,
    )(x, adj_bias, eflat, member, member_t, *flat_params)


# ----------------------------- parameter init / prep --------------------------------

def glorot(key, shape):
    fan_in, fan_out = shape[0], shape[-1]
    lim = (6.0 / (fan_in + fan_out)) ** 0.5
    return jax.random.uniform(key, shape, jnp.float32, -lim, lim)


def expand_att(att, heads, out_ch):
    """(1, H*C) attention vector -> (H*C, H*C) block matrix whose column h*C+c holds head
    h's attention vector, so one matmul yields every head's logit replicated across that
    head's channels (eliminates per-head lane slicing / concat inside the kernel)."""
    hc = heads * out_ch
    head_id = np.arange(hc) // out_ch
    same_head = jnp.asarray((head_id[:, None] == head_id[None, :]).astype(np.float32))
    return att.reshape(hc, 1) * same_head


def init_gat(key, fin, edim, heads, out_ch):
    hc = heads * out_ch
    ks = jax.random.split(key, 7)
    p = {
        "wl": glorot(ks[0], (fin, hc)),
        "bl": 0.1 * jax.random.normal(ks[1], (1, hc), jnp.float32),
        "wr": glorot(ks[2], (fin, hc)),
        "br": 0.1 * jax.random.normal(ks[3], (1, hc), jnp.float32),
        "we": glorot(ks[4], (edim, hc)),      # lin_edge has no bias in GATv2Conv
        "att": glorot(ks[5], (1, hc)),        # attention vector a (heads * out_ch)
        "bias": 0.1 * jax.random.normal(ks[6], (1, hc), jnp.float32),
    }
    p["att_exp"] = expand_att(p["att"], heads, out_ch)
    return p


def init_head(key):
    ks = jax.random.split(key, 6)
    return {
        "gw": glorot(ks[0], (15, 1)),                                    # gate_nn
        "gb": 0.1 * jax.random.normal(ks[1], (1, 1), jnp.float32),
        "w1": glorot(ks[2], (15, 10)),                                   # fc_1
        "b1": 0.1 * jax.random.normal(ks[3], (1, 10), jnp.float32),
        "w2": glorot(ks[4], (10, 1)),                                    # fc_2
        "b2": 0.1 * jax.random.normal(ks[5], (1, 1), jnp.float32),
    }


# ----------------------------- pure-JAX reference ------------------------------------

def gatv2_ref(x, adj, eattr, p, *, heads, out_ch, out_slope=None):
    n = adj.shape[0]
    hc = heads * out_ch
    xl = x @ p["wl"] + p["bl"]
    xr = x @ p["wr"] + p["br"]
    e = (eattr.reshape(n * n, -1) @ p["we"]).reshape(n, n, hc)
    z = _leaky(xr[:, None, :] + xl[None, :, :] + e, NEG_SLOPE_GAT)
    outs = []
    for h in range(heads):
        lo, hi = h * out_ch, (h + 1) * out_ch
        s = jnp.sum(z[:, :, lo:hi] * p["att"][:, lo:hi][None, :, :], axis=-1)
        s = jnp.where(adj > 0, s, -jnp.inf)
        alpha = jax.nn.softmax(s, axis=-1)
        outs.append(alpha @ xl[:, lo:hi])
    out = jnp.concatenate(outs, axis=-1) + p["bias"]
    return _leaky(out, out_slope) if out_slope is not None else out


def readout_ref(x, member, p, slope=NEG_SLOPE_OUT):
    gate = x @ p["gw"] + p["gb"]                              # (N, 1)
    s = jnp.where(member > 0, gate[:, 0][None, :], -jnp.inf)  # (G, N)
    alpha = jax.nn.softmax(s, axis=-1)
    pooled = alpha @ x
    h = _leaky(pooled @ p["w1"] + p["b1"], slope)
    return h @ p["w2"] + p["b2"]


# ----------------------------------- main --------------------------------------------

if __name__ == "__main__":
    NODE_FEAT = 16
    EDGE_FEAT = 4
    GRAPHS = 2
    NODES_PER_GRAPH = 8
    N = GRAPHS * NODES_PER_GRAPH

    root = jax.random.PRNGKey(0)
    k_x, k_ea, k_p = jax.random.split(root, 3)

    # synthetic batched graph: 2 graphs x 8 nodes, ring + skip edges (no self-loops)
    src, dst = [], []
    for g in range(GRAPHS):
        base = g * NODES_PER_GRAPH
        for j in range(NODES_PER_GRAPH):
            for off in (1, 3):
                src.append(base + j)
                dst.append(base + (j + off) % NODES_PER_GRAPH)
    src = np.array(src)
    dst = np.array(dst)
    num_edges = src.shape[0]
    batch = np.repeat(np.arange(GRAPHS), NODES_PER_GRAPH)

    x = jax.random.normal(k_x, (N, NODE_FEAT), jnp.float32)
    edge_attr = np.asarray(jax.random.normal(k_ea, (num_edges, EDGE_FEAT), jnp.float32))

    # dense adjacency + dense edge features; self-loops added as in GATv2Conv
    # (add_self_loops with fill_value='mean' over incoming edge features).
    adj_np = np.zeros((N, N), np.float32)
    eattr_np = np.zeros((N, N, EDGE_FEAT), np.float32)
    adj_np[dst, src] = 1.0
    eattr_np[dst, src] = edge_attr
    for i in range(N):
        inc = edge_attr[dst == i]
        adj_np[i, i] = 1.0
        eattr_np[i, i] = inc.mean(axis=0) if inc.shape[0] else 0.0
    adj = jnp.asarray(adj_np)
    eattr = jnp.asarray(eattr_np)
    member = jnp.asarray((batch[None, :] == np.arange(GRAPHS)[:, None]).astype(np.float32))

    # deterministic parameters (module shapes: 3*3, 3*5, 3*5, 3*5, gate 15->1, 15->10->1)
    ks = jax.random.split(k_p, 5)
    conv_cfg = [(NODE_FEAT, 3, 3), (9, 3, 5), (15, 3, 5), (15, 3, 5)]
    layers = [init_gat(kk, fin, EDGE_FEAT, heads, out_ch)
              for kk, (fin, heads, out_ch) in zip(ks[:4], conv_cfg)]
    head = init_head(ks[4])
    params = {"layers": layers, "head": head}

    # Pallas forward: ONE fused kernel for the whole module
    fwd = jax.jit(graph_conv_attention_forward)
    out = jax.block_until_ready(fwd(x, adj, eattr, member, params))

    # pure-JAX reference of the same dense math (exact division, per-head loop)
    r = x
    for p, slope, (_, heads, out_ch) in zip(layers, OUT_SLOPES, conv_cfg):
        r = gatv2_ref(r, adj, eattr, p, heads=heads, out_ch=out_ch, out_slope=slope)
    ref = readout_ref(r, member, head)

    assert out.shape == (GRAPHS, 1)
    # Slightly relaxed tolerance: the kernel uses the approximate EUP reciprocal for the
    # softmax/pooling denominators (per perf guidance); the reference uses exact division.
    np.testing.assert_allclose(np.asarray(out), np.asarray(ref), rtol=5e-3, atol=5e-3)
    print("KERNEL_OK")
</pallas_src>

<mosaic_0001>
module attributes {stable_mosaic.version = 11 : i64} {
  func.func @fused_forward_kernel(%arg0: memref<16x16xf32, #tpu.memory_space<vmem>>, %arg1: memref<16x16x1xf32, #tpu.memory_space<vmem>>, %arg2: memref<256x4xf32, #tpu.memory_space<vmem>>, %arg3: memref<2x16xf32, #tpu.memory_space<vmem>>, %arg4: memref<16x2xf32, #tpu.memory_space<vmem>>, %arg5: memref<16x9xf32, #tpu.memory_space<vmem>>, %arg6: memref<1x9xf32, #tpu.memory_space<vmem>>, %arg7: memref<16x9xf32, #tpu.memory_space<vmem>>, %arg8: memref<1x9xf32, #tpu.memory_space<vmem>>, %arg9: memref<4x9xf32, #tpu.memory_space<vmem>>, %arg10: memref<9x9xf32, #tpu.memory_space<vmem>>, %arg11: memref<1x9xf32, #tpu.memory_space<vmem>>, %arg12: memref<9x15xf32, #tpu.memory_space<vmem>>, %arg13: memref<1x15xf32, #tpu.memory_space<vmem>>, %arg14: memref<9x15xf32, #tpu.memory_space<vmem>>, %arg15: memref<1x15xf32, #tpu.memory_space<vmem>>, %arg16: memref<4x15xf32, #tpu.memory_space<vmem>>, %arg17: memref<15x15xf32, #tpu.memory_space<vmem>>, %arg18: memref<1x15xf32, #tpu.memory_space<vmem>>, %arg19: memref<15x15xf32, #tpu.memory_space<vmem>>, %arg20: memref<1x15xf32, #tpu.memory_space<vmem>>, %arg21: memref<15x15xf32, #tpu.memory_space<vmem>>, %arg22: memref<1x15xf32, #tpu.memory_space<vmem>>, %arg23: memref<4x15xf32, #tpu.memory_space<vmem>>, %arg24: memref<15x15xf32, #tpu.memory_space<vmem>>, %arg25: memref<1x15xf32, #tpu.memory_space<vmem>>, %arg26: memref<15x15xf32, #tpu.memory_space<vmem>>, %arg27: memref<1x15xf32, #tpu.memory_space<vmem>>, %arg28: memref<15x15xf32, #tpu.memory_space<vmem>>, %arg29: memref<1x15xf32, #tpu.memory_space<vmem>>, %arg30: memref<4x15xf32, #tpu.memory_space<vmem>>, %arg31: memref<15x15xf32, #tpu.memory_space<vmem>>, %arg32: memref<1x15xf32, #tpu.memory_space<vmem>>, %arg33: memref<15x1xf32, #tpu.memory_space<vmem>>, %arg34: memref<1x1xf32, #tpu.memory_space<vmem>>, %arg35: memref<15x10xf32, #tpu.memory_space<vmem>>, %arg36: memref<1x10xf32, #tpu.memory_space<vmem>>, %arg37: memref<10x1xf32, #tpu.memory_space<vmem>>, %arg38: memref<1x1xf32, #tpu.memory_space<vmem>>, %arg39: memref<2x1xf32, #tpu.memory_space<vmem>>) attributes {dimension_semantics = [], scalar_prefetch = 0 : i64, scratch_operands = 0 : i64, tpu.core_type = #tpu.core_type<tc>} {
    %c0 = arith.constant 0 : index
    %c0_0 = arith.constant 0 : index
    %0 = vector.load %arg0[%c0, %c0_0] : memref<16x16xf32, #tpu.memory_space<vmem>>, vector<16x16xf32>
    %c0_1 = arith.constant 0 : index
    %c0_2 = arith.constant 0 : index
    %c0_3 = arith.constant 0 : index
    %1 = vector.load %arg1[%c0_1, %c0_2, %c0_3] : memref<16x16x1xf32, #tpu.memory_space<vmem>>, vector<16x16x1xf32>
    %c0_4 = arith.constant 0 : index
    %c0_5 = arith.constant 0 : index
    %2 = vector.load %arg2[%c0_4, %c0_5] : memref<256x4xf32, #tpu.memory_space<vmem>>, vector<256x4xf32>
    %c0_6 = arith.constant 0 : index
    %c0_7 = arith.constant 0 : index
    %3 = vector.load %arg3[%c0_6, %c0_7] : memref<2x16xf32, #tpu.memory_space<vmem>>, vector<2x16xf32>
    %c0_8 = arith.constant 0 : index
    %c0_9 = arith.constant 0 : index
    %4 = vector.load %arg4[%c0_8, %c0_9] : memref<16x2xf32, #tpu.memory_space<vmem>>, vector<16x2xf32>
    %c0_10 = arith.constant 0 : index
    %c0_11 = arith.constant 0 : index
    %5 = vector.load %arg5[%c0_10, %c0_11] : memref<16x9xf32, #tpu.memory_space<vmem>>, vector<16x9xf32>
    %c0_12 = arith.constant 0 : index
    %c0_13 = arith.constant 0 : index
    %6 = vector.load %arg6[%c0_12, %c0_13] : memref<1x9xf32, #tpu.memory_space<vmem>>, vector<1x9xf32>
    %c0_14 = arith.constant 0 : index
    %c0_15 = arith.constant 0 : index
    %7 = vector.load %arg7[%c0_14, %c0_15] : memref<16x9xf32, #tpu.memory_space<vmem>>, vector<16x9xf32>
    %c0_16 = arith.constant 0 : index
    %c0_17 = arith.constant 0 : index
    %8 = vector.load %arg8[%c0_16, %c0_17] : memref<1x9xf32, #tpu.memory_space<vmem>>, vector<1x9xf32>
    %c0_18 = arith.constant 0 : index
    %c0_19 = arith.constant 0 : index
    %9 = vector.load %arg9[%c0_18, %c0_19] : memref<4x9xf32, #tpu.memory_space<vmem>>, vector<4x9xf32>
    %c0_20 = arith.constant 0 : index
    %c0_21 = arith.constant 0 : index
    %10 = vector.load %arg10[%c0_20, %c0_21] : memref<9x9xf32, #tpu.memory_space<vmem>>, vector<9x9xf32>
    %c0_22 = arith.constant 0 : index
    %c0_23 = arith.constant 0 : index
    %11 = vector.load %arg11[%c0_22, %c0_23] : memref<1x9xf32, #tpu.memory_space<vmem>>, vector<1x9xf32>
    %cst = arith.constant dense<0.000000e+00> : vector<16x9xf32>
    %12 = tpu.matmul %0, %5, %cst {dimension_numbers = #tpu.dot_dimension_numbers<[1], [0], [0], [1], [0, 0, 1, 1], [], []>} : vector<16x16xf32>, vector<16x9xf32>, vector<16x9xf32> -> vector<16x9xf32>
    %13 = vector.broadcast %6 : vector<1x9xf32> to vector<16x9xf32>
    %14 = arith.addf %12, %13 : vector<16x9xf32>
    %cst_24 = arith.constant dense<0.000000e+00> : vector<16x9xf32>
    %15 = tpu.matmul %0, %7, %cst_24 {dimension_numbers = #tpu.dot_dimension_numbers<[1], [0], [0], [1], [0, 0, 1, 1], [], []>} : vector<16x16xf32>, vector<16x9xf32>, vector<16x9xf32> -> vector<16x9xf32>
    %16 = vector.broadcast %8 : vector<1x9xf32> to vector<16x9xf32>
    %17 = arith.addf %15, %16 : vector<16x9xf32>
    %cst_25 = arith.constant dense<0.000000e+00> : vector<256x9xf32>
    %18 = tpu.matmul %2, %9, %cst_25 {dimension_numbers = #tpu.dot_dimension_numbers<[1], [0], [0], [1], [0, 0, 1, 1], [], []>} : vector<256x4xf32>, vector<4x9xf32>, vector<256x9xf32> -> vector<256x9xf32>
    %19 = vector.shape_cast %18 : vector<256x9xf32> to vector<16x16x9xf32>
    %20 = vector.shape_cast %17 : vector<16x9xf32> to vector<16x1x9xf32>
    %21 = vector.shape_cast %14 : vector<16x9xf32> to vector<1x16x9xf32>
    %22 = vector.broadcast %20 : vector<16x1x9xf32> to vector<16x16x9xf32>
    %23 = vector.broadcast %21 : vector<1x16x9xf32> to vector<16x16x9xf32>
    %24 = arith.addf %22, %23 : vector<16x16x9xf32>
    %25 = arith.addf %24, %19 : vector<16x16x9xf32>
    %cst_26 = arith.constant 0.000000e+00 : f32
    %26 = vector.broadcast %cst_26 : f32 to vector<16x16x9xf32>
    %27 = arith.cmpf ogt, %25, %26 : vector<16x16x9xf32>
    %cst_27 = arith.constant 2.000000e-01 : f32
    %28 = vector.broadcast %cst_27 : f32 to vector<16x16x9xf32>
    %29 = arith.mulf %28, %25 : vector<16x16x9xf32>
    %30 = arith.select %27, %25, %29 : vector<16x16x9xi1>, vector<16x16x9xf32>
    %31 = vector.shape_cast %30 : vector<16x16x9xf32> to vector<256x9xf32>
    %cst_28 = arith.constant dense<0.000000e+00> : vector<256x9xf32>
    %32 = tpu.matmul %31, %10, %cst_28 {dimension_numbers = #tpu.dot_dimension_numbers<[1], [0], [0], [1], [0, 0, 1, 1], [], []>} : vector<256x9xf32>, vector<9x9xf32>, vector<256x9xf32> -> vector<256x9xf32>
    %33 = vector.shape_cast %32 : vector<256x9xf32> to vector<16x16x9xf32>
    %34 = vector.broadcast %1 : vector<16x16x1xf32> to vector<16x16x9xf32>
    %35 = arith.addf %33, %34 : vector<16x16x9xf32>
    %cst_29 = arith.constant dense<0xFF800000> : vector<16x9xf32>
    %36 = vector.multi_reduction <maximumf>, %35, %cst_29 [1] : vector<16x16x9xf32> to vector<16x9xf32>
    %37 = vector.shape_cast %36 : vector<16x9xf32> to vector<16x1x9xf32>
    %38 = vector.broadcast %37 : vector<16x1x9xf32> to vector<16x16x9xf32>
    %39 = arith.subf %35, %38 : vector<16x16x9xf32>
    %40 = math.exp %39 : vector<16x16x9xf32>
    %cst_30 = arith.constant dense<0.000000e+00> : vector<16x9xf32>
    %41 = vector.multi_reduction <add>, %40, %cst_30 [1] : vector<16x16x9xf32> to vector<16x9xf32>
    %42 = vector.shape_cast %41 : vector<16x9xf32> to vector<16x1x9xf32>
    %43 = tpu.reciprocal %42 {approx = true} : vector<16x1x9xf32> -> vector<16x1x9xf32>
    %44 = vector.broadcast %43 : vector<16x1x9xf32> to vector<16x16x9xf32>
    %45 = arith.mulf %40, %44 : vector<16x16x9xf32>
    %46 = vector.shape_cast %14 : vector<16x9xf32> to vector<1x16x9xf32>
    %47 = vector.broadcast %46 : vector<1x16x9xf32> to vector<16x16x9xf32>
    %48 = arith.mulf %45, %47 : vector<16x16x9xf32>
    %cst_31 = arith.constant dense<0.000000e+00> : vector<16x9xf32>
    %49 = vector.multi_reduction <add>, %48, %cst_31 [1] : vector<16x16x9xf32> to vector<16x9xf32>
    %50 = vector.broadcast %11 : vector<1x9xf32> to vector<16x9xf32>
    %51 = arith.addf %49, %50 : vector<16x9xf32>
    %c0_32 = arith.constant 0 : index
    %c0_33 = arith.constant 0 : index
    %52 = vector.load %arg12[%c0_32, %c0_33] : memref<9x15xf32, #tpu.memory_space<vmem>>, vector<9x15xf32>
    %c0_34 = arith.constant 0 : index
    %c0_35 = arith.constant 0 : index
    %53 = vector.load %arg13[%c0_34, %c0_35] : memref<1x15xf32, #tpu.memory_space<vmem>>, vector<1x15xf32>
    %c0_36 = arith.constant 0 : index
    %c0_37 = arith.constant 0 : index
    %54 = vector.load %arg14[%c0_36, %c0_37] : memref<9x15xf32, #tpu.memory_space<vmem>>, vector<9x15xf32>
    %c0_38 = arith.constant 0 : index
    %c0_39 = arith.constant 0 : index
    %55 = vector.load %arg15[%c0_38, %c0_39] : memref<1x15xf32, #tpu.memory_space<vmem>>, vector<1x15xf32>
    %c0_40 = arith.constant 0 : index
    %c0_41 = arith.constant 0 : index
    %56 = vector.load %arg16[%c0_40, %c0_41] : memref<4x15xf32, #tpu.memory_space<vmem>>, vector<4x15xf32>
    %c0_42 = arith.constant 0 : index
    %c0_43 = arith.constant 0 : index
    %57 = vector.load %arg17[%c0_42, %c0_43] : memref<15x15xf32, #tpu.memory_space<vmem>>, vector<15x15xf32>
    %c0_44 = arith.constant 0 : index
    %c0_45 = arith.constant 0 : index
    %58 = vector.load %arg18[%c0_44, %c0_45] : memref<1x15xf32, #tpu.memory_space<vmem>>, vector<1x15xf32>
    %cst_46 = arith.constant dense<0.000000e+00> : vector<16x15xf32>
    %59 = tpu.matmul %51, %52, %cst_46 {dimension_numbers = #tpu.dot_dimension_numbers<[1], [0], [0], [1], [0, 0, 1, 1], [], []>} : vector<16x9xf32>, vector<9x15xf32>, vector<16x15xf32> -> vector<16x15xf32>
    %60 = vector.broadcast %53 : vector<1x15xf32> to vector<16x15xf32>
    %61 = arith.addf %59, %60 : vector<16x15xf32>
    %cst_47 = arith.constant dense<0.000000e+00> : vector<16x15xf32>
    %62 = tpu.matmul %51, %54, %cst_47 {dimension_numbers = #tpu.dot_dimension_numbers<[1], [0], [0], [1], [0, 0, 1, 1], [], []>} : vector<16x9xf32>, vector<9x15xf32>, vector<16x15xf32> -> vector<16x15xf32>
    %63 = vector.broadcast %55 : vector<1x15xf32> to vector<16x15xf32>
    %64 = arith.addf %62, %63 : vector<16x15xf32>
    %cst_48 = arith.constant dense<0.000000e+00> : vector<256x15xf32>
    %65 = tpu.matmul %2, %56, %cst_48 {dimension_numbers = #tpu.dot_dimension_numbers<[1], [0], [0], [1], [0, 0, 1, 1], [], []>} : vector<256x4xf32>, vector<4x15xf32>, vector<256x15xf32> -> vector<256x15xf32>
    %66 = vector.shape_cast %65 : vector<256x15xf32> to vector<16x16x15xf32>
    %67 = vector.shape_cast %64 : vector<16x15xf32> to vector<16x1x15xf32>
    %68 = vector.shape_cast %61 : vector<16x15xf32> to vector<1x16x15xf32>
    %69 = vector.broadcast %67 : vector<16x1x15xf32> to vector<16x16x15xf32>
    %70 = vector.broadcast %68 : vector<1x16x15xf32> to vector<16x16x15xf32>
    %71 = arith.addf %69, %70 : vector<16x16x15xf32>
    %72 = arith.addf %71, %66 : vector<16x16x15xf32>
    %cst_49 = arith.constant 0.000000e+00 : f32
    %73 = vector.broadcast %cst_49 : f32 to vector<16x16x15xf32>
    %74 = arith.cmpf ogt, %72, %73 : vector<16x16x15xf32>
    %cst_50 = arith.constant 2.000000e-01 : f32
    %75 = vector.broadcast %cst_50 : f32 to vector<16x16x15xf32>
    %76 = arith.mulf %75, %72 : vector<16x16x15xf32>
    %77 = arith.select %74, %72, %76 : vector<16x16x15xi1>, vector<16x16x15xf32>
    %78 = vector.shape_cast %77 : vector<16x16x15xf32> to vector<256x15xf32>
    %cst_51 = arith.constant dense<0.000000e+00> : vector<256x15xf32>
    %79 = tpu.matmul %78, %57, %cst_51 {dimension_numbers = #tpu.dot_dimension_numbers<[1], [0], [0], [1], [0, 0, 1, 1], [], []>} : vector<256x15xf32>, vector<15x15xf32>, vector<256x15xf32> -> vector<256x15xf32>
    %80 = vector.shape_cast %79 : vector<256x15xf32> to vector<16x16x15xf32>
    %81 = vector.broadcast %1 : vector<16x16x1xf32> to vector<16x16x15xf32>
    %82 = arith.addf %80, %81 : vector<16x16x15xf32>
    %cst_52 = arith.constant dense<0xFF800000> : vector<16x15xf32>
    %83 = vector.multi_reduction <maximumf>, %82, %cst_52 [1] : vector<16x16x15xf32> to vector<16x15xf32>
    %84 = vector.shape_cast %83 : vector<16x15xf32> to vector<16x1x15xf32>
    %85 = vector.broadcast %84 : vector<16x1x15xf32> to vector<16x16x15xf32>
    %86 = arith.subf %82, %85 : vector<16x16x15xf32>
    %87 = math.exp %86 : vector<16x16x15xf32>
    %cst_53 = arith.constant dense<0.000000e+00> : vector<16x15xf32>
    %88 = vector.multi_reduction <add>, %87, %cst_53 [1] : vector<16x16x15xf32> to vector<16x15xf32>
    %89 = vector.shape_cast %88 : vector<16x15xf32> to vector<16x1x15xf32>
    %90 = tpu.reciprocal %89 {approx = true} : vector<16x1x15xf32> -> vector<16x1x15xf32>
    %91 = vector.broadcast %90 : vector<16x1x15xf32> to vector<16x16x15xf32>
    %92 = arith.mulf %87, %91 : vector<16x16x15xf32>
    %93 = vector.shape_cast %61 : vector<16x15xf32> to vector<1x16x15xf32>
    %94 = vector.broadcast %93 : vector<1x16x15xf32> to vector<16x16x15xf32>
    %95 = arith.mulf %92, %94 : vector<16x16x15xf32>
    %cst_54 = arith.constant dense<0.000000e+00> : vector<16x15xf32>
    %96 = vector.multi_reduction <add>, %95, %cst_54 [1] : vector<16x16x15xf32> to vector<16x15xf32>
    %97 = vector.broadcast %58 : vector<1x15xf32> to vector<16x15xf32>
    %98 = arith.addf %96, %97 : vector<16x15xf32>
    %cst_55 = arith.constant 0.000000e+00 : f32
    %99 = vector.broadcast %cst_55 : f32 to vector<16x15xf32>
    %100 = arith.cmpf ogt, %98, %99 : vector<16x15xf32>
    %cst_56 = arith.constant 0.00999999977 : f32
    %101 = vector.broadcast %cst_56 : f32 to vector<16x15xf32>
    %102 = arith.mulf %101, %98 : vector<16x15xf32>
    %103 = arith.select %100, %98, %102 : vector<16x15xi1>, vector<16x15xf32>
    %c0_57 = arith.constant 0 : index
    %c0_58 = arith.constant 0 : index
    %104 = vector.load %arg19[%c0_57, %c0_58] : memref<15x15xf32, #tpu.memory_space<vmem>>, vector<15x15xf32>
    %c0_59 = arith.constant 0 : index
    %c0_60 = arith.constant 0 : index
    %105 = vector.load %arg20[%c0_59, %c0_60] : memref<1x15xf32, #tpu.memory_space<vmem>>, vector<1x15xf32>
    %c0_61 = arith.constant 0 : index
    %c0_62 = arith.constant 0 : index
    %106 = vector.load %arg21[%c0_61, %c0_62] : memref<15x15xf32, #tpu.memory_space<vmem>>, vector<15x15xf32>
    %c0_63 = arith.constant 0 : index
    %c0_64 = arith.constant 0 : index
    %107 = vector.load %arg22[%c0_63, %c0_64] : memref<1x15xf32, #tpu.memory_space<vmem>>, vector<1x15xf32>
    %c0_65 = arith.constant 0 : index
    %c0_66 = arith.constant 0 : index
    %108 = vector.load %arg23[%c0_65, %c0_66] : memref<4x15xf32, #tpu.memory_space<vmem>>, vector<4x15xf32>
    %c0_67 = arith.constant 0 : index
    %c0_68 = arith.constant 0 : index
    %109 = vector.load %arg24[%c0_67, %c0_68] : memref<15x15xf32, #tpu.memory_space<vmem>>, vector<15x15xf32>
    %c0_69 = arith.constant 0 : index
    %c0_70 = arith.constant 0 : index
    %110 = vector.load %arg25[%c0_69, %c0_70] : memref<1x15xf32, #tpu.memory_space<vmem>>, vector<1x15xf32>
    %cst_71 = arith.constant dense<0.000000e+00> : vector<16x15xf32>
    %111 = tpu.matmul %103, %104, %cst_71 {dimension_numbers = #tpu.dot_dimension_numbers<[1], [0], [0], [1], [0, 0, 1, 1], [], []>} : vector<16x15xf32>, vector<15x15xf32>, vector<16x15xf32> -> vector<16x15xf32>
    %112 = vector.broadcast %105 : vector<1x15xf32> to vector<16x15xf32>
    %113 = arith.addf %111, %112 : vector<16x15xf32>
    %cst_72 = arith.constant dense<0.000000e+00> : vector<16x15xf32>
    %114 = tpu.matmul %103, %106, %cst_72 {dimension_numbers = #tpu.dot_dimension_numbers<[1], [0], [0], [1], [0, 0, 1, 1], [], []>} : vector<16x15xf32>, vector<15x15xf32>, vector<16x15xf32> -> vector<16x15xf32>
    %115 = vector.broadcast %107 : vector<1x15xf32> to vector<16x15xf32>
    %116 = arith.addf %114, %115 : vector<16x15xf32>
    %cst_73 = arith.constant dense<0.000000e+00> : vector<256x15xf32>
    %117 = tpu.matmul %2, %108, %cst_73 {dimension_numbers = #tpu.dot_dimension_numbers<[1], [0], [0], [1], [0, 0, 1, 1], [], []>} : vector<256x4xf32>, vector<4x15xf32>, vector<256x15xf32> -> vector<256x15xf32>
    %118 = vector.shape_cast %117 : vector<256x15xf32> to vector<16x16x15xf32>
    %119 = vector.shape_cast %116 : vector<16x15xf32> to vector<16x1x15xf32>
    %120 = vector.shape_cast %113 : vector<16x15xf32> to vector<1x16x15xf32>
    %121 = vector.broadcast %119 : vector<16x1x15xf32> to vector<16x16x15xf32>
    %122 = vector.broadcast %120 : vector<1x16x15xf32> to vector<16x16x15xf32>
    %123 = arith.addf %121, %122 : vector<16x16x15xf32>
    %124 = arith.addf %123, %118 : vector<16x16x15xf32>
    %cst_74 = arith.constant 0.000000e+00 : f32
    %125 = vector.broadcast %cst_74 : f32 to vector<16x16x15xf32>
    %126 = arith.cmpf ogt, %124, %125 : vector<16x16x15xf32>
    %cst_75 = arith.constant 2.000000e-01 : f32
    %127 = vector.broadcast %cst_75 : f32 to vector<16x16x15xf32>
    %128 = arith.mulf %127, %124 : vector<16x16x15xf32>
    %129 = arith.select %126, %124, %128 : vector<16x16x15xi1>, vector<16x16x15xf32>
    %130 = vector.shape_cast %129 : vector<16x16x15xf32> to vector<256x15xf32>
    %cst_76 = arith.constant dense<0.000000e+00> : vector<256x15xf32>
    %131 = tpu.matmul %130, %109, %cst_76 {dimension_numbers = #tpu.dot_dimension_numbers<[1], [0], [0], [1], [0, 0, 1, 1], [], []>} : vector<256x15xf32>, vector<15x15xf32>, vector<256x15xf32> -> vector<256x15xf32>
    %132 = vector.shape_cast %131 : vector<256x15xf32> to vector<16x16x15xf32>
    %133 = vector.broadcast %1 : vector<16x16x1xf32> to vector<16x16x15xf32>
    %134 = arith.addf %132, %133 : vector<16x16x15xf32>
    %cst_77 = arith.constant dense<0xFF800000> : vector<16x15xf32>
    %135 = vector.multi_reduction <maximumf>, %134, %cst_77 [1] : vector<16x16x15xf32> to vector<16x15xf32>
    %136 = vector.shape_cast %135 : vector<16x15xf32> to vector<16x1x15xf32>
    %137 = vector.broadcast %136 : vector<16x1x15xf32> to vector<16x16x15xf32>
    %138 = arith.subf %134, %137 : vector<16x16x15xf32>
    %139 = math.exp %138 : vector<16x16x15xf32>
    %cst_78 = arith.constant dense<0.000000e+00> : vector<16x15xf32>
    %140 = vector.multi_reduction <add>, %139, %cst_78 [1] : vector<16x16x15xf32> to vector<16x15xf32>
    %141 = vector.shape_cast %140 : vector<16x15xf32> to vector<16x1x15xf32>
    %142 = tpu.reciprocal %141 {approx = true} : vector<16x1x15xf32> -> vector<16x1x15xf32>
    %143 = vector.broadcast %142 : vector<16x1x15xf32> to vector<16x16x15xf32>
    %144 = arith.mulf %139, %143 : vector<16x16x15xf32>
    %145 = vector.shape_cast %113 : vector<16x15xf32> to vector<1x16x15xf32>
    %146 = vector.broadcast %145 : vector<1x16x15xf32> to vector<16x16x15xf32>
    %147 = arith.mulf %144, %146 : vector<16x16x15xf32>
    %cst_79 = arith.constant dense<0.000000e+00> : vector<16x15xf32>
    %148 = vector.multi_reduction <add>, %147, %cst_79 [1] : vector<16x16x15xf32> to vector<16x15xf32>
    %149 = vector.broadcast %110 : vector<1x15xf32> to vector<16x15xf32>
    %150 = arith.addf %148, %149 : vector<16x15xf32>
    %c0_80 = arith.constant 0 : index
    %c0_81 = arith.constant 0 : index
    %151 = vector.load %arg26[%c0_80, %c0_81] : memref<15x15xf32, #tpu.memory_space<vmem>>, vector<15x15xf32>
    %c0_82 = arith.constant 0 : index
    %c0_83 = arith.constant 0 : index
    %152 = vector.load %arg27[%c0_82, %c0_83] : memref<1x15xf32, #tpu.memory_space<vmem>>, vector<1x15xf32>
    %c0_84 = arith.constant 0 : index
    %c0_85 = arith.constant 0 : index
    %153 = vector.load %arg28[%c0_84, %c0_85] : memref<15x15xf32, #tpu.memory_space<vmem>>, vector<15x15xf32>
    %c0_86 = arith.constant 0 : index
    %c0_87 = arith.constant 0 : index
    %154 = vector.load %arg29[%c0_86, %c0_87] : memref<1x15xf32, #tpu.memory_space<vmem>>, vector<1x15xf32>
    %c0_88 = arith.constant 0 : index
    %c0_89 = arith.constant 0 : index
    %155 = vector.load %arg30[%c0_88, %c0_89] : memref<4x15xf32, #tpu.memory_space<vmem>>, vector<4x15xf32>
    %c0_90 = arith.constant 0 : index
    %c0_91 = arith.constant 0 : index
    %156 = vector.load %arg31[%c0_90, %c0_91] : memref<15x15xf32, #tpu.memory_space<vmem>>, vector<15x15xf32>
    %c0_92 = arith.constant 0 : index
    %c0_93 = arith.constant 0 : index
    %157 = vector.load %arg32[%c0_92, %c0_93] : memref<1x15xf32, #tpu.memory_space<vmem>>, vector<1x15xf32>
    %cst_94 = arith.constant dense<0.000000e+00> : vector<16x15xf32>
    %158 = tpu.matmul %150, %151, %cst_94 {dimension_numbers = #tpu.dot_dimension_numbers<[1], [0], [0], [1], [0, 0, 1, 1], [], []>} : vector<16x15xf32>, vector<15x15xf32>, vector<16x15xf32> -> vector<16x15xf32>
    %159 = vector.broadcast %152 : vector<1x15xf32> to vector<16x15xf32>
    %160 = arith.addf %158, %159 : vector<16x15xf32>
    %cst_95 = arith.constant dense<0.000000e+00> : vector<16x15xf32>
    %161 = tpu.matmul %150, %153, %cst_95 {dimension_numbers = #tpu.dot_dimension_numbers<[1], [0], [0], [1], [0, 0, 1, 1], [], []>} : vector<16x15xf32>, vector<15x15xf32>, vector<16x15xf32> -> vector<16x15xf32>
    %162 = vector.broadcast %154 : vector<1x15xf32> to vector<16x15xf32>
    %163 = arith.addf %161, %162 : vector<16x15xf32>
    %cst_96 = arith.constant dense<0.000000e+00> : vector<256x15xf32>
    %164 = tpu.matmul %2, %155, %cst_96 {dimension_numbers = #tpu.dot_dimension_numbers<[1], [0], [0], [1], [0, 0, 1, 1], [], []>} : vector<256x4xf32>, vector<4x15xf32>, vector<256x15xf32> -> vector<256x15xf32>
    %165 = vector.shape_cast %164 : vector<256x15xf32> to vector<16x16x15xf32>
    %166 = vector.shape_cast %163 : vector<16x15xf32> to vector<16x1x15xf32>
    %167 = vector.shape_cast %160 : vector<16x15xf32> to vector<1x16x15xf32>
    %168 = vector.broadcast %166 : vector<16x1x15xf32> to vector<16x16x15xf32>
    %169 = vector.broadcast %167 : vector<1x16x15xf32> to vector<16x16x15xf32>
    %170 = arith.addf %168, %169 : vector<16x16x15xf32>
    %171 = arith.addf %170, %165 : vector<16x16x15xf32>
    %cst_97 = arith.constant 0.000000e+00 : f32
    %172 = vector.broadcast %cst_97 : f32 to vector<16x16x15xf32>
    %173 = arith.cmpf ogt, %171, %172 : vector<16x16x15xf32>
    %cst_98 = arith.constant 2.000000e-01 : f32
    %174 = vector.broadcast %cst_98 : f32 to vector<16x16x15xf32>
    %175 = arith.mulf %174, %171 : vector<16x16x15xf32>
    %176 = arith.select %173, %171, %175 : vector<16x16x15xi1>, vector<16x16x15xf32>
    %177 = vector.shape_cast %176 : vector<16x16x15xf32> to vector<256x15xf32>
    %cst_99 = arith.constant dense<0.000000e+00> : vector<256x15xf32>
    %178 = tpu.matmul %177, %156, %cst_99 {dimension_numbers = #tpu.dot_dimension_numbers<[1], [0], [0], [1], [0, 0, 1, 1], [], []>} : vector<256x15xf32>, vector<15x15xf32>, vector<256x15xf32> -> vector<256x15xf32>
    %179 = vector.shape_cast %178 : vector<256x15xf32> to vector<16x16x15xf32>
    %180 = vector.broadcast %1 : vector<16x16x1xf32> to vector<16x16x15xf32>
    %181 = arith.addf %179, %180 : vector<16x16x15xf32>
    %cst_100 = arith.constant dense<0xFF800000> : vector<16x15xf32>
    %182 = vector.multi_reduction <maximumf>, %181, %cst_100 [1] : vector<16x16x15xf32> to vector<16x15xf32>
    %183 = vector.shape_cast %182 : vector<16x15xf32> to vector<16x1x15xf32>
    %184 = vector.broadcast %183 : vector<16x1x15xf32> to vector<16x16x15xf32>
    %185 = arith.subf %181, %184 : vector<16x16x15xf32>
    %186 = math.exp %185 : vector<16x16x15xf32>
    %cst_101 = arith.constant dense<0.000000e+00> : vector<16x15xf32>
    %187 = vector.multi_reduction <add>, %186, %cst_101 [1] : vector<16x16x15xf32> to vector<16x15xf32>
    %188 = vector.shape_cast %187 : vector<16x15xf32> to vector<16x1x15xf32>
    %189 = tpu.reciprocal %188 {approx = true} : vector<16x1x15xf32> -> vector<16x1x15xf32>
    %190 = vector.broadcast %189 : vector<16x1x15xf32> to vector<16x16x15xf32>
    %191 = arith.mulf %186, %190 : vector<16x16x15xf32>
    %192 = vector.shape_cast %160 : vector<16x15xf32> to vector<1x16x15xf32>
    %193 = vector.broadcast %192 : vector<1x16x15xf32> to vector<16x16x15xf32>
    %194 = arith.mulf %191, %193 : vector<16x16x15xf32>
    %cst_102 = arith.constant dense<0.000000e+00> : vector<16x15xf32>
    %195 = vector.multi_reduction <add>, %194, %cst_102 [1] : vector<16x16x15xf32> to vector<16x15xf32>
    %196 = vector.broadcast %157 : vector<1x15xf32> to vector<16x15xf32>
    %197 = arith.addf %195, %196 : vector<16x15xf32>
    %cst_103 = arith.constant 0.000000e+00 : f32
    %198 = vector.broadcast %cst_103 : f32 to vector<16x15xf32>
    %199 = arith.cmpf ogt, %197, %198 : vector<16x15xf32>
    %cst_104 = arith.constant 0.00999999977 : f32
    %200 = vector.broadcast %cst_104 : f32 to vector<16x15xf32>
    %201 = arith.mulf %200, %197 : vector<16x15xf32>
    %202 = arith.select %199, %197, %201 : vector<16x15xi1>, vector<16x15xf32>
    %c0_105 = arith.constant 0 : index
    %c0_106 = arith.constant 0 : index
    %203 = vector.load %arg33[%c0_105, %c0_106] : memref<15x1xf32, #tpu.memory_space<vmem>>, vector<15x1xf32>
    %c0_107 = arith.constant 0 : index
    %c0_108 = arith.constant 0 : index
    %204 = vector.load %arg34[%c0_107, %c0_108] : memref<1x1xf32, #tpu.memory_space<vmem>>, vector<1x1xf32>
    %c0_109 = arith.constant 0 : index
    %c0_110 = arith.constant 0 : index
    %205 = vector.load %arg35[%c0_109, %c0_110] : memref<15x10xf32, #tpu.memory_space<vmem>>, vector<15x10xf32>
    %c0_111 = arith.constant 0 : index
    %c0_112 = arith.constant 0 : index
    %206 = vector.load %arg36[%c0_111, %c0_112] : memref<1x10xf32, #tpu.memory_space<vmem>>, vector<1x10xf32>
    %c0_113 = arith.constant 0 : index
    %c0_114 = arith.constant 0 : index
    %207 = vector.load %arg37[%c0_113, %c0_114] : memref<10x1xf32, #tpu.memory_space<vmem>>, vector<10x1xf32>
    %c0_115 = arith.constant 0 : index
    %c0_116 = arith.constant 0 : index
    %208 = vector.load %arg38[%c0_115, %c0_116] : memref<1x1xf32, #tpu.memory_space<vmem>>, vector<1x1xf32>
    %cst_117 = arith.constant dense<0.000000e+00> : vector<16x1xf32>
    %209 = tpu.matmul %202, %203, %cst_117 {dimension_numbers = #tpu.dot_dimension_numbers<[1], [0], [0], [1], [0, 0, 1, 1], [], []>} : vector<16x15xf32>, vector<15x1xf32>, vector<16x1xf32> -> vector<16x1xf32>
    %210 = vector.broadcast %204 : vector<1x1xf32> to vector<16x1xf32>
    %211 = arith.addf %209, %210 : vector<16x1xf32>
    %cst_118 = arith.constant 0.000000e+00 : f32
    %212 = vector.broadcast %cst_118 : f32 to vector<16x2xf32>
    %213 = arith.cmpf ogt, %4, %212 : vector<16x2xf32>
    %cst_119 = arith.constant -1.000000e+30 : f32
    %214 = vector.shape_cast %211 : vector<16x1xf32> to vector<16x1xf32>
    %215 = vector.broadcast %214 : vector<16x1xf32> to vector<16x2xf32>
    %216 = vector.broadcast %cst_119 : f32 to vector<16x2xf32>
    %217 = arith.select %213, %215, %216 : vector<16x2xi1>, vector<16x2xf32>
    %cst_120 = arith.constant dense<0xFF800000> : vector<2xf32>
    %218 = vector.multi_reduction <maximumf>, %217, %cst_120 [0] : vector<16x2xf32> to vector<2xf32>
    %219 = vector.shape_cast %218 : vector<2xf32> to vector<1x2xf32>
    %220 = vector.broadcast %219 : vector<1x2xf32> to vector<16x2xf32>
    %221 = arith.mulf %4, %220 : vector<16x2xf32>
    %cst_121 = arith.constant dense<0.000000e+00> : vector<16xf32>
    %222 = vector.multi_reduction <add>, %221, %cst_121 [1] : vector<16x2xf32> to vector<16xf32>
    %223 = vector.shape_cast %222 : vector<16xf32> to vector<16x1xf32>
    %224 = arith.subf %211, %223 : vector<16x1xf32>
    %225 = math.exp %224 : vector<16x1xf32>
    %cst_122 = arith.constant dense<0.000000e+00> : vector<2x1xf32>
    %226 = tpu.matmul %3, %225, %cst_122 {dimension_numbers = #tpu.dot_dimension_numbers<[1], [0], [0], [1], [0, 0, 1, 1], [], []>} : vector<2x16xf32>, vector<16x1xf32>, vector<2x1xf32> -> vector<2x1xf32>
    %227 = vector.broadcast %225 : vector<16x1xf32> to vector<16x15xf32>
    %228 = arith.mulf %227, %202 : vector<16x15xf32>
    %cst_123 = arith.constant dense<0.000000e+00> : vector<2x15xf32>
    %229 = tpu.matmul %3, %228, %cst_123 {dimension_numbers = #tpu.dot_dimension_numbers<[1], [0], [0], [1], [0, 0, 1, 1], [], []>} : vector<2x16xf32>, vector<16x15xf32>, vector<2x15xf32> -> vector<2x15xf32>
    %230 = tpu.reciprocal %226 {approx = true} : vector<2x1xf32> -> vector<2x1xf32>
    %231 = vector.broadcast %230 : vector<2x1xf32> to vector<2x15xf32>
    %232 = arith.mulf %229, %231 : vector<2x15xf32>
    %cst_124 = arith.constant dense<0.000000e+00> : vector<2x10xf32>
    %233 = tpu.matmul %232, %205, %cst_124 {dimension_numbers = #tpu.dot_dimension_numbers<[1], [0], [0], [1], [0, 0, 1, 1], [], []>} : vector<2x15xf32>, vector<15x10xf32>, vector<2x10xf32> -> vector<2x10xf32>
    %234 = vector.broadcast %206 : vector<1x10xf32> to vector<2x10xf32>
    %235 = arith.addf %233, %234 : vector<2x10xf32>
    %cst_125 = arith.constant 0.000000e+00 : f32
    %236 = vector.broadcast %cst_125 : f32 to vector<2x10xf32>
    %237 = arith.cmpf ogt, %235, %236 : vector<2x10xf32>
    %cst_126 = arith.constant 0.00999999977 : f32
    %238 = vector.broadcast %cst_126 : f32 to vector<2x10xf32>
    %239 = arith.mulf %238, %235 : vector<2x10xf32>
    %240 = arith.select %237, %235, %239 : vector<2x10xi1>, vector<2x10xf32>
    %cst_127 = arith.constant dense<0.000000e+00> : vector<2x1xf32>
    %241 = tpu.matmul %240, %207, %cst_127 {dimension_numbers = #tpu.dot_dimension_numbers<[1], [0], [0], [1], [0, 0, 1, 1], [], []>} : vector<2x10xf32>, vector<10x1xf32>, vector<2x1xf32> -> vector<2x1xf32>
    %242 = vector.broadcast %208 : vector<1x1xf32> to vector<2x1xf32>
    %243 = arith.addf %241, %242 : vector<2x1xf32>
    %c0_128 = arith.constant 0 : index
    %c0_129 = arith.constant 0 : index
    %244 = vector.load %arg39[%c0_128, %c0_129] : memref<2x1xf32, #tpu.memory_space<vmem>>, vector<2x1xf32>
    tpu.vector_store %arg39[%c0_128, %c0_129], %243 {strides = array<i32>} : memref<2x1xf32, #tpu.memory_space<vmem>>, vector<2x1xf32>,
    return
  }
}

</mosaic_0001>

<llo_original>
// kernel: graph_conv_attention_forward.1
$region0: #{graph_conv_attention_forward.1}
  #allocation0 [shape = 'u32[]', space=smem, size = 0x4, offset = 0x4, fixed_abs, tag = 'smem constant byte address 0x4 - core index']
  #allocation1 [shape = 'u32[72,128]{1,0:T(1,128)}', space=vmem, size = 0x9000, scoped, tag = 'internal scratch']
  #allocation2 [shape = 'f32[1,1]{1,0:T(1,128)S(1)}', space=vmem, size = 0x200, scoped, tag = 'scoped memory for graph_conv_attention_forward.1']
  #allocation3 [shape = 'f32[1,1]{1,0:T(1,128)S(1)}', space=vmem, size = 0x200, scoped, tag = 'scoped memory for graph_conv_attention_forward.1']
  %s0 = inlined_call_operand.smem [shape: u32[40], index: -1, kind: input, shape index: {}]
  %s1 = sld [smem:[%s0]]
  %s2 = scalar_lea.smem %s0, 1
  %s3 = sld [smem:[%s2]]
  %s4 = scalar_lea.smem %s0, 2
  %s5 = sld [smem:[%s4]]
  %s6 = scalar_lea.smem %s0, 3
  %s7 = sld [smem:[%s6]]
  %s8 = scalar_lea.smem %s0, 4
  %s9 = sld [smem:[%s8]]
  %s10 = scalar_lea.smem %s0, 5
  %s11 = sld [smem:[%s10]]
  %s12 = scalar_lea.smem %s0, 6
  %s13 = sld [smem:[%s12]]
  %s14 = scalar_lea.smem %s0, 7
  %s15 = sld [smem:[%s14]]
  %s16 = scalar_lea.smem %s0, 8
  %s17 = sld [smem:[%s16]]
  %s18 = scalar_lea.smem %s0, 9
  %s19 = sld [smem:[%s18]]
  %s20 = scalar_lea.smem %s0, 10
  %s21 = sld [smem:[%s20]]
  %s22 = scalar_lea.smem %s0, 11
  %s23 = sld [smem:[%s22]]
  %s24 = scalar_lea.smem %s0, 12
  %s25 = sld [smem:[%s24]]
  %s26 = scalar_lea.smem %s0, 13
  %s27 = sld [smem:[%s26]]
  %s28 = scalar_lea.smem %s0, 14
  %s29 = sld [smem:[%s28]]
  %s30 = scalar_lea.smem %s0, 15
  %s31 = sld [smem:[%s30]]
  %s32 = scalar_lea.smem %s0, 16
  %s33 = sld [smem:[%s32]]
  %s34 = scalar_lea.smem %s0, 17
  %s35 = sld [smem:[%s34]]
  %s36 = scalar_lea.smem %s0, 18
  %s37 = sld [smem:[%s36]]
  %s38 = scalar_lea.smem %s0, 19
  %s39 = sld [smem:[%s38]]
  %s40 = scalar_lea.smem %s0, 20
  %s41 = sld [smem:[%s40]]
  %s42 = scalar_lea.smem %s0, 21
  %s43 = sld [smem:[%s42]]
  %s44 = scalar_lea.smem %s0, 22
  %s45 = sld [smem:[%s44]]
  %s46 = scalar_lea.smem %s0, 23
  %s47 = sld [smem:[%s46]]
  %s48 = scalar_lea.smem %s0, 24
  %s49 = sld [smem:[%s48]]
  %s50 = scalar_lea.smem %s0, 25
  %s51 = sld [smem:[%s50]]
  %s52 = scalar_lea.smem %s0, 26
  %s53 = sld [smem:[%s52]]
  %s54 = scalar_lea.smem %s0, 27
  %s55 = sld [smem:[%s54]]
  %s56 = scalar_lea.smem %s0, 28
  %s57 = sld [smem:[%s56]]
  %s58 = scalar_lea.smem %s0, 29
  %s59 = sld [smem:[%s58]]
  %s60 = scalar_lea.smem %s0, 30
  %s61 = sld [smem:[%s60]]
  %s62 = scalar_lea.smem %s0, 31
  %s63 = sld [smem:[%s62]]
  %s64 = scalar_lea.smem %s0, 32
  %s65 = sld [smem:[%s64]]
  %s66 = scalar_lea.smem %s0, 33
  %s67 = sld [smem:[%s66]]
  %s68 = scalar_lea.smem %s0, 34
  %s69 = sld [smem:[%s68]]
  %s70 = scalar_lea.smem %s0, 35
  %s71 = sld [smem:[%s70]]
  %s72 = scalar_lea.smem %s0, 36
  %s73 = sld [smem:[%s72]]
  %s74 = scalar_lea.smem %s0, 37
  %s75 = sld [smem:[%s74]]
  %s76 = scalar_lea.smem %s0, 38
  %s77 = sld [smem:[%s76]]
  %s78 = scalar_lea.smem %s0, 39
  %s79 = sld [smem:[%s78]]
  %s80 = sld [smem:[#allocation0]]
  $region166: #{graph_conv_attention_forward.1} parent=0
    _
  %s82 = ssub.s32 1, %s80
  %s83 = scalar_select 0, %s82, %s80
  %v84 = vstv %s69
  %85 = vst [vmem:[#allocation2] sm:$0x1] %v84
  %v86 = vstv %s77
  %87 = vst [vmem:[#allocation3] sm:$0x1] %v86
  // Predicated region
  $region2: #{graph_conv_attention_forward.1} parent=0 // pred_check
    _
  $region3: #{graph_conv_attention_forward.1} parent=0 // pred_check_branch
    %89 = sbr.rel (0) target = $region5
  $region4: #{graph_conv_attention_forward.1} parent=0 // pred_region
    _
  $region5: #{graph_conv_attention_forward.1} parent=0 // pred_fallthru
    _
  // Predicated region
  $region6: #{graph_conv_attention_forward.1} parent=0 // pred_check
    _
  $region7: #{graph_conv_attention_forward.1} parent=0 // pred_check_branch
    %91 = sbr.rel (0) target = $region9
  $region8: #{graph_conv_attention_forward.1} parent=0 // pred_region
    _
  $region9: #{graph_conv_attention_forward.1} parent=0 // pred_fallthru
    _
  // Predicated region
  $region10: #{graph_conv_attention_forward.1} parent=0 // pred_check
    _
  $region11: #{graph_conv_attention_forward.1} parent=0 // pred_check_branch
    %93 = sbr.rel (0) target = $region13
  $region12: #{graph_conv_attention_forward.1} parent=0 // pred_region
    _
  $region13: #{graph_conv_attention_forward.1} parent=0 // pred_fallthru
    _
  // Predicated region
  $region14: #{graph_conv_attention_forward.1} parent=0 // pred_check
    _
  $region15: #{graph_conv_attention_forward.1} parent=0 // pred_check_branch
    %95 = sbr.rel (0) target = $region17
  $region16: #{graph_conv_attention_forward.1} parent=0 // pred_region
    _
  $region17: #{graph_conv_attention_forward.1} parent=0 // pred_fallthru
    _
  // Predicated region
  $region18: #{graph_conv_attention_forward.1} parent=0 // pred_check
    _
  $region19: #{graph_conv_attention_forward.1} parent=0 // pred_check_branch
    %97 = sbr.rel (0) target = $region21
  $region20: #{graph_conv_attention_forward.1} parent=0 // pred_region
    _
  $region21: #{graph_conv_attention_forward.1} parent=0 // pred_fallthru
    _
  // Predicated region
  $region22: #{graph_conv_attention_forward.1} parent=0 // pred_check
    _
  $region23: #{graph_conv_attention_forward.1} parent=0 // pred_check_branch
    %99 = sbr.rel (0) target = $region25
  $region24: #{graph_conv_attention_forward.1} parent=0 // pred_region
    _
  $region25: #{graph_conv_attention_forward.1} parent=0 // pred_fallthru
    _
  // Predicated region
  $region26: #{graph_conv_attention_forward.1} parent=0 // pred_check
    _
  $region27: #{graph_conv_attention_forward.1} parent=0 // pred_check_branch
    %101 = sbr.rel (0) target = $region29
  $region28: #{graph_conv_attention_forward.1} parent=0 // pred_region
    _
  $region29: #{graph_conv_attention_forward.1} parent=0 // pred_fallthru
    _
  // Predicated region
  $region30: #{graph_conv_attention_forward.1} parent=0 // pred_check
    _
  $region31: #{graph_conv_attention_forward.1} parent=0 // pred_check_branch
    %103 = sbr.rel (0) target = $region33
  $region32: #{graph_conv_attention_forward.1} parent=0 // pred_region
    _
  $region33: #{graph_conv_attention_forward.1} parent=0 // pred_fallthru
    _
  // Predicated region
  $region34: #{graph_conv_attention_forward.1} parent=0 // pred_check
    _
  $region35: #{graph_conv_attention_forward.1} parent=0 // pred_check_branch
    %105 = sbr.rel (0) target = $region37
  $region36: #{graph_conv_attention_forward.1} parent=0 // pred_region
    _
  $region37: #{graph_conv_attention_forward.1} parent=0 // pred_fallthru
    _
  // Predicated region
  $region38: #{graph_conv_attention_forward.1} parent=0 // pred_check
    _
  $region39: #{graph_conv_attention_forward.1} parent=0 // pred_check_branch
    %107 = sbr.rel (0) target = $region41
  $region40: #{graph_conv_attention_forward.1} parent=0 // pred_region
    _
  $region41: #{graph_conv_attention_forward.1} parent=0 // pred_fallthru
    _
  // Predicated region
  $region42: #{graph_conv_attention_forward.1} parent=0 // pred_check
    _
  $region43: #{graph_conv_attention_forward.1} parent=0 // pred_check_branch
    %109 = sbr.rel (0) target = $region45
  $region44: #{graph_conv_attention_forward.1} parent=0 // pred_region
    _
  $region45: #{graph_conv_attention_forward.1} parent=0 // pred_fallthru
    _
  // Predicated region
  $region46: #{graph_conv_attention_forward.1} parent=0 // pred_check
    _
  $region47: #{graph_conv_attention_forward.1} parent=0 // pred_check_branch
    %111 = sbr.rel (0) target = $region49
  $region48: #{graph_conv_attention_forward.1} parent=0 // pred_region
    _
  $region49: #{graph_conv_attention_forward.1} parent=0 // pred_fallthru
    _
  // Predicated region
  $region50: #{graph_conv_attention_forward.1} parent=0 // pred_check
    _
  $region51: #{graph_conv_attention_forward.1} parent=0 // pred_check_branch
    %113 = sbr.rel (0) target = $region53
  $region52: #{graph_conv_attention_forward.1} parent=0 // pred_region
    _
  $region53: #{graph_conv_attention_forward.1} parent=0 // pred_fallthru
    _
  // Predicated region
  $region54: #{graph_conv_attention_forward.1} parent=0 // pred_check
    _
  $region55: #{graph_conv_attention_forward.1} parent=0 // pred_check_branch
    %115 = sbr.rel (0) target = $region57
  $region56: #{graph_conv_attention_forward.1} parent=0 // pred_region
    _
  $region57: #{graph_conv_attention_forward.1} parent=0 // pred_fallthru
    _
  // Predicated region
  $region58: #{graph_conv_attention_forward.1} parent=0 // pred_check
    _
  $region59: #{graph_conv_attention_forward.1} parent=0 // pred_check_branch
    %117 = sbr.rel (0) target = $region61
  $region60: #{graph_conv_attention_forward.1} parent=0 // pred_region
    _
  $region61: #{graph_conv_attention_forward.1} parent=0 // pred_fallthru
    _
  // Predicated region
  $region62: #{graph_conv_attention_forward.1} parent=0 // pred_check
    _
  $region63: #{graph_conv_attention_forward.1} parent=0 // pred_check_branch
    %119 = sbr.rel (0) target = $region65
  $region64: #{graph_conv_attention_forward.1} parent=0 // pred_region
    _
  $region65: #{graph_conv_attention_forward.1} parent=0 // pred_fallthru
    _
  // Predicated region
  $region66: #{graph_conv_attention_forward.1} parent=0 // pred_check
    _
  $region67: #{graph_conv_attention_forward.1} parent=0 // pred_check_branch
    %121 = sbr.rel (0) target = $region69
  $region68: #{graph_conv_attention_forward.1} parent=0 // pred_region
    _
  $region69: #{graph_conv_attention_forward.1} parent=0 // pred_fallthru
    _
  // Predicated region
  $region70: #{graph_conv_attention_forward.1} parent=0 // pred_check
    _
  $region71: #{graph_conv_attention_forward.1} parent=0 // pred_check_branch
    %123 = sbr.rel (0) target = $region73
  $region72: #{graph_conv_attention_forward.1} parent=0 // pred_region
    _
  $region73: #{graph_conv_attention_forward.1} parent=0 // pred_fallthru
    _
  // Predicated region
  $region74: #{graph_conv_attention_forward.1} parent=0 // pred_check
    _
  $region75: #{graph_conv_attention_forward.1} parent=0 // pred_check_branch
    %125 = sbr.rel (0) target = $region77
  $region76: #{graph_conv_attention_forward.1} parent=0 // pred_region
    _
  $region77: #{graph_conv_attention_forward.1} parent=0 // pred_fallthru
    _
  // Predicated region
  $region78: #{graph_conv_attention_forward.1} parent=0 // pred_check
    _
  $region79: #{graph_conv_attention_forward.1} parent=0 // pred_check_branch
    %127 = sbr.rel (0) target = $region81
  $region80: #{graph_conv_attention_forward.1} parent=0 // pred_region
    _
  $region81: #{graph_conv_attention_forward.1} parent=0 // pred_fallthru
    _
  // Predicated region
  $region82: #{graph_conv_attention_forward.1} parent=0 // pred_check
    _
  $region83: #{graph_conv_attention_forward.1} parent=0 // pred_check_branch
    %129 = sbr.rel (0) target = $region85
  $region84: #{graph_conv_attention_forward.1} parent=0 // pred_region
    _
  $region85: #{graph_conv_attention_forward.1} parent=0 // pred_fallthru
    _
  // Predicated region
  $region86: #{graph_conv_attention_forward.1} parent=0 // pred_check
    _
  $region87: #{graph_conv_attention_forward.1} parent=0 // pred_check_branch
    %131 = sbr.rel (0) target = $region89
  $region88: #{graph_conv_attention_forward.1} parent=0 // pred_region
    _
  $region89: #{graph_conv_attention_forward.1} parent=0 // pred_fallthru
    _
  // Predicated region
  $region90: #{graph_conv_attention_forward.1} parent=0 // pred_check
    _
  $region91: #{graph_conv_attention_forward.1} parent=0 // pred_check_branch
    %133 = sbr.rel (0) target = $region93
  $region92: #{graph_conv_attention_forward.1} parent=0 // pred_region
    _
  $region93: #{graph_conv_attention_forward.1} parent=0 // pred_fallthru
    _
  // Predicated region
  $region94: #{graph_conv_attention_forward.1} parent=0 // pred_check
    _
  $region95: #{graph_conv_attention_forward.1} parent=0 // pred_check_branch
    %135 = sbr.rel (0) target = $region97
  $region96: #{graph_conv_attention_forward.1} parent=0 // pred_region
    _
  $region97: #{graph_conv_attention_forward.1} parent=0 // pred_fallthru
    _
  // Predicated region
  $region98: #{graph_conv_attention_forward.1} parent=0 // pred_check
    _
  $region99: #{graph_conv_attention_forward.1} parent=0 // pred_check_branch
    %137 = sbr.rel (0) target = $region101
  $region100: #{graph_conv_attention_forward.1} parent=0 // pred_region
    _
  $region101: #{graph_conv_attention_forward.1} parent=0 // pred_fallthru
    _
  // Predicated region
  $region102: #{graph_conv_attention_forward.1} parent=0 // pred_check
    _
  $region103: #{graph_conv_attention_forward.1} parent=0 // pred_check_branch
    %139 = sbr.rel (0) target = $region105
  $region104: #{graph_conv_attention_forward.1} parent=0 // pred_region
    _
  $region105: #{graph_conv_attention_forward.1} parent=0 // pred_fallthru
    _
  // Predicated region
  $region106: #{graph_conv_attention_forward.1} parent=0 // pred_check
    _
  $region107: #{graph_conv_attention_forward.1} parent=0 // pred_check_branch
    %141 = sbr.rel (0) target = $region109
  $region108: #{graph_conv_attention_forward.1} parent=0 // pred_region
    _
  $region109: #{graph_conv_attention_forward.1} parent=0 // pred_fallthru
    _
  // Predicated region
  $region110: #{graph_conv_attention_forward.1} parent=0 // pred_check
    _
  $region111: #{graph_conv_attention_forward.1} parent=0 // pred_check_branch
    %143 = sbr.rel (0) target = $region113
  $region112: #{graph_conv_attention_forward.1} parent=0 // pred_region
    _
  $region113: #{graph_conv_attention_forward.1} parent=0 // pred_fallthru
    _
  // Predicated region
  $region114: #{graph_conv_attention_forward.1} parent=0 // pred_check
    _
  $region115: #{graph_conv_attention_forward.1} parent=0 // pred_check_branch
    %145 = sbr.rel (0) target = $region117
  $region116: #{graph_conv_attention_forward.1} parent=0 // pred_region
    _
  $region117: #{graph_conv_attention_forward.1} parent=0 // pred_fallthru
    _
  // Predicated region
  $region118: #{graph_conv_attention_forward.1} parent=0 // pred_check
    _
  $region119: #{graph_conv_attention_forward.1} parent=0 // pred_check_branch
    %147 = sbr.rel (0) target = $region121
  $region120: #{graph_conv_attention_forward.1} parent=0 // pred_region
    _
  $region121: #{graph_conv_attention_forward.1} parent=0 // pred_fallthru
    _
  // Predicated region
  $region122: #{graph_conv_attention_forward.1} parent=0 // pred_check
    _
  $region123: #{graph_conv_attention_forward.1} parent=0 // pred_check_branch
    %149 = sbr.rel (0) target = $region125
  $region124: #{graph_conv_attention_forward.1} parent=0 // pred_region
    _
  $region125: #{graph_conv_attention_forward.1} parent=0 // pred_fallthru
    _
  // Predicated region
  $region126: #{graph_conv_attention_forward.1} parent=0 // pred_check
    _
  $region127: #{graph_conv_attention_forward.1} parent=0 // pred_check_branch
    %151 = sbr.rel (0) target = $region129
  $region128: #{graph_conv_attention_forward.1} parent=0 // pred_region
    _
  $region129: #{graph_conv_attention_forward.1} parent=0 // pred_fallthru
    _
  // Predicated region
  $region130: #{graph_conv_attention_forward.1} parent=0 // pred_check
    _
  $region131: #{graph_conv_attention_forward.1} parent=0 // pred_check_branch
    %153 = sbr.rel (0) target = $region133
  $region132: #{graph_conv_attention_forward.1} parent=0 // pred_region
    _
  $region133: #{graph_conv_attention_forward.1} parent=0 // pred_fallthru
    _
  // Predicated region
  $region134: #{graph_conv_attention_forward.1} parent=0 // pred_check
    _
  $region135: #{graph_conv_attention_forward.1} parent=0 // pred_check_branch
    %155 = sbr.rel (0) target = $region137
  $region136: #{graph_conv_attention_forward.1} parent=0 // pred_region
    _
  $region137: #{graph_conv_attention_forward.1} parent=0 // pred_fallthru
    _
  // Predicated region
  $region138: #{graph_conv_attention_forward.1} parent=0 // pred_check
    _
  $region139: #{graph_conv_attention_forward.1} parent=0 // pred_check_branch
    %157 = sbr.rel (0) target = $region141
  $region140: #{graph_conv_attention_forward.1} parent=0 // pred_region
    _
  $region141: #{graph_conv_attention_forward.1} parent=0 // pred_fallthru
    _
  // Predicated region
  $region142: #{graph_conv_attention_forward.1} parent=0 // pred_check
    _
  $region143: #{graph_conv_attention_forward.1} parent=0 // pred_check_branch
    %159 = sbr.rel (0) target = $region145
  $region144: #{graph_conv_attention_forward.1} parent=0 // pred_region
    _
  $region145: #{graph_conv_attention_forward.1} parent=0 // pred_fallthru
    _
  // Predicated region
  $region146: #{graph_conv_attention_forward.1} parent=0 // pred_check
    _
  $region147: #{graph_conv_attention_forward.1} parent=0 // pred_check_branch
    %161 = sbr.rel (0) target = $region149
  $region148: #{graph_conv_attention_forward.1} parent=0 // pred_region
    _
  $region149: #{graph_conv_attention_forward.1} parent=0 // pred_fallthru
    _
  // Predicated region
  $region150: #{graph_conv_attention_forward.1} parent=0 // pred_check
    _
  $region151: #{graph_conv_attention_forward.1} parent=0 // pred_check_branch
    %163 = sbr.rel (0) target = $region153
  $region152: #{graph_conv_attention_forward.1} parent=0 // pred_region
    _
  $region153: #{graph_conv_attention_forward.1} parent=0 // pred_fallthru
    _
  // Predicated region
  $region154: #{graph_conv_attention_forward.1} parent=0 // pred_check
    _
  $region155: #{graph_conv_attention_forward.1} parent=0 // pred_check_branch
    %165 = sbr.rel (0) target = $region157
  $region156: #{graph_conv_attention_forward.1} parent=0 // pred_region
    _
  $region157: #{graph_conv_attention_forward.1} parent=0 // pred_fallthru
    _
  %v166 = vld [vmem:[%s1] sm:$0xff]
  %v167 = vld [vmem:[%s1 + $0x8] sm:$0xff]
  %v168 = vld [vmem:[%s3] sm:$0xff]
  %v169 = vld [vmem:[%s3 + $0x8] sm:$0xff]
  %v170 = vld [vmem:[%s3 + $0x10] sm:$0xff]
  %v171 = vld [vmem:[%s3 + $0x18] sm:$0xff]
  %v172 = vld [vmem:[%s3 + $0x20] sm:$0xff]
  %v173 = vld [vmem:[%s3 + $0x28] sm:$0xff]
  %v174 = vld [vmem:[%s3 + $0x30] sm:$0xff]
  %v175 = vld [vmem:[%s3 + $0x38] sm:$0xff]
  %v176 = vld [vmem:[%s3 + $0x40] sm:$0xff]
  %v177 = vld [vmem:[%s3 + $0x48] sm:$0xff]
  %v178 = vld [vmem:[%s3 + $0x50] sm:$0xff]
  %v179 = vld [vmem:[%s3 + $0x58] sm:$0xff]
  %v180 = vld [vmem:[%s3 + $0x60] sm:$0xff]
  %v181 = vld [vmem:[%s3 + $0x68] sm:$0xff]
  %v182 = vld [vmem:[%s3 + $0x70] sm:$0xff]
  %v183 = vld [vmem:[%s3 + $0x78] sm:$0xff]
  %v184 = vld [vmem:[%s3 + $0x80] sm:$0xff]
  %v185 = vld [vmem:[%s3 + $0x88] sm:$0xff]
  %v186 = vld [vmem:[%s3 + $0x90] sm:$0xff]
  %v187 = vld [vmem:[%s3 + $0x98] sm:$0xff]
  %v188 = vld [vmem:[%s3 + $0xa0] sm:$0xff]
  %v189 = vld [vmem:[%s3 + $0xa8] sm:$0xff]
  %v190 = vld [vmem:[%s3 + $0xb0] sm:$0xff]
  %v191 = vld [vmem:[%s3 + $0xb8] sm:$0xff]
  %v192 = vld [vmem:[%s3 + $0xc0] sm:$0xff]
  %v193 = vld [vmem:[%s3 + $0xc8] sm:$0xff]
  %v194 = vld [vmem:[%s3 + $0xd0] sm:$0xff]
  %v195 = vld [vmem:[%s3 + $0xd8] sm:$0xff]
  %v196 = vld [vmem:[%s3 + $0xe0] sm:$0xff]
  %v197 = vld [vmem:[%s3 + $0xe8] sm:$0xff]
  %v198 = vld [vmem:[%s3 + $0xf0] sm:$0xff]
  %v199 = vld [vmem:[%s3 + $0xf8] sm:$0xff]
  %v200 = vld [vmem:[%s5] sm:$0xff]
  %v201 = vld [vmem:[%s5 + $0x8] sm:$0xff]
  %v202 = vld [vmem:[%s5 + $0x10] sm:$0xff]
  %v203 = vld [vmem:[%s5 + $0x18] sm:$0xff]
  %v204 = vld [vmem:[%s5 + $0x20] sm:$0xff]
  %v205 = vld [vmem:[%s5 + $0x28] sm:$0xff]
  %v206 = vld [vmem:[%s5 + $0x30] sm:$0xff]
  %v207 = vld [vmem:[%s5 + $0x38] sm:$0xff]
  %v208 = vld [vmem:[%s5 + $0x40] sm:$0xff]
  %v209 = vld [vmem:[%s5 + $0x48] sm:$0xff]
  %v210 = vld [vmem:[%s5 + $0x50] sm:$0xff]
  %v211 = vld [vmem:[%s5 + $0x58] sm:$0xff]
  %v212 = vld [vmem:[%s5 + $0x60] sm:$0xff]
  %v213 = vld [vmem:[%s5 + $0x68] sm:$0xff]
  %v214 = vld [vmem:[%s5 + $0x70] sm:$0xff]
  %v215 = vld [vmem:[%s5 + $0x78] sm:$0xff]
  %v216 = vld [vmem:[%s5 + $0x80] sm:$0xff]
  %v217 = vld [vmem:[%s5 + $0x88] sm:$0xff]
  %v218 = vld [vmem:[%s5 + $0x90] sm:$0xff]
  %v219 = vld [vmem:[%s5 + $0x98] sm:$0xff]
  %v220 = vld [vmem:[%s5 + $0xa0] sm:$0xff]
  %v221 = vld [vmem:[%s5 + $0xa8] sm:$0xff]
  %v222 = vld [vmem:[%s5 + $0xb0] sm:$0xff]
  %v223 = vld [vmem:[%s5 + $0xb8] sm:$0xff]
  %v224 = vld [vmem:[%s5 + $0xc0] sm:$0xff]
  %v225 = vld [vmem:[%s5 + $0xc8] sm:$0xff]
  %v226 = vld [vmem:[%s5 + $0xd0] sm:$0xff]
  %v227 = vld [vmem:[%s5 + $0xd8] sm:$0xff]
  %v228 = vld [vmem:[%s5 + $0xe0] sm:$0xff]
  %v229 = vld [vmem:[%s5 + $0xe8] sm:$0xff]
  %v230 = vld [vmem:[%s5 + $0xf0] sm:$0xff]
  %v231 = vld [vmem:[%s5 + $0xf8] sm:$0xff]
  %v232 = vld [vmem:[%s7] sm:$0x3]
  %v233 = vld [vmem:[%s9] sm:$0xff]
  %v234 = vld [vmem:[%s9 + $0x8] sm:$0xff]
  %v235 = vld [vmem:[%s11] sm:$0xff]
  %v236 = vld [vmem:[%s11 + $0x8] sm:$0xff]
  %v237 = vld [vmem:[%s13] sm:$0x1]
  %v238 = vld [vmem:[%s15] sm:$0xff]
  %v239 = vld [vmem:[%s15 + $0x8] sm:$0xff]
  %v240 = vld [vmem:[%s17] sm:$0x1]
  %v241 = vld [vmem:[%s19] sm:$0xf]
  %v242 = vld [vmem:[%s21] sm:$0xff]
  %v243 = vld [vmem:[%s21 + $0x8] sm:$0x1]
  %v244 = vld [vmem:[%s23] sm:$0x1]
  %v246 = vperm.slane %v237, 0
  %vm248 = vcmask 130048
  %v250 = vsel %vm248, %v166, 0
  %v253 = vsel %vm248, %v167, 0
  %255 = vmatpush.msra.mxu0 0.0
  %256 = vmatpush.msra.mxu0 0.0
  %257 = vmatpush.msra.mxu0 0.0
  %258 = vmatpush.msra.mxu0 0.0
  %259 = vmatpush.msra.mxu0 0.0
  %260 = vmatpush.msra.mxu0 0.0
  %261 = vmatpush.msra.mxu0 0.0
  %262 = vmatpush.msra.mxu0 0.0
  %263 = vmatpush.msra.mxu0 0.0
  %264 = vmatpush.msra.mxu0 0.0
  %265 = vmatpush.msra.mxu0 0.0
  %266 = vmatpush.msra.mxu0 0.0
  %267 = vmatpush.msra.mxu0 0.0
  %268 = vmatpush.msra.mxu0 0.0
  %269 = vmatpush.msra.mxu0 %v236
  %270 = vmatpush.msra.mxu0 %v235
  %271 = vmatmul.f32.gmra.mxu0 %v250
  %v272 = vpop.f32.mrf.mxu0
  %v273 = vadd.f32 %v246, %v272
  %274 = vmatmul.f32.gmra.mxu0 %v253
  %v275 = vpop.f32.mrf.mxu0
  %v276 = vadd.f32 %v246, %v275
  %277 = vdwg.mxu0
  %v279 = vperm.slane %v240, 0
  %281 = vmatpush.msra.mxu0 0.0
  %282 = vmatpush.msra.mxu0 0.0
  %283 = vmatpush.msra.mxu0 0.0
  %284 = vmatpush.msra.mxu0 0.0
  %285 = vmatpush.msra.mxu0 0.0
  %286 = vmatpush.msra.mxu0 0.0
  %287 = vmatpush.msra.mxu0 0.0
  %288 = vmatpush.msra.mxu0 0.0
  %289 = vmatpush.msra.mxu0 0.0
  %290 = vmatpush.msra.mxu0 0.0
  %291 = vmatpush.msra.mxu0 0.0
  %292 = vmatpush.msra.mxu0 0.0
  %293 = vmatpush.msra.mxu0 0.0
  %294 = vmatpush.msra.mxu0 0.0
  %295 = vmatpush.msra.mxu0 %v239
  %296 = vmatpush.msra.mxu0 %v238
  %297 = vmatmul.f32.gmra.mxu0 %v250
  %v298 = vpop.f32.mrf.mxu0
  %v299 = vadd.f32 %v279, %v298
  %300 = vmatmul.f32.gmra.mxu0 %v253
  %v301 = vpop.f32.mrf.mxu0
  %v302 = vadd.f32 %v279, %v301
  %303 = vdwg.mxu0
  %vm304 = vcmask 31744
  %v306 = vsel %vm304, %v200, 0
  %v309 = vsel %vm304, %v201, 0
  %v312 = vsel %vm304, %v202, 0
  %v315 = vsel %vm304, %v203, 0
  %v318 = vsel %vm304, %v204, 0
  %v321 = vsel %vm304, %v205, 0
  %v324 = vsel %vm304, %v206, 0
  %v327 = vsel %vm304, %v207, 0
  %v330 = vsel %vm304, %v208, 0
  %v333 = vsel %vm304, %v209, 0
  %v336 = vsel %vm304, %v210, 0
  %v339 = vsel %vm304, %v211, 0
  %v342 = vsel %vm304, %v212, 0
  %v345 = vsel %vm304, %v213, 0
  %v348 = vsel %vm304, %v214, 0
  %v351 = vsel %vm304, %v215, 0
  %v354 = vsel %vm304, %v216, 0
  %v357 = vsel %vm304, %v217, 0
  %v360 = vsel %vm304, %v218, 0
  %v363 = vsel %vm304, %v219, 0
  %v366 = vsel %vm304, %v220, 0
  %v369 = vsel %vm304, %v221, 0
  %v372 = vsel %vm304, %v222, 0
  %v375 = vsel %vm304, %v223, 0
  %v378 = vsel %vm304, %v224, 0
  %v381 = vsel %vm304, %v225, 0
  %v384 = vsel %vm304, %v226, 0
  %v387 = vsel %vm304, %v227, 0
  %v390 = vsel %vm304, %v228, 0
  %v393 = vsel %vm304, %v229, 0
  %v396 = vsel %vm304, %v230, 0
  %v399 = vsel %vm304, %v231, 0
  %vm401 = vcmask 1043456
  %v403 = vsel %vm401, %v241, 0
  %405 = vmatpush.msra.mxu0 0.0
  %406 = vmatpush.msra.mxu0 0.0
  %407 = vmatpush.msra.mxu0 0.0
  %408 = vmatpush.msra.mxu0 0.0
  %409 = vmatpush.msra.mxu0 0.0
  %410 = vmatpush.msra.mxu0 0.0
  %411 = vmatpush.msra.mxu0 0.0
  %412 = vmatpush.msra.mxu0 0.0
  %413 = vmatpush.msra.mxu0 0.0
  %414 = vmatpush.msra.mxu0 0.0
  %415 = vmatpush.msra.mxu0 0.0
  %416 = vmatpush.msra.mxu0 0.0
  %417 = vmatpush.msra.mxu0 0.0
  %418 = vmatpush.msra.mxu0 0.0
  %419 = vmatpush.msra.mxu0 0.0
  %420 = vmatpush.msra.mxu0 %v403
  %421 = vmatmul.f32.gmra.mxu0 %v306
  %v422 = vpop.f32.mrf.mxu0
  %v423 = vadd.f32 0.0, %v422
  %424 = vmatmul.f32.gmra.mxu0 %v309
  %v425 = vpop.f32.mrf.mxu0
  %v426 = vadd.f32 0.0, %v425
  %427 = vmatmul.f32.gmra.mxu0 %v312
  %v428 = vpop.f32.mrf.mxu0
  %v429 = vadd.f32 0.0, %v428
  %430 = vmatmul.f32.gmra.mxu0 %v315
  %v431 = vpop.f32.mrf.mxu0
  %v432 = vadd.f32 0.0, %v431
  %433 = vmatmul.f32.gmra.mxu0 %v318
  %v434 = vpop.f32.mrf.mxu0
  %v435 = vadd.f32 0.0, %v434
  %436 = vmatmul.f32.gmra.mxu0 %v321
  %v437 = vpop.f32.mrf.mxu0
  %v438 = vadd.f32 0.0, %v437
  %439 = vmatmul.f32.gmra.mxu0 %v324
  %v440 = vpop.f32.mrf.mxu0
  %v441 = vadd.f32 0.0, %v440
  %442 = vmatmul.f32.gmra.mxu0 %v327
  %v443 = vpop.f32.mrf.mxu0
  %v444 = vadd.f32 0.0, %v443
  %445 = vmatmul.f32.gmra.mxu0 %v330
  %v446 = vpop.f32.mrf.mxu0
  %v447 = vadd.f32 0.0, %v446
  %448 = vmatmul.f32.gmra.mxu0 %v333
  %v449 = vpop.f32.mrf.mxu0
  %v450 = vadd.f32 0.0, %v449
  %451 = vmatmul.f32.gmra.mxu0 %v336
  %v452 = vpop.f32.mrf.mxu0
  %v453 = vadd.f32 0.0, %v452
  %454 = vmatmul.f32.gmra.mxu0 %v339
  %v455 = vpop.f32.mrf.mxu0
  %v456 = vadd.f32 0.0, %v455
  %457 = vmatmul.f32.gmra.mxu0 %v342
  %v458 = vpop.f32.mrf.mxu0
  %v459 = vadd.f32 0.0, %v458
  %460 = vmatmul.f32.gmra.mxu0 %v345
  %v461 = vpop.f32.mrf.mxu0
  %v462 = vadd.f32 0.0, %v461
  %463 = vmatmul.f32.gmra.mxu0 %v348
  %v464 = vpop.f32.mrf.mxu0
  %v465 = vadd.f32 0.0, %v464
  %466 = vmatmul.f32.gmra.mxu0 %v351
  %v467 = vpop.f32.mrf.mxu0
  %v468 = vadd.f32 0.0, %v467
  %469 = vmatmul.f32.gmra.mxu0 %v354
  %v470 = vpop.f32.mrf.mxu0
  %v471 = vadd.f32 0.0, %v470
  %472 = vmatmul.f32.gmra.mxu0 %v357
  %v473 = vpop.f32.mrf.mxu0
  %v474 = vadd.f32 0.0, %v473
  %475 = vmatmul.f32.gmra.mxu0 %v360
  %v476 = vpop.f32.mrf.mxu0
  %v477 = vadd.f32 0.0, %v476
  %478 = vmatmul.f32.gmra.mxu0 %v363
  %v479 = vpop.f32.mrf.mxu0
  %v480 = vadd.f32 0.0, %v479
  %481 = vmatmul.f32.gmra.mxu0 %v366
  %v482 = vpop.f32.mrf.mxu0
  %v483 = vadd.f32 0.0, %v482
  %484 = vmatmul.f32.gmra.mxu0 %v369
  %v485 = vpop.f32.mrf.mxu0
  %v486 = vadd.f32 0.0, %v485
  %487 = vmatmul.f32.gmra.mxu0 %v372
  %v488 = vpop.f32.mrf.mxu0
  %v489 = vadd.f32 0.0, %v488
  %490 = vmatmul.f32.gmra.mxu0 %v375
  %v491 = vpop.f32.mrf.mxu0
  %v492 = vadd.f32 0.0, %v491
  %493 = vmatmul.f32.gmra.mxu0 %v378
  %v494 = vpop.f32.mrf.mxu0
  %v495 = vadd.f32 0.0, %v494
  %496 = vmatmul.f32.gmra.mxu0 %v381
  %v497 = vpop.f32.mrf.mxu0
  %v498 = vadd.f32 0.0, %v497
  %499 = vmatmul.f32.gmra.mxu0 %v384
  %v500 = vpop.f32.mrf.mxu0
  %v501 = vadd.f32 0.0, %v500
  %502 = vmatmul.f32.gmra.mxu0 %v387
  %v503 = vpop.f32.mrf.mxu0
  %v504 = vadd.f32 0.0, %v503
  %505 = vmatmul.f32.gmra.mxu0 %v390
  %v506 = vpop.f32.mrf.mxu0
  %v507 = vadd.f32 0.0, %v506
  %508 = vmatmul.f32.gmra.mxu0 %v393
  %v509 = vpop.f32.mrf.mxu0
  %v510 = vadd.f32 0.0, %v509
  %511 = vmatmul.f32.gmra.mxu0 %v396
  %v512 = vpop.f32.mrf.mxu0
  %v513 = vadd.f32 0.0, %v512
  %514 = vmatmul.f32.gmra.mxu0 %v399
  %v515 = vpop.f32.mrf.mxu0
  %v516 = vadd.f32 0.0, %v515
  %517 = vdwg.mxu0
  %v520 = vrot.slane %v299, 1
  %v521 = vrot.slane %v299, 2
  %v522 = vrot.slane %v299, 3
  %v523 = vrot.slane %v299, 4
  %v524 = vrot.slane %v299, 5
  %v525 = vrot.slane %v299, 6
  %v526 = vrot.slane %v299, 7
  %v527 = vrot.slane %v302, 1
  %v528 = vrot.slane %v302, 2
  %v529 = vrot.slane %v302, 3
  %v530 = vrot.slane %v302, 4
  %v531 = vrot.slane %v302, 5
  %v532 = vrot.slane %v302, 6
  %v533 = vrot.slane %v302, 7
  %v534 = vperm.slane %v299, 0
  %v535 = vperm.slane %v520, 0
  %v536 = vperm.slane %v521, 0
  %v537 = vperm.slane %v522, 0
  %v538 = vperm.slane %v523, 0
  %v539 = vperm.slane %v524, 0
  %v540 = vperm.slane %v525, 0
  %v541 = vperm.slane %v526, 0
  %v542 = vperm.slane %v302, 0
  %v543 = vperm.slane %v527, 0
  %v544 = vperm.slane %v528, 0
  %v545 = vperm.slane %v529, 0
  %v546 = vperm.slane %v530, 0
  %v547 = vperm.slane %v531, 0
  %v548 = vperm.slane %v532, 0
  %v549 = vperm.slane %v533, 0
  %v566 = vadd.f32 %v534, %v273
  %v567 = vadd.f32 %v534, %v276
  %v568 = vadd.f32 %v535, %v273
  %v569 = vadd.f32 %v535, %v276
  %v570 = vadd.f32 %v536, %v273
  %v571 = vadd.f32 %v536, %v276
  %v572 = vadd.f32 %v537, %v273
  %v573 = vadd.f32 %v537, %v276
  %v574 = vadd.f32 %v538, %v273
  %v575 = vadd.f32 %v538, %v276
  %v576 = vadd.f32 %v539, %v273
  %v577 = vadd.f32 %v539, %v276
  %v578 = vadd.f32 %v540, %v273
  %v579 = vadd.f32 %v540, %v276
  %v580 = vadd.f32 %v541, %v273
  %v581 = vadd.f32 %v541, %v276
  %v582 = vadd.f32 %v542, %v273
  %v583 = vadd.f32 %v542, %v276
  %v584 = vadd.f32 %v543, %v273
  %v585 = vadd.f32 %v543, %v276
  %v586 = vadd.f32 %v544, %v273
  %v587 = vadd.f32 %v544, %v276
  %v588 = vadd.f32 %v545, %v273
  %v589 = vadd.f32 %v545, %v276
  %v590 = vadd.f32 %v546, %v273
  %v591 = vadd.f32 %v546, %v276
  %v592 = vadd.f32 %v547, %v273
  %v593 = vadd.f32 %v547, %v276
  %v594 = vadd.f32 %v548, %v273
  %v595 = vadd.f32 %v548, %v276
  %v596 = vadd.f32 %v549, %v273
  %v597 = vadd.f32 %v549, %v276
  %v598 = vadd.f32 %v566, %v423
  %v599 = vadd.f32 %v567, %v426
  %v600 = vadd.f32 %v568, %v429
  %v601 = vadd.f32 %v569, %v432
  %v602 = vadd.f32 %v570, %v435
  %v603 = vadd.f32 %v571, %v438
  %v604 = vadd.f32 %v572, %v441
  %v605 = vadd.f32 %v573, %v444
  %v606 = vadd.f32 %v574, %v447
  %v607 = vadd.f32 %v575, %v450
  %v608 = vadd.f32 %v576, %v453
  %v609 = vadd.f32 %v577, %v456
  %v610 = vadd.f32 %v578, %v459
  %v611 = vadd.f32 %v579, %v462
  %v612 = vadd.f32 %v580, %v465
  %v613 = vadd.f32 %v581, %v468
  %v614 = vadd.f32 %v582, %v471
  %v615 = vadd.f32 %v583, %v474
  %v616 = vadd.f32 %v584, %v477
  %v617 = vadd.f32 %v585, %v480
  %v618 = vadd.f32 %v586, %v483
  %v619 = vadd.f32 %v587, %v486
  %v620 = vadd.f32 %v588, %v489
  %v621 = vadd.f32 %v589, %v492
  %v622 = vadd.f32 %v590, %v495
  %v623 = vadd.f32 %v591, %v498
  %v624 = vadd.f32 %v592, %v501
  %v625 = vadd.f32 %v593, %v504
  %v626 = vadd.f32 %v594, %v507
  %v627 = vadd.f32 %v595, %v510
  %v628 = vadd.f32 %v596, %v513
  %v629 = vadd.f32 %v597, %v516
  %vm630 = vcmp.gt.f32.partialorder %v598, 0.0
  %vm631 = vcmp.gt.f32.partialorder %v599, 0.0
  %vm632 = vcmp.gt.f32.partialorder %v600, 0.0
  %vm633 = vcmp.gt.f32.partialorder %v601, 0.0
  %vm634 = vcmp.gt.f32.partialorder %v602, 0.0
  %vm635 = vcmp.gt.f32.partialorder %v603, 0.0
  %vm636 = vcmp.gt.f32.partialorder %v604, 0.0
  %vm637 = vcmp.gt.f32.partialorder %v605, 0.0
  %vm638 = vcmp.gt.f32.partialorder %v606, 0.0
  %vm639 = vcmp.gt.f32.partialorder %v607, 0.0
  %vm640 = vcmp.gt.f32.partialorder %v608, 0.0
  %vm641 = vcmp.gt.f32.partialorder %v609, 0.0
  %vm642 = vcmp.gt.f32.partialorder %v610, 0.0
  %vm643 = vcmp.gt.f32.partialorder %v611, 0.0
  %vm644 = vcmp.gt.f32.partialorder %v612, 0.0
  %vm645 = vcmp.gt.f32.partialorder %v613, 0.0
  %vm646 = vcmp.gt.f32.partialorder %v614, 0.0
  %vm647 = vcmp.gt.f32.partialorder %v615, 0.0
  %vm648 = vcmp.gt.f32.partialorder %v616, 0.0
  %vm649 = vcmp.gt.f32.partialorder %v617, 0.0
  %vm650 = vcmp.gt.f32.partialorder %v618, 0.0
  %vm651 = vcmp.gt.f32.partialorder %v619, 0.0
  %vm652 = vcmp.gt.f32.partialorder %v620, 0.0
  %vm653 = vcmp.gt.f32.partialorder %v621, 0.0
  %vm654 = vcmp.gt.f32.partialorder %v622, 0.0
  %vm655 = vcmp.gt.f32.partialorder %v623, 0.0
  %vm656 = vcmp.gt.f32.partialorder %v624, 0.0
  %vm657 = vcmp.gt.f32.partialorder %v625, 0.0
  %vm658 = vcmp.gt.f32.partialorder %v626, 0.0
  %vm659 = vcmp.gt.f32.partialorder %v627, 0.0
  %vm660 = vcmp.gt.f32.partialorder %v628, 0.0
  %vm661 = vcmp.gt.f32.partialorder %v629, 0.0
  %v662 = vmul.f32 %v598, 0.2
  %v663 = vmul.f32 %v599, 0.2
  %v664 = vmul.f32 %v600, 0.2
  %v665 = vmul.f32 %v601, 0.2
  %v666 = vmul.f32 %v602, 0.2
  %v667 = vmul.f32 %v603, 0.2
  %v668 = vmul.f32 %v604, 0.2
  %v669 = vmul.f32 %v605, 0.2
  %v670 = vmul.f32 %v606, 0.2
  %v671 = vmul.f32 %v607, 0.2
  %v672 = vmul.f32 %v608, 0.2
  %v673 = vmul.f32 %v609, 0.2
  %v674 = vmul.f32 %v610, 0.2
  %v675 = vmul.f32 %v611, 0.2
  %v676 = vmul.f32 %v612, 0.2
  %v677 = vmul.f32 %v613, 0.2
  %v678 = vmul.f32 %v614, 0.2
  %v679 = vmul.f32 %v615, 0.2
  %v680 = vmul.f32 %v616, 0.2
  %v681 = vmul.f32 %v617, 0.2
  %v682 = vmul.f32 %v618, 0.2
  %v683 = vmul.f32 %v619, 0.2
  %v684 = vmul.f32 %v620, 0.2
  %v685 = vmul.f32 %v621, 0.2
  %v686 = vmul.f32 %v622, 0.2
  %v687 = vmul.f32 %v623, 0.2
  %v688 = vmul.f32 %v624, 0.2
  %v689 = vmul.f32 %v625, 0.2
  %v690 = vmul.f32 %v626, 0.2
  %v691 = vmul.f32 %v627, 0.2
  %v692 = vmul.f32 %v628, 0.2
  %v693 = vmul.f32 %v629, 0.2
  %v694 = vsel %vm630, %v598, %v662
  %v695 = vsel %vm631, %v599, %v663
  %v696 = vsel %vm632, %v600, %v664
  %v697 = vsel %vm633, %v601, %v665
  %v698 = vsel %vm634, %v602, %v666
  %v699 = vsel %vm635, %v603, %v667
  %v700 = vsel %vm636, %v604, %v668
  %v701 = vsel %vm637, %v605, %v669
  %v702 = vsel %vm638, %v606, %v670
  %v703 = vsel %vm639, %v607, %v671
  %v704 = vsel %vm640, %v608, %v672
  %v705 = vsel %vm641, %v609, %v673
  %v706 = vsel %vm642, %v610, %v674
  %v707 = vsel %vm643, %v611, %v675
  %v708 = vsel %vm644, %v612, %v676
  %v709 = vsel %vm645, %v613, %v677
  %v710 = vsel %vm646, %v614, %v678
  %v711 = vsel %vm647, %v615, %v679
  %v712 = vsel %vm648, %v616, %v680
  %v713 = vsel %vm649, %v617, %v681
  %v714 = vsel %vm650, %v618, %v682
  %v715 = vsel %vm651, %v619, %v683
  %v716 = vsel %vm652, %v620, %v684
  %v717 = vsel %vm653, %v621, %v685
  %v718 = vsel %vm654, %v622, %v686
  %v719 = vsel %vm655, %v623, %v687
  %v720 = vsel %vm656, %v624, %v688
  %v721 = vsel %vm657, %v625, %v689
  %v722 = vsel %vm658, %v626, %v690
  %v723 = vsel %vm659, %v627, %v691
  %v724 = vsel %vm660, %v628, %v692
  %v725 = vsel %vm661, %v629, %v693
  %vm726 = vcmask 72704
  %v728 = vsel %vm726, %v694, 0
  %v731 = vsel %vm726, %v695, 0
  %v734 = vsel %vm726, %v696, 0
  %v737 = vsel %vm726, %v697, 0
  %v740 = vsel %vm726, %v698, 0
  %v743 = vsel %vm726, %v699, 0
  %v746 = vsel %vm726, %v700, 0
  %v749 = vsel %vm726, %v701, 0
  %v752 = vsel %vm726, %v702, 0
  %v755 = vsel %vm726, %v703, 0
  %v758 = vsel %vm726, %v704, 0
  %v761 = vsel %vm726, %v705, 0
  %v764 = vsel %vm726, %v706, 0
  %v767 = vsel %vm726, %v707, 0
  %v770 = vsel %vm726, %v708, 0
  %v773 = vsel %vm726, %v709, 0
  %v776 = vsel %vm726, %v710, 0
  %v779 = vsel %vm726, %v711, 0
  %v782 = vsel %vm726, %v712, 0
  %v785 = vsel %vm726, %v713, 0
  %v788 = vsel %vm726, %v714, 0
  %v791 = vsel %vm726, %v715, 0
  %v794 = vsel %vm726, %v716, 0
  %v797 = vsel %vm726, %v717, 0
  %v800 = vsel %vm726, %v718, 0
  %v803 = vsel %vm726, %v719, 0
  %v806 = vsel %vm726, %v720, 0
  %v809 = vsel %vm726, %v721, 0
  %v812 = vsel %vm726, %v722, 0
  %v815 = vsel %vm726, %v723, 0
  %v818 = vsel %vm726, %v724, 0
  %v821 = vsel %vm726, %v725, 0
  %vm823 = vcmask 1040384
  %v825 = vsel %vm823, %v243, 0
  %827 = vmatpush.msra.mxu0 0.0
  %828 = vmatpush.msra.mxu0 0.0
  %829 = vmatpush.msra.mxu0 0.0
  %830 = vmatpush.msra.mxu0 0.0
  %831 = vmatpush.msra.mxu0 0.0
  %832 = vmatpush.msra.mxu0 0.0
  %833 = vmatpush.msra.mxu0 0.0
  %834 = vmatpush.msra.mxu0 0.0
  %835 = vmatpush.msra.mxu0 0.0
  %836 = vmatpush.msra.mxu0 0.0
  %837 = vmatpush.msra.mxu0 0.0
  %838 = vmatpush.msra.mxu0 0.0
  %839 = vmatpush.msra.mxu0 0.0
  %840 = vmatpush.msra.mxu0 0.0
  %841 = vmatpush.msra.mxu0 %v825
  %842 = vmatpush.msra.mxu0 %v242
  %843 = vmatmul.f32.gmra.mxu0 %v728
  %v844 = vpop.f32.mrf.mxu0
  %v845 = vadd.f32 0.0, %v844
  %846 = vmatmul.f32.gmra.mxu0 %v731
  %v847 = vpop.f32.mrf.mxu0
  %v848 = vadd.f32 0.0, %v847
  %849 = vmatmul.f32.gmra.mxu0 %v734
  %v850 = vpop.f32.mrf.mxu0
  %v851 = vadd.f32 0.0, %v850
  %852 = vmatmul.f32.gmra.mxu0 %v737
  %v853 = vpop.f32.mrf.mxu0
  %v854 = vadd.f32 0.0, %v853
  %855 = vmatmul.f32.gmra.mxu0 %v740
  %v856 = vpop.f32.mrf.mxu0
  %v857 = vadd.f32 0.0, %v856
  %858 = vmatmul.f32.gmra.mxu0 %v743
  %v859 = vpop.f32.mrf.mxu0
  %v860 = vadd.f32 0.0, %v859
  %861 = vmatmul.f32.gmra.mxu0 %v746
  %v862 = vpop.f32.mrf.mxu0
  %v863 = vadd.f32 0.0, %v862
  %864 = vmatmul.f32.gmra.mxu0 %v749
  %v865 = vpop.f32.mrf.mxu0
  %v866 = vadd.f32 0.0, %v865
  %867 = vmatmul.f32.gmra.mxu0 %v752
  %v868 = vpop.f32.mrf.mxu0
  %v869 = vadd.f32 0.0, %v868
  %870 = vmatmul.f32.gmra.mxu0 %v755
  %v871 = vpop.f32.mrf.mxu0
  %v872 = vadd.f32 0.0, %v871
  %873 = vmatmul.f32.gmra.mxu0 %v758
  %v874 = vpop.f32.mrf.mxu0
  %v875 = vadd.f32 0.0, %v874
  %876 = vmatmul.f32.gmra.mxu0 %v761
  %v877 = vpop.f32.mrf.mxu0
  %v878 = vadd.f32 0.0, %v877
  %879 = vmatmul.f32.gmra.mxu0 %v764
  %v880 = vpop.f32.mrf.mxu0
  %v881 = vadd.f32 0.0, %v880
  %882 = vmatmul.f32.gmra.mxu0 %v767
  %v883 = vpop.f32.mrf.mxu0
  %v884 = vadd.f32 0.0, %v883
  %885 = vmatmul.f32.gmra.mxu0 %v770
  %v886 = vpop.f32.mrf.mxu0
  %v887 = vadd.f32 0.0, %v886
  %888 = vmatmul.f32.gmra.mxu0 %v773
  %v889 = vpop.f32.mrf.mxu0
  %v890 = vadd.f32 0.0, %v889
  %891 = vmatmul.f32.gmra.mxu0 %v776
  %v892 = vpop.f32.mrf.mxu0
  %v893 = vadd.f32 0.0, %v892
  %894 = vmatmul.f32.gmra.mxu0 %v779
  %v895 = vpop.f32.mrf.mxu0
  %v896 = vadd.f32 0.0, %v895
  %897 = vmatmul.f32.gmra.mxu0 %v782
  %v898 = vpop.f32.mrf.mxu0
  %v899 = vadd.f32 0.0, %v898
  %900 = vmatmul.f32.gmra.mxu0 %v785
  %v901 = vpop.f32.mrf.mxu0
  %v902 = vadd.f32 0.0, %v901
  %903 = vmatmul.f32.gmra.mxu0 %v788
  %v904 = vpop.f32.mrf.mxu0
  %v905 = vadd.f32 0.0, %v904
  %906 = vmatmul.f32.gmra.mxu0 %v791
  %v907 = vpop.f32.mrf.mxu0
  %v908 = vadd.f32 0.0, %v907
  %909 = vmatmul.f32.gmra.mxu0 %v794
  %v910 = vpop.f32.mrf.mxu0
  %v911 = vadd.f32 0.0, %v910
  %912 = vmatmul.f32.gmra.mxu0 %v797
  %v913 = vpop.f32.mrf.mxu0
  %v914 = vadd.f32 0.0, %v913
  %915 = vmatmul.f32.gmra.mxu0 %v800
  %v916 = vpop.f32.mrf.mxu0
  %v917 = vadd.f32 0.0, %v916
  %918 = vmatmul.f32.gmra.mxu0 %v803
  %v919 = vpop.f32.mrf.mxu0
  %v920 = vadd.f32 0.0, %v919
  %921 = vmatmul.f32.gmra.mxu0 %v806
  %v922 = vpop.f32.mrf.mxu0
  %v923 = vadd.f32 0.0, %v922
  %924 = vmatmul.f32.gmra.mxu0 %v809
  %v925 = vpop.f32.mrf.mxu0
  %v926 = vadd.f32 0.0, %v925
  %927 = vmatmul.f32.gmra.mxu0 %v812
  %v928 = vpop.f32.mrf.mxu0
  %v929 = vadd.f32 0.0, %v928
  %930 = vmatmul.f32.gmra.mxu0 %v815
  %v931 = vpop.f32.mrf.mxu0
  %v932 = vadd.f32 0.0, %v931
  %933 = vmatmul.f32.gmra.mxu0 %v818
  %v934 = vpop.f32.mrf.mxu0
  %v935 = vadd.f32 0.0, %v934
  %936 = vmatmul.f32.gmra.mxu0 %v821
  %v937 = vpop.f32.mrf.mxu0
  %v938 = vadd.f32 0.0, %v937
  %939 = vdwg.mxu0
  %941 = vset.pattern.permute.xlu0 0
  %942 = vperm.xlu0 %941, %v168
  %v943 = vpop.permute.xlu0 %942
  %946 = vset.pattern.permute.xlu0 0
  %947 = vperm.xlu0 %946, %v169
  %v948 = vpop.permute.xlu0 %947
  %951 = vset.pattern.permute.xlu0 0
  %952 = vperm.xlu0 %951, %v170
  %v953 = vpop.permute.xlu0 %952
  %956 = vset.pattern.permute.xlu0 0
  %957 = vperm.xlu0 %956, %v171
  %v958 = vpop.permute.xlu0 %957
  %961 = vset.pattern.permute.xlu0 0
  %962 = vperm.xlu0 %961, %v172
  %v963 = vpop.permute.xlu0 %962
  %966 = vset.pattern.permute.xlu0 0
  %967 = vperm.xlu0 %966, %v173
  %v968 = vpop.permute.xlu0 %967
  %971 = vset.pattern.permute.xlu0 0
  %972 = vperm.xlu0 %971, %v174
  %v973 = vpop.permute.xlu0 %972
  %976 = vset.pattern.permute.xlu0 0
  %977 = vperm.xlu0 %976, %v175
  %v978 = vpop.permute.xlu0 %977
  %981 = vset.pattern.permute.xlu0 0
  %982 = vperm.xlu0 %981, %v176
  %v983 = vpop.permute.xlu0 %982
  %986 = vset.pattern.permute.xlu0 0
  %987 = vperm.xlu0 %986, %v177
  %v988 = vpop.permute.xlu0 %987
  %991 = vset.pattern.permute.xlu0 0
  %992 = vperm.xlu0 %991, %v178
  %v993 = vpop.permute.xlu0 %992
  %996 = vset.pattern.permute.xlu0 0
  %997 = vperm.xlu0 %996, %v179
  %v998 = vpop.permute.xlu0 %997
  %1001 = vset.pattern.permute.xlu0 0
  %1002 = vperm.xlu0 %1001, %v180
  %v1003 = vpop.permute.xlu0 %1002
  %1006 = vset.pattern.permute.xlu0 0
  %1007 = vperm.xlu0 %1006, %v181
  %v1008 = vpop.permute.xlu0 %1007
  %1011 = vset.pattern.permute.xlu0 0
  %1012 = vperm.xlu0 %1011, %v182
  %v1013 = vpop.permute.xlu0 %1012
  %1016 = vset.pattern.permute.xlu0 0
  %1017 = vperm.xlu0 %1016, %v183
  %v1018 = vpop.permute.xlu0 %1017
  %1021 = vset.pattern.permute.xlu0 0
  %1022 = vperm.xlu0 %1021, %v184
  %v1023 = vpop.permute.xlu0 %1022
  %1026 = vset.pattern.permute.xlu0 0
  %1027 = vperm.xlu0 %1026, %v185
  %v1028 = vpop.permute.xlu0 %1027
  %1031 = vset.pattern.permute.xlu0 0
  %1032 = vperm.xlu0 %1031, %v186
  %v1033 = vpop.permute.xlu0 %1032
  %1036 = vset.pattern.permute.xlu0 0
  %1037 = vperm.xlu0 %1036, %v187
  %v1038 = vpop.permute.xlu0 %1037
  %1041 = vset.pattern.permute.xlu0 0
  %1042 = vperm.xlu0 %1041, %v188
  %v1043 = vpop.permute.xlu0 %1042
  %1046 = vset.pattern.permute.xlu0 0
  %1047 = vperm.xlu0 %1046, %v189
  %v1048 = vpop.permute.xlu0 %1047
  %1051 = vset.pattern.permute.xlu0 0
  %1052 = vperm.xlu0 %1051, %v190
  %v1053 = vpop.permute.xlu0 %1052
  %1056 = vset.pattern.permute.xlu0 0
  %1057 = vperm.xlu0 %1056, %v191
  %v1058 = vpop.permute.xlu0 %1057
  %1061 = vset.pattern.permute.xlu0 0
  %1062 = vperm.xlu0 %1061, %v192
  %v1063 = vpop.permute.xlu0 %1062
  %1066 = vset.pattern.permute.xlu0 0
  %1067 = vperm.xlu0 %1066, %v193
  %v1068 = vpop.permute.xlu0 %1067
  %1071 = vset.pattern.permute.xlu0 0
  %1072 = vperm.xlu0 %1071, %v194
  %v1073 = vpop.permute.xlu0 %1072
  %1076 = vset.pattern.permute.xlu0 0
  %1077 = vperm.xlu0 %1076, %v195
  %v1078 = vpop.permute.xlu0 %1077
  %1081 = vset.pattern.permute.xlu0 0
  %1082 = vperm.xlu0 %1081, %v196
  %v1083 = vpop.permute.xlu0 %1082
  %1086 = vset.pattern.permute.xlu0 0
  %1087 = vperm.xlu0 %1086, %v197
  %v1088 = vpop.permute.xlu0 %1087
  %1091 = vset.pattern.permute.xlu0 0
  %1092 = vperm.xlu0 %1091, %v198
  %v1093 = vpop.permute.xlu0 %1092
  %1096 = vset.pattern.permute.xlu0 0
  %1097 = vperm.xlu0 %1096, %v199
  %v1098 = vpop.permute.xlu0 %1097
  %v1100 = vadd.f32 %v845, %v943
  %v1101 = vadd.f32 %v848, %v948
  %v1102 = vadd.f32 %v851, %v953
  %v1103 = vadd.f32 %v854, %v958
  %v1104 = vadd.f32 %v857, %v963
  %v1105 = vadd.f32 %v860, %v968
  %v1106 = vadd.f32 %v863, %v973
  %v1107 = vadd.f32 %v866, %v978
  %v1108 = vadd.f32 %v869, %v983
  %v1109 = vadd.f32 %v872, %v988
  %v1110 = vadd.f32 %v875, %v993
  %v1111 = vadd.f32 %v878, %v998
  %v1112 = vadd.f32 %v881, %v1003
  %v1113 = vadd.f32 %v884, %v1008
  %v1114 = vadd.f32 %v887, %v1013
  %v1115 = vadd.f32 %v890, %v1018
  %v1116 = vadd.f32 %v893, %v1023
  %v1117 = vadd.f32 %v896, %v1028
  %v1118 = vadd.f32 %v899, %v1033
  %v1119 = vadd.f32 %v902, %v1038
  %v1120 = vadd.f32 %v905, %v1043
  %v1121 = vadd.f32 %v908, %v1048
  %v1122 = vadd.f32 %v911, %v1053
  %v1123 = vadd.f32 %v914, %v1058
  %v1124 = vadd.f32 %v917, %v1063
  %v1125 = vadd.f32 %v920, %v1068
  %v1126 = vadd.f32 %v923, %v1073
  %v1127 = vadd.f32 %v926, %v1078
  %v1128 = vadd.f32 %v929, %v1083
  %v1129 = vadd.f32 %v932, %v1088
  %v1130 = vadd.f32 %v935, %v1093
  %v1131 = vadd.f32 %v938, %v1098
  %v1132 = vsel %vm726, %v1100, -inf
  %v1133 = vsel %vm726, %v1101, -inf
  %v1134 = vmax.f32 %v1132, %v1133
  %v1135 = vrot.slane %v1134, 4
  %v1136 = vmax.f32 %v1134, %v1135
  %v1137 = vrot.slane %v1136, 2
  %v1138 = vmax.f32 %v1136, %v1137
  %v1139 = vrot.slane %v1138, 1
  %v1140 = vmax.f32 %v1138, %v1139
  %v1141 = vsel %vm726, %v1102, -inf
  %v1142 = vsel %vm726, %v1103, -inf
  %v1143 = vmax.f32 %v1141, %v1142
  %v1144 = vrot.slane %v1143, 4
  %v1145 = vmax.f32 %v1143, %v1144
  %v1146 = vrot.slane %v1145, 2
  %v1147 = vmax.f32 %v1145, %v1146
  %v1148 = vrot.slane %v1147, 1
  %v1149 = vmax.f32 %v1147, %v1148
  %v1150 = vsel %vm726, %v1104, -inf
  %v1151 = vsel %vm726, %v1105, -inf
  %v1152 = vmax.f32 %v1150, %v1151
  %v1153 = vrot.slane %v1152, 4
  %v1154 = vmax.f32 %v1152, %v1153
  %v1155 = vrot.slane %v1154, 2
  %v1156 = vmax.f32 %v1154, %v1155
  %v1157 = vrot.slane %v1156, 1
  %v1158 = vmax.f32 %v1156, %v1157
  %v1159 = vsel %vm726, %v1106, -inf
  %v1160 = vsel %vm726, %v1107, -inf
  %v1161 = vmax.f32 %v1159, %v1160
  %v1162 = vrot.slane %v1161, 4
  %v1163 = vmax.f32 %v1161, %v1162
  %v1164 = vrot.slane %v1163, 2
  %v1165 = vmax.f32 %v1163, %v1164
  %v1166 = vrot.slane %v1165, 1
  %v1167 = vmax.f32 %v1165, %v1166
  %v1168 = vsel %vm726, %v1108, -inf
  %v1169 = vsel %vm726, %v1109, -inf
  %v1170 = vmax.f32 %v1168, %v1169
  %v1171 = vrot.slane %v1170, 4
  %v1172 = vmax.f32 %v1170, %v1171
  %v1173 = vrot.slane %v1172, 2
  %v1174 = vmax.f32 %v1172, %v1173
  %v1175 = vrot.slane %v1174, 1
  %v1176 = vmax.f32 %v1174, %v1175
  %v1177 = vsel %vm726, %v1110, -inf
  %v1178 = vsel %vm726, %v1111, -inf
  %v1179 = vmax.f32 %v1177, %v1178
  %v1180 = vrot.slane %v1179, 4
  %v1181 = vmax.f32 %v1179, %v1180
  %v1182 = vrot.slane %v1181, 2
  %v1183 = vmax.f32 %v1181, %v1182
  %v1184 = vrot.slane %v1183, 1
  %v1185 = vmax.f32 %v1183, %v1184
  %v1186 = vsel %vm726, %v1112, -inf
  %v1187 = vsel %vm726, %v1113, -inf
  %v1188 = vmax.f32 %v1186, %v1187
  %v1189 = vrot.slane %v1188, 4
  %v1190 = vmax.f32 %v1188, %v1189
  %v1191 = vrot.slane %v1190, 2
  %v1192 = vmax.f32 %v1190, %v1191
  %v1193 = vrot.slane %v1192, 1
  %v1194 = vmax.f32 %v1192, %v1193
  %v1195 = vsel %vm726, %v1114, -inf
  %v1196 = vsel %vm726, %v1115, -inf
  %v1197 = vmax.f32 %v1195, %v1196
  %v1198 = vrot.slane %v1197, 4
  %v1199 = vmax.f32 %v1197, %v1198
  %v1200 = vrot.slane %v1199, 2
  %v1201 = vmax.f32 %v1199, %v1200
  %v1202 = vrot.slane %v1201, 1
  %v1203 = vmax.f32 %v1201, %v1202
  %v1204 = vsel %vm726, %v1116, -inf
  %v1205 = vsel %vm726, %v1117, -inf
  %v1206 = vmax.f32 %v1204, %v1205
  %v1207 = vrot.slane %v1206, 4
  %v1208 = vmax.f32 %v1206, %v1207
  %v1209 = vrot.slane %v1208, 2
  %v1210 = vmax.f32 %v1208, %v1209
  %v1211 = vrot.slane %v1210, 1
  %v1212 = vmax.f32 %v1210, %v1211
  %v1213 = vsel %vm726, %v1118, -inf
  %v1214 = vsel %vm726, %v1119, -inf
  %v1215 = vmax.f32 %v1213, %v1214
  %v1216 = vrot.slane %v1215, 4
  %v1217 = vmax.f32 %v1215, %v1216
  %v1218 = vrot.slane %v1217, 2
  %v1219 = vmax.f32 %v1217, %v1218
  %v1220 = vrot.slane %v1219, 1
  %v1221 = vmax.f32 %v1219, %v1220
  %v1222 = vsel %vm726, %v1120, -inf
  %v1223 = vsel %vm726, %v1121, -inf
  %v1224 = vmax.f32 %v1222, %v1223
  %v1225 = vrot.slane %v1224, 4
  %v1226 = vmax.f32 %v1224, %v1225
  %v1227 = vrot.slane %v1226, 2
  %v1228 = vmax.f32 %v1226, %v1227
  %v1229 = vrot.slane %v1228, 1
  %v1230 = vmax.f32 %v1228, %v1229
  %v1231 = vsel %vm726, %v1122, -inf
  %v1232 = vsel %vm726, %v1123, -inf
  %v1233 = vmax.f32 %v1231, %v1232
  %v1234 = vrot.slane %v1233, 4
  %v1235 = vmax.f32 %v1233, %v1234
  %v1236 = vrot.slane %v1235, 2
  %v1237 = vmax.f32 %v1235, %v1236
  %v1238 = vrot.slane %v1237, 1
  %v1239 = vmax.f32 %v1237, %v1238
  %v1240 = vsel %vm726, %v1124, -inf
  %v1241 = vsel %vm726, %v1125, -inf
  %v1242 = vmax.f32 %v1240, %v1241
  %v1243 = vrot.slane %v1242, 4
  %v1244 = vmax.f32 %v1242, %v1243
  %v1245 = vrot.slane %v1244, 2
  %v1246 = vmax.f32 %v1244, %v1245
  %v1247 = vrot.slane %v1246, 1
  %v1248 = vmax.f32 %v1246, %v1247
  %v1249 = vsel %vm726, %v1126, -inf
  %v1250 = vsel %vm726, %v1127, -inf
  %v1251 = vmax.f32 %v1249, %v1250
  %v1252 = vrot.slane %v1251, 4
  %v1253 = vmax.f32 %v1251, %v1252
  %v1254 = vrot.slane %v1253, 2
  %v1255 = vmax.f32 %v1253, %v1254
  %v1256 = vrot.slane %v1255, 1
  %v1257 = vmax.f32 %v1255, %v1256
  %v1258 = vsel %vm726, %v1128, -inf
  %v1259 = vsel %vm726, %v1129, -inf
  %v1260 = vmax.f32 %v1258, %v1259
  %v1261 = vrot.slane %v1260, 4
  %v1262 = vmax.f32 %v1260, %v1261
  %v1263 = vrot.slane %v1262, 2
  %v1264 = vmax.f32 %v1262, %v1263
  %v1265 = vrot.slane %v1264, 1
  %v1266 = vmax.f32 %v1264, %v1265
  %v1267 = vsel %vm726, %v1130, -inf
  %v1268 = vsel %vm726, %v1131, -inf
  %v1269 = vmax.f32 %v1267, %v1268
  %v1270 = vrot.slane %v1269, 4
  %v1271 = vmax.f32 %v1269, %v1270
  %v1272 = vrot.slane %v1271, 2
  %v1273 = vmax.f32 %v1271, %v1272
  %v1274 = vrot.slane %v1273, 1
  %v1275 = vmax.f32 %v1273, %v1274
  %v1276 = vsub.f32 %v1100, %v1140
  %v1277 = vsub.f32 %v1101, %v1140
  %v1278 = vsub.f32 %v1102, %v1149
  %v1279 = vsub.f32 %v1103, %v1149
  %v1280 = vsub.f32 %v1104, %v1158
  %v1281 = vsub.f32 %v1105, %v1158
  %v1282 = vsub.f32 %v1106, %v1167
  %v1283 = vsub.f32 %v1107, %v1167
  %v1284 = vsub.f32 %v1108, %v1176
  %v1285 = vsub.f32 %v1109, %v1176
  %v1286 = vsub.f32 %v1110, %v1185
  %v1287 = vsub.f32 %v1111, %v1185
  %v1288 = vsub.f32 %v1112, %v1194
  %v1289 = vsub.f32 %v1113, %v1194
  %v1290 = vsub.f32 %v1114, %v1203
  %v1291 = vsub.f32 %v1115, %v1203
  %v1292 = vsub.f32 %v1116, %v1212
  %v1293 = vsub.f32 %v1117, %v1212
  %v1294 = vsub.f32 %v1118, %v1221
  %v1295 = vsub.f32 %v1119, %v1221
  %v1296 = vsub.f32 %v1120, %v1230
  %v1297 = vsub.f32 %v1121, %v1230
  %v1298 = vsub.f32 %v1122, %v1239
  %v1299 = vsub.f32 %v1123, %v1239
  %v1300 = vsub.f32 %v1124, %v1248
  %v1301 = vsub.f32 %v1125, %v1248
  %v1302 = vsub.f32 %v1126, %v1257
  %v1303 = vsub.f32 %v1127, %v1257
  %v1304 = vsub.f32 %v1128, %v1266
  %v1305 = vsub.f32 %v1129, %v1266
  %v1306 = vsub.f32 %v1130, %v1275
  %v1307 = vsub.f32 %v1131, %v1275
  %v1308 = vmul.f32 %v1276, 1.442695
  %v1309 = vpow.pop %v1308
  %v1310 = vmul.f32 %v1277, 1.442695
  %v1311 = vpow.pop %v1310
  %v1312 = vmul.f32 %v1278, 1.442695
  %v1313 = vpow.pop %v1312
  %v1314 = vmul.f32 %v1279, 1.442695
  %v1315 = vpow.pop %v1314
  %v1316 = vmul.f32 %v1280, 1.442695
  %v1317 = vpow.pop %v1316
  %v1318 = vmul.f32 %v1281, 1.442695
  %v1319 = vpow.pop %v1318
  %v1320 = vmul.f32 %v1282, 1.442695
  %v1321 = vpow.pop %v1320
  %v1322 = vmul.f32 %v1283, 1.442695
  %v1323 = vpow.pop %v1322
  %v1324 = vmul.f32 %v1284, 1.442695
  %v1325 = vpow.pop %v1324
  %v1326 = vmul.f32 %v1285, 1.442695
  %v1327 = vpow.pop %v1326
  %v1328 = vmul.f32 %v1286, 1.442695
  %v1329 = vpow.pop %v1328
  %v1330 = vmul.f32 %v1287, 1.442695
  %v1331 = vpow.pop %v1330
  %v1332 = vmul.f32 %v1288, 1.442695
  %v1333 = vpow.pop %v1332
  %v1334 = vmul.f32 %v1289, 1.442695
  %v1335 = vpow.pop %v1334
  %v1336 = vmul.f32 %v1290, 1.442695
  %v1337 = vpow.pop %v1336
  %v1338 = vmul.f32 %v1291, 1.442695
  %v1339 = vpow.pop %v1338
  %v1340 = vmul.f32 %v1292, 1.442695
  %v1341 = vpow.pop %v1340
  %v1342 = vmul.f32 %v1293, 1.442695
  %v1343 = vpow.pop %v1342
  %v1344 = vmul.f32 %v1294, 1.442695
  %v1345 = vpow.pop %v1344
  %v1346 = vmul.f32 %v1295, 1.442695
  %v1347 = vpow.pop %v1346
  %v1348 = vmul.f32 %v1296, 1.442695
  %v1349 = vpow.pop %v1348
  %v1350 = vmul.f32 %v1297, 1.442695
  %v1351 = vpow.pop %v1350
  %v1352 = vmul.f32 %v1298, 1.442695
  %v1353 = vpow.pop %v1352
  %v1354 = vmul.f32 %v1299, 1.442695
  %v1355 = vpow.pop %v1354
  %v1356 = vmul.f32 %v1300, 1.442695
  %v1357 = vpow.pop %v1356
  %v1358 = vmul.f32 %v1301, 1.442695
  %v1359 = vpow.pop %v1358
  %v1360 = vmul.f32 %v1302, 1.442695
  %v1361 = vpow.pop %v1360
  %v1362 = vmul.f32 %v1303, 1.442695
  %v1363 = vpow.pop %v1362
  %v1364 = vmul.f32 %v1304, 1.442695
  %v1365 = vpow.pop %v1364
  %v1366 = vmul.f32 %v1305, 1.442695
  %v1367 = vpow.pop %v1366
  %v1368 = vmul.f32 %v1306, 1.442695
  %v1369 = vpow.pop %v1368
  %v1370 = vmul.f32 %v1307, 1.442695
  %v1371 = vpow.pop %v1370
  %v1372 = vsel %vm726, %v1309, 0.0
  %v1373 = vsel %vm726, %v1311, 0.0
  %v1374 = vadd.f32 %v1372, %v1373
  %v1375 = vrot.slane %v1374, 4
  %v1376 = vadd.f32 %v1374, %v1375
  %v1377 = vrot.slane %v1376, 2
  %v1378 = vadd.f32 %v1376, %v1377
  %v1379 = vrot.slane %v1378, 1
  %v1380 = vadd.f32 %v1378, %v1379
  %v1381 = vsel %vm726, %v1313, 0.0
  %v1382 = vsel %vm726, %v1315, 0.0
  %v1383 = vadd.f32 %v1381, %v1382
  %v1384 = vrot.slane %v1383, 4
  %v1385 = vadd.f32 %v1383, %v1384
  %v1386 = vrot.slane %v1385, 2
  %v1387 = vadd.f32 %v1385, %v1386
  %v1388 = vrot.slane %v1387, 1
  %v1389 = vadd.f32 %v1387, %v1388
  %v1390 = vsel %vm726, %v1317, 0.0
  %v1391 = vsel %vm726, %v1319, 0.0
  %v1392 = vadd.f32 %v1390, %v1391
  %v1393 = vrot.slane %v1392, 4
  %v1394 = vadd.f32 %v1392, %v1393
  %v1395 = vrot.slane %v1394, 2
  %v1396 = vadd.f32 %v1394, %v1395
  %v1397 = vrot.slane %v1396, 1
  %v1398 = vadd.f32 %v1396, %v1397
  %v1399 = vsel %vm726, %v1321, 0.0
  %v1400 = vsel %vm726, %v1323, 0.0
  %v1401 = vadd.f32 %v1399, %v1400
  %v1402 = vrot.slane %v1401, 4
  %v1403 = vadd.f32 %v1401, %v1402
  %v1404 = vrot.slane %v1403, 2
  %v1405 = vadd.f32 %v1403, %v1404
  %v1406 = vrot.slane %v1405, 1
  %v1407 = vadd.f32 %v1405, %v1406
  %v1408 = vsel %vm726, %v1325, 0.0
  %v1409 = vsel %vm726, %v1327, 0.0
  %v1410 = vadd.f32 %v1408, %v1409
  %v1411 = vrot.slane %v1410, 4
  %v1412 = vadd.f32 %v1410, %v1411
  %v1413 = vrot.slane %v1412, 2
  %v1414 = vadd.f32 %v1412, %v1413
  %v1415 = vrot.slane %v1414, 1
  %v1416 = vadd.f32 %v1414, %v1415
  %v1417 = vsel %vm726, %v1329, 0.0
  %v1418 = vsel %vm726, %v1331, 0.0
  %v1419 = vadd.f32 %v1417, %v1418
  %v1420 = vrot.slane %v1419, 4
  %v1421 = vadd.f32 %v1419, %v1420
  %v1422 = vrot.slane %v1421, 2
  %v1423 = vadd.f32 %v1421, %v1422
  %v1424 = vrot.slane %v1423, 1
  %v1425 = vadd.f32 %v1423, %v1424
  %v1426 = vsel %vm726, %v1333, 0.0
  %v1427 = vsel %vm726, %v1335, 0.0
  %v1428 = vadd.f32 %v1426, %v1427
  %v1429 = vrot.slane %v1428, 4
  %v1430 = vadd.f32 %v1428, %v1429
  %v1431 = vrot.slane %v1430, 2
  %v1432 = vadd.f32 %v1430, %v1431
  %v1433 = vrot.slane %v1432, 1
  %v1434 = vadd.f32 %v1432, %v1433
  %v1435 = vsel %vm726, %v1337, 0.0
  %v1436 = vsel %vm726, %v1339, 0.0
  %v1437 = vadd.f32 %v1435, %v1436
  %v1438 = vrot.slane %v1437, 4
  %v1439 = vadd.f32 %v1437, %v1438
  %v1440 = vrot.slane %v1439, 2
  %v1441 = vadd.f32 %v1439, %v1440
  %v1442 = vrot.slane %v1441, 1
  %v1443 = vadd.f32 %v1441, %v1442
  %v1444 = vsel %vm726, %v1341, 0.0
  %v1445 = vsel %vm726, %v1343, 0.0
  %v1446 = vadd.f32 %v1444, %v1445
  %v1447 = vrot.slane %v1446, 4
  %v1448 = vadd.f32 %v1446, %v1447
  %v1449 = vrot.slane %v1448, 2
  %v1450 = vadd.f32 %v1448, %v1449
  %v1451 = vrot.slane %v1450, 1
  %v1452 = vadd.f32 %v1450, %v1451
  %v1453 = vsel %vm726, %v1345, 0.0
  %v1454 = vsel %vm726, %v1347, 0.0
  %v1455 = vadd.f32 %v1453, %v1454
  %v1456 = vrot.slane %v1455, 4
  %v1457 = vadd.f32 %v1455, %v1456
  %v1458 = vrot.slane %v1457, 2
  %v1459 = vadd.f32 %v1457, %v1458
  %v1460 = vrot.slane %v1459, 1
  %v1461 = vadd.f32 %v1459, %v1460
  %v1462 = vsel %vm726, %v1349, 0.0
  %v1463 = vsel %vm726, %v1351, 0.0
  %v1464 = vadd.f32 %v1462, %v1463
  %v1465 = vrot.slane %v1464, 4
  %v1466 = vadd.f32 %v1464, %v1465
  %v1467 = vrot.slane %v1466, 2
  %v1468 = vadd.f32 %v1466, %v1467
  %v1469 = vrot.slane %v1468, 1
  %v1470 = vadd.f32 %v1468, %v1469
  %v1471 = vsel %vm726, %v1353, 0.0
  %v1472 = vsel %vm726, %v1355, 0.0
  %v1473 = vadd.f32 %v1471, %v1472
  %v1474 = vrot.slane %v1473, 4
  %v1475 = vadd.f32 %v1473, %v1474
  %v1476 = vrot.slane %v1475, 2
  %v1477 = vadd.f32 %v1475, %v1476
  %v1478 = vrot.slane %v1477, 1
  %v1479 = vadd.f32 %v1477, %v1478
  %v1480 = vsel %vm726, %v1357, 0.0
  %v1481 = vsel %vm726, %v1359, 0.0
  %v1482 = vadd.f32 %v1480, %v1481
  %v1483 = vrot.slane %v1482, 4
  %v1484 = vadd.f32 %v1482, %v1483
  %v1485 = vrot.slane %v1484, 2
  %v1486 = vadd.f32 %v1484, %v1485
  %v1487 = vrot.slane %v1486, 1
  %v1488 = vadd.f32 %v1486, %v1487
  %v1489 = vsel %vm726, %v1361, 0.0
  %v1490 = vsel %vm726, %v1363, 0.0
  %v1491 = vadd.f32 %v1489, %v1490
  %v1492 = vrot.slane %v1491, 4
  %v1493 = vadd.f32 %v1491, %v1492
  %v1494 = vrot.slane %v1493, 2
  %v1495 = vadd.f32 %v1493, %v1494
  %v1496 = vrot.slane %v1495, 1
  %v1497 = vadd.f32 %v1495, %v1496
  %v1498 = vsel %vm726, %v1365, 0.0
  %v1499 = vsel %vm726, %v1367, 0.0
  %v1500 = vadd.f32 %v1498, %v1499
  %v1501 = vrot.slane %v1500, 4
  %v1502 = vadd.f32 %v1500, %v1501
  %v1503 = vrot.slane %v1502, 2
  %v1504 = vadd.f32 %v1502, %v1503
  %v1505 = vrot.slane %v1504, 1
  %v1506 = vadd.f32 %v1504, %v1505
  %v1507 = vsel %vm726, %v1369, 0.0
  %v1508 = vsel %vm726, %v1371, 0.0
  %v1509 = vadd.f32 %v1507, %v1508
  %v1510 = vrot.slane %v1509, 4
  %v1511 = vadd.f32 %v1509, %v1510
  %v1512 = vrot.slane %v1511, 2
  %v1513 = vadd.f32 %v1511, %v1512
  %v1514 = vrot.slane %v1513, 1
  %v1515 = vadd.f32 %v1513, %v1514
  %v1516 = vrcp.pop %v1380
  %v1517 = vrcp.pop %v1389
  %v1518 = vrcp.pop %v1398
  %v1519 = vrcp.pop %v1407
  %v1520 = vrcp.pop %v1416
  %v1521 = vrcp.pop %v1425
  %v1522 = vrcp.pop %v1434
  %v1523 = vrcp.pop %v1443
  %v1524 = vrcp.pop %v1452
  %v1525 = vrcp.pop %v1461
  %v1526 = vrcp.pop %v1470
  %v1527 = vrcp.pop %v1479
  %v1528 = vrcp.pop %v1488
  %v1529 = vrcp.pop %v1497
  %v1530 = vrcp.pop %v1506
  %v1531 = vrcp.pop %v1515
  %v1532 = vmul.f32 %v1309, %v1516
  %v1533 = vmul.f32 %v1311, %v1516
  %v1534 = vmul.f32 %v1313, %v1517
  %v1535 = vmul.f32 %v1315, %v1517
  %v1536 = vmul.f32 %v1317, %v1518
  %v1537 = vmul.f32 %v1319, %v1518
  %v1538 = vmul.f32 %v1321, %v1519
  %v1539 = vmul.f32 %v1323, %v1519
  %v1540 = vmul.f32 %v1325, %v1520
  %v1541 = vmul.f32 %v1327, %v1520
  %v1542 = vmul.f32 %v1329, %v1521
  %v1543 = vmul.f32 %v1331, %v1521
  %v1544 = vmul.f32 %v1333, %v1522
  %v1545 = vmul.f32 %v1335, %v1522
  %v1546 = vmul.f32 %v1337, %v1523
  %v1547 = vmul.f32 %v1339, %v1523
  %v1548 = vmul.f32 %v1341, %v1524
  %v1549 = vmul.f32 %v1343, %v1524
  %v1550 = vmul.f32 %v1345, %v1525
  %v1551 = vmul.f32 %v1347, %v1525
  %v1552 = vmul.f32 %v1349, %v1526
  %v1553 = vmul.f32 %v1351, %v1526
  %v1554 = vmul.f32 %v1353, %v1527
  %v1555 = vmul.f32 %v1355, %v1527
  %v1556 = vmul.f32 %v1357, %v1528
  %v1557 = vmul.f32 %v1359, %v1528
  %v1558 = vmul.f32 %v1361, %v1529
  %v1559 = vmul.f32 %v1363, %v1529
  %v1560 = vmul.f32 %v1365, %v1530
  %v1561 = vmul.f32 %v1367, %v1530
  %v1562 = vmul.f32 %v1369, %v1531
  %v1563 = vmul.f32 %v1371, %v1531
  %v1564 = vmul.f32 %v1532, %v273
  %v1565 = vmul.f32 %v1533, %v276
  %v1566 = vmul.f32 %v1534, %v273
  %v1567 = vmul.f32 %v1535, %v276
  %v1568 = vmul.f32 %v1536, %v273
  %v1569 = vmul.f32 %v1537, %v276
  %v1570 = vmul.f32 %v1538, %v273
  %v1571 = vmul.f32 %v1539, %v276
  %v1572 = vmul.f32 %v1540, %v273
  %v1573 = vmul.f32 %v1541, %v276
  %v1574 = vmul.f32 %v1542, %v273
  %v1575 = vmul.f32 %v1543, %v276
  %v1576 = vmul.f32 %v1544, %v273
  %v1577 = vmul.f32 %v1545, %v276
  %v1578 = vmul.f32 %v1546, %v273
  %v1579 = vmul.f32 %v1547, %v276
  %v1580 = vmul.f32 %v1548, %v273
  %v1581 = vmul.f32 %v1549, %v276
  %v1582 = vmul.f32 %v1550, %v273
  %v1583 = vmul.f32 %v1551, %v276
  %v1584 = vmul.f32 %v1552, %v273
  %v1585 = vmul.f32 %v1553, %v276
  %v1586 = vmul.f32 %v1554, %v273
  %v1587 = vmul.f32 %v1555, %v276
  %v1588 = vmul.f32 %v1556, %v273
  %v1589 = vmul.f32 %v1557, %v276
  %v1590 = vmul.f32 %v1558, %v273
  %v1591 = vmul.f32 %v1559, %v276
  %v1592 = vmul.f32 %v1560, %v273
  %v1593 = vmul.f32 %v1561, %v276
  %v1594 = vmul.f32 %v1562, %v273
  %v1595 = vmul.f32 %v1563, %v276
  %v1596 = vsel %vm726, %v1564, 0.0
  %v1597 = vsel %vm726, %v1565, 0.0
  %v1598 = vadd.f32 %v1596, %v1597
  %v1599 = vrot.slane %v1598, 4
  %v1600 = vadd.f32 %v1598, %v1599
  %v1601 = vrot.slane %v1600, 2
  %v1602 = vadd.f32 %v1600, %v1601
  %v1603 = vrot.slane %v1602, 1
  %v1604 = vadd.f32 %v1602, %v1603
  %v1605 = vsel %vm726, %v1566, 0.0
  %v1606 = vsel %vm726, %v1567, 0.0
  %v1607 = vadd.f32 %v1605, %v1606
  %v1608 = vrot.slane %v1607, 4
  %v1609 = vadd.f32 %v1607, %v1608
  %v1610 = vrot.slane %v1609, 2
  %v1611 = vadd.f32 %v1609, %v1610
  %v1612 = vrot.slane %v1611, 1
  %v1613 = vadd.f32 %v1611, %v1612
  %v1614 = vsel %vm726, %v1568, 0.0
  %v1615 = vsel %vm726, %v1569, 0.0
  %v1616 = vadd.f32 %v1614, %v1615
  %v1617 = vrot.slane %v1616, 4
  %v1618 = vadd.f32 %v1616, %v1617
  %v1619 = vrot.slane %v1618, 2
  %v1620 = vadd.f32 %v1618, %v1619
  %v1621 = vrot.slane %v1620, 1
  %v1622 = vadd.f32 %v1620, %v1621
  %v1623 = vsel %vm726, %v1570, 0.0
  %v1624 = vsel %vm726, %v1571, 0.0
  %v1625 = vadd.f32 %v1623, %v1624
  %v1626 = vrot.slane %v1625, 4
  %v1627 = vadd.f32 %v1625, %v1626
  %v1628 = vrot.slane %v1627, 2
  %v1629 = vadd.f32 %v1627, %v1628
  %v1630 = vrot.slane %v1629, 1
  %v1631 = vadd.f32 %v1629, %v1630
  %v1632 = vsel %vm726, %v1572, 0.0
  %v1633 = vsel %vm726, %v1573, 0.0
  %v1634 = vadd.f32 %v1632, %v1633
  %v1635 = vrot.slane %v1634, 4
  %v1636 = vadd.f32 %v1634, %v1635
  %v1637 = vrot.slane %v1636, 2
  %v1638 = vadd.f32 %v1636, %v1637
  %v1639 = vrot.slane %v1638, 1
  %v1640 = vadd.f32 %v1638, %v1639
  %v1641 = vsel %vm726, %v1574, 0.0
  %v1642 = vsel %vm726, %v1575, 0.0
  %v1643 = vadd.f32 %v1641, %v1642
  %v1644 = vrot.slane %v1643, 4
  %v1645 = vadd.f32 %v1643, %v1644
  %v1646 = vrot.slane %v1645, 2
  %v1647 = vadd.f32 %v1645, %v1646
  %v1648 = vrot.slane %v1647, 1
  %v1649 = vadd.f32 %v1647, %v1648
  %v1650 = vsel %vm726, %v1576, 0.0
  %v1651 = vsel %vm726, %v1577, 0.0
  %v1652 = vadd.f32 %v1650, %v1651
  %v1653 = vrot.slane %v1652, 4
  %v1654 = vadd.f32 %v1652, %v1653
  %v1655 = vrot.slane %v1654, 2
  %v1656 = vadd.f32 %v1654, %v1655
  %v1657 = vrot.slane %v1656, 1
  %v1658 = vadd.f32 %v1656, %v1657
  %v1659 = vsel %vm726, %v1578, 0.0
  %v1660 = vsel %vm726, %v1579, 0.0
  %v1661 = vadd.f32 %v1659, %v1660
  %v1662 = vrot.slane %v1661, 4
  %v1663 = vadd.f32 %v1661, %v1662
  %v1664 = vrot.slane %v1663, 2
  %v1665 = vadd.f32 %v1663, %v1664
  %v1666 = vrot.slane %v1665, 1
  %v1667 = vadd.f32 %v1665, %v1666
  %v1668 = vsel %vm726, %v1580, 0.0
  %v1669 = vsel %vm726, %v1581, 0.0
  %v1670 = vadd.f32 %v1668, %v1669
  %v1671 = vrot.slane %v1670, 4
  %v1672 = vadd.f32 %v1670, %v1671
  %v1673 = vrot.slane %v1672, 2
  %v1674 = vadd.f32 %v1672, %v1673
  %v1675 = vrot.slane %v1674, 1
  %v1676 = vadd.f32 %v1674, %v1675
  %v1677 = vsel %vm726, %v1582, 0.0
  %v1678 = vsel %vm726, %v1583, 0.0
  %v1679 = vadd.f32 %v1677, %v1678
  %v1680 = vrot.slane %v1679, 4
  %v1681 = vadd.f32 %v1679, %v1680
  %v1682 = vrot.slane %v1681, 2
  %v1683 = vadd.f32 %v1681, %v1682
  %v1684 = vrot.slane %v1683, 1
  %v1685 = vadd.f32 %v1683, %v1684
  %v1686 = vsel %vm726, %v1584, 0.0
  %v1687 = vsel %vm726, %v1585, 0.0
  %v1688 = vadd.f32 %v1686, %v1687
  %v1689 = vrot.slane %v1688, 4
  %v1690 = vadd.f32 %v1688, %v1689
  %v1691 = vrot.slane %v1690, 2
  %v1692 = vadd.f32 %v1690, %v1691
  %v1693 = vrot.slane %v1692, 1
  %v1694 = vadd.f32 %v1692, %v1693
  %v1695 = vsel %vm726, %v1586, 0.0
  %v1696 = vsel %vm726, %v1587, 0.0
  %v1697 = vadd.f32 %v1695, %v1696
  %v1698 = vrot.slane %v1697, 4
  %v1699 = vadd.f32 %v1697, %v1698
  %v1700 = vrot.slane %v1699, 2
  %v1701 = vadd.f32 %v1699, %v1700
  %v1702 = vrot.slane %v1701, 1
  %v1703 = vadd.f32 %v1701, %v1702
  %v1704 = vsel %vm726, %v1588, 0.0
  %v1705 = vsel %vm726, %v1589, 0.0
  %v1706 = vadd.f32 %v1704, %v1705
  %v1707 = vrot.slane %v1706, 4
  %v1708 = vadd.f32 %v1706, %v1707
  %v1709 = vrot.slane %v1708, 2
  %v1710 = vadd.f32 %v1708, %v1709
  %v1711 = vrot.slane %v1710, 1
  %v1712 = vadd.f32 %v1710, %v1711
  %v1713 = vsel %vm726, %v1590, 0.0
  %v1714 = vsel %vm726, %v1591, 0.0
  %v1715 = vadd.f32 %v1713, %v1714
  %v1716 = vrot.slane %v1715, 4
  %v1717 = vadd.f32 %v1715, %v1716
  %v1718 = vrot.slane %v1717, 2
  %v1719 = vadd.f32 %v1717, %v1718
  %v1720 = vrot.slane %v1719, 1
  %v1721 = vadd.f32 %v1719, %v1720
  %v1722 = vsel %vm726, %v1592, 0.0
  %v1723 = vsel %vm726, %v1593, 0.0
  %v1724 = vadd.f32 %v1722, %v1723
  %v1725 = vrot.slane %v1724, 4
  %v1726 = vadd.f32 %v1724, %v1725
  %v1727 = vrot.slane %v1726, 2
  %v1728 = vadd.f32 %v1726, %v1727
  %v1729 = vrot.slane %v1728, 1
  %v1730 = vadd.f32 %v1728, %v1729
  %v1731 = vsel %vm726, %v1594, 0.0
  %v1732 = vsel %vm726, %v1595, 0.0
  %v1733 = vadd.f32 %v1731, %v1732
  %v1734 = vrot.slane %v1733, 4
  %v1735 = vadd.f32 %v1733, %v1734
  %v1736 = vrot.slane %v1735, 2
  %v1737 = vadd.f32 %v1735, %v1736
  %v1738 = vrot.slane %v1737, 1
  %v1739 = vadd.f32 %v1737, %v1738
  %v1741 = vperm.slane %v244, 0
  %v1743 = vadd.f32 %v1604, %v1741
  %v1744 = vadd.f32 %v1613, %v1741
  %v1745 = vadd.f32 %v1622, %v1741
  %v1746 = vadd.f32 %v1631, %v1741
  %v1747 = vadd.f32 %v1640, %v1741
  %v1748 = vadd.f32 %v1649, %v1741
  %v1749 = vadd.f32 %v1658, %v1741
  %v1750 = vadd.f32 %v1667, %v1741
  %v1751 = vadd.f32 %v1676, %v1741
  %v1752 = vadd.f32 %v1685, %v1741
  %v1753 = vadd.f32 %v1694, %v1741
  %v1754 = vadd.f32 %v1703, %v1741
  %v1755 = vadd.f32 %v1712, %v1741
  %v1756 = vadd.f32 %v1721, %v1741
  %v1757 = vadd.f32 %v1730, %v1741
  %v1758 = vadd.f32 %v1739, %v1741
  %v1759 = vld [vmem:[%s25] sm:$0xff]
  %v1760 = vld [vmem:[%s25 + $0x8] sm:$0x1]
  %v1761 = vld [vmem:[%s27] sm:$0x1]
  %v1762 = vld [vmem:[%s29] sm:$0xff]
  %v1763 = vld [vmem:[%s29 + $0x8] sm:$0x1]
  %v1764 = vld [vmem:[%s31] sm:$0x1]
  %v1765 = vld [vmem:[%s33] sm:$0xf]
  %v1766 = vld [vmem:[%s35] sm:$0xff]
  %v1767 = vld [vmem:[%s35 + $0x8] sm:$0x7f]
  %v1768 = vld [vmem:[%s37] sm:$0x1]
  %v1770 = vperm.slane %v1761, 0
  %v1788 = vrot.slane %v1744, 7
  %vm1789 = vcmask 1041409
  %v1790 = vsel %vm1789, %v1788, %v1743
  %v1791 = vrot.slane %v1745, 6
  %vm1792 = vcmask 1042434
  %v1793 = vsel %vm1792, %v1791, %v1790
  %v1794 = vrot.slane %v1746, 5
  %vm1795 = vcmask 1043459
  %v1796 = vsel %vm1795, %v1794, %v1793
  %v1797 = vrot.slane %v1747, 4
  %vm1798 = vcmask 1044484
  %v1799 = vsel %vm1798, %v1797, %v1796
  %v1800 = vrot.slane %v1748, 3
  %vm1801 = vcmask 1045509
  %v1802 = vsel %vm1801, %v1800, %v1799
  %v1803 = vrot.slane %v1749, 2
  %vm1804 = vcmask 1046534
  %v1805 = vsel %vm1804, %v1803, %v1802
  %v1806 = vrot.slane %v1750, 1
  %vm1807 = vcmask 1047559
  %v1808 = vsel %vm1807, %v1806, %v1805
  %v1809 = vrot.slane %v1752, 7
  %v1810 = vsel %vm1789, %v1809, %v1751
  %v1811 = vrot.slane %v1753, 6
  %v1812 = vsel %vm1792, %v1811, %v1810
  %v1813 = vrot.slane %v1754, 5
  %v1814 = vsel %vm1795, %v1813, %v1812
  %v1815 = vrot.slane %v1755, 4
  %v1816 = vsel %vm1798, %v1815, %v1814
  %v1817 = vrot.slane %v1756, 3
  %v1818 = vsel %vm1801, %v1817, %v1816
  %v1819 = vrot.slane %v1757, 2
  %v1820 = vsel %vm1804, %v1819, %v1818
  %v1821 = vrot.slane %v1758, 1
  %v1822 = vsel %vm1807, %v1821, %v1820
  %v1823 = vsel %vm726, %v1808, 0
  %v1825 = vsel %vm726, %v1822, 0
  %v1828 = vsel %vm823, %v1760, 0
  %1830 = vmatpush.msra.mxu0 0.0
  %1831 = vmatpush.msra.mxu0 0.0
  %1832 = vmatpush.msra.mxu0 0.0
  %1833 = vmatpush.msra.mxu0 0.0
  %1834 = vmatpush.msra.mxu0 0.0
  %1835 = vmatpush.msra.mxu0 0.0
  %1836 = vmatpush.msra.mxu0 0.0
  %1837 = vmatpush.msra.mxu0 0.0
  %1838 = vmatpush.msra.mxu0 0.0
  %1839 = vmatpush.msra.mxu0 0.0
  %1840 = vmatpush.msra.mxu0 0.0
  %1841 = vmatpush.msra.mxu0 0.0
  %1842 = vmatpush.msra.mxu0 0.0
  %1843 = vmatpush.msra.mxu0 0.0
  %1844 = vmatpush.msra.mxu0 %v1828
  %1845 = vmatpush.msra.mxu0 %v1759
  %1846 = vmatmul.f32.gmra.mxu0 %v1823
  %v1847 = vpop.f32.mrf.mxu0
  %v1848 = vadd.f32 %v1770, %v1847
  %1849 = vmatmul.f32.gmra.mxu0 %v1825
  %v1850 = vpop.f32.mrf.mxu0
  %v1851 = vadd.f32 %v1770, %v1850
  %1852 = vdwg.mxu0
  %v1854 = vperm.slane %v1764, 0
  %v1857 = vsel %vm823, %v1763, 0
  %1859 = vmatpush.msra.mxu0 0.0
  %1860 = vmatpush.msra.mxu0 0.0
  %1861 = vmatpush.msra.mxu0 0.0
  %1862 = vmatpush.msra.mxu0 0.0
  %1863 = vmatpush.msra.mxu0 0.0
  %1864 = vmatpush.msra.mxu0 0.0
  %1865 = vmatpush.msra.mxu0 0.0
  %1866 = vmatpush.msra.mxu0 0.0
  %1867 = vmatpush.msra.mxu0 0.0
  %1868 = vmatpush.msra.mxu0 0.0
  %1869 = vmatpush.msra.mxu0 0.0
  %1870 = vmatpush.msra.mxu0 0.0
  %1871 = vmatpush.msra.mxu0 0.0
  %1872 = vmatpush.msra.mxu0 0.0
  %1873 = vmatpush.msra.mxu0 %v1857
  %1874 = vmatpush.msra.mxu0 %v1762
  %1875 = vmatmul.f32.gmra.mxu0 %v1823
  %v1876 = vpop.f32.mrf.mxu0
  %v1877 = vadd.f32 %v1854, %v1876
  %1878 = vmatmul.f32.gmra.mxu0 %v1825
  %v1879 = vpop.f32.mrf.mxu0
  %v1880 = vadd.f32 %v1854, %v1879
  %1881 = vdwg.mxu0
  %v1883 = vsel %vm401, %v1765, 0
  %1885 = vmatpush.msra.mxu0 0.0
  %1886 = vmatpush.msra.mxu0 0.0
  %1887 = vmatpush.msra.mxu0 0.0
  %1888 = vmatpush.msra.mxu0 0.0
  %1889 = vmatpush.msra.mxu0 0.0
  %1890 = vmatpush.msra.mxu0 0.0
  %1891 = vmatpush.msra.mxu0 0.0
  %1892 = vmatpush.msra.mxu0 0.0
  %1893 = vmatpush.msra.mxu0 0.0
  %1894 = vmatpush.msra.mxu0 0.0
  %1895 = vmatpush.msra.mxu0 0.0
  %1896 = vmatpush.msra.mxu0 0.0
  %1897 = vmatpush.msra.mxu0 0.0
  %1898 = vmatpush.msra.mxu0 0.0
  %1899 = vmatpush.msra.mxu0 0.0
  %1900 = vmatpush.msra.mxu0 %v1883
  %1901 = vmatmul.f32.gmra.mxu0 %v306
  %v1902 = vpop.f32.mrf.mxu0
  %v1903 = vadd.f32 0.0, %v1902
  %1904 = vmatmul.f32.gmra.mxu0 %v309
  %v1905 = vpop.f32.mrf.mxu0
  %v1906 = vadd.f32 0.0, %v1905
  %1907 = vmatmul.f32.gmra.mxu0 %v312
  %v1908 = vpop.f32.mrf.mxu0
  %v1909 = vadd.f32 0.0, %v1908
  %1910 = vmatmul.f32.gmra.mxu0 %v315
  %v1911 = vpop.f32.mrf.mxu0
  %v1912 = vadd.f32 0.0, %v1911
  %1913 = vmatmul.f32.gmra.mxu0 %v318
  %v1914 = vpop.f32.mrf.mxu0
  %v1915 = vadd.f32 0.0, %v1914
  %1916 = vmatmul.f32.gmra.mxu0 %v321
  %v1917 = vpop.f32.mrf.mxu0
  %v1918 = vadd.f32 0.0, %v1917
  %1919 = vmatmul.f32.gmra.mxu0 %v324
  %v1920 = vpop.f32.mrf.mxu0
  %v1921 = vadd.f32 0.0, %v1920
  %1922 = vmatmul.f32.gmra.mxu0 %v327
  %v1923 = vpop.f32.mrf.mxu0
  %v1924 = vadd.f32 0.0, %v1923
  %1925 = vmatmul.f32.gmra.mxu0 %v330
  %v1926 = vpop.f32.mrf.mxu0
  %v1927 = vadd.f32 0.0, %v1926
  %1928 = vmatmul.f32.gmra.mxu0 %v333
  %v1929 = vpop.f32.mrf.mxu0
  %v1930 = vadd.f32 0.0, %v1929
  %1931 = vmatmul.f32.gmra.mxu0 %v336
  %v1932 = vpop.f32.mrf.mxu0
  %v1933 = vadd.f32 0.0, %v1932
  %1934 = vmatmul.f32.gmra.mxu0 %v339
  %v1935 = vpop.f32.mrf.mxu0
  %v1936 = vadd.f32 0.0, %v1935
  %1937 = vmatmul.f32.gmra.mxu0 %v342
  %v1938 = vpop.f32.mrf.mxu0
  %v1939 = vadd.f32 0.0, %v1938
  %1940 = vmatmul.f32.gmra.mxu0 %v345
  %v1941 = vpop.f32.mrf.mxu0
  %v1942 = vadd.f32 0.0, %v1941
  %1943 = vmatmul.f32.gmra.mxu0 %v348
  %v1944 = vpop.f32.mrf.mxu0
  %v1945 = vadd.f32 0.0, %v1944
  %1946 = vmatmul.f32.gmra.mxu0 %v351
  %v1947 = vpop.f32.mrf.mxu0
  %v1948 = vadd.f32 0.0, %v1947
  %1949 = vmatmul.f32.gmra.mxu0 %v354
  %v1950 = vpop.f32.mrf.mxu0
  %v1951 = vadd.f32 0.0, %v1950
  %1952 = vmatmul.f32.gmra.mxu0 %v357
  %v1953 = vpop.f32.mrf.mxu0
  %v1954 = vadd.f32 0.0, %v1953
  %1955 = vmatmul.f32.gmra.mxu0 %v360
  %v1956 = vpop.f32.mrf.mxu0
  %v1957 = vadd.f32 0.0, %v1956
  %1958 = vmatmul.f32.gmra.mxu0 %v363
  %v1959 = vpop.f32.mrf.mxu0
  %v1960 = vadd.f32 0.0, %v1959
  %1961 = vmatmul.f32.gmra.mxu0 %v366
  %v1962 = vpop.f32.mrf.mxu0
  %v1963 = vadd.f32 0.0, %v1962
  %1964 = vmatmul.f32.gmra.mxu0 %v369
  %v1965 = vpop.f32.mrf.mxu0
  %v1966 = vadd.f32 0.0, %v1965
  %1967 = vmatmul.f32.gmra.mxu0 %v372
  %v1968 = vpop.f32.mrf.mxu0
  %v1969 = vadd.f32 0.0, %v1968
  %1970 = vmatmul.f32.gmra.mxu0 %v375
  %v1971 = vpop.f32.mrf.mxu0
  %v1972 = vadd.f32 0.0, %v1971
  %1973 = vmatmul.f32.gmra.mxu0 %v378
  %v1974 = vpop.f32.mrf.mxu0
  %v1975 = vadd.f32 0.0, %v1974
  %1976 = vmatmul.f32.gmra.mxu0 %v381
  %v1977 = vpop.f32.mrf.mxu0
  %v1978 = vadd.f32 0.0, %v1977
  %1979 = vmatmul.f32.gmra.mxu0 %v384
  %v1980 = vpop.f32.mrf.mxu0
  %v1981 = vadd.f32 0.0, %v1980
  %1982 = vmatmul.f32.gmra.mxu0 %v387
  %v1983 = vpop.f32.mrf.mxu0
  %v1984 = vadd.f32 0.0, %v1983
  %1985 = vmatmul.f32.gmra.mxu0 %v390
  %v1986 = vpop.f32.mrf.mxu0
  %v1987 = vadd.f32 0.0, %v1986
  %1988 = vmatmul.f32.gmra.mxu0 %v393
  %v1989 = vpop.f32.mrf.mxu0
  %v1990 = vadd.f32 0.0, %v1989
  %1991 = vmatmul.f32.gmra.mxu0 %v396
  %v1992 = vpop.f32.mrf.mxu0
  %v1993 = vadd.f32 0.0, %v1992
  %1994 = vmatmul.f32.gmra.mxu0 %v399
  %v1995 = vpop.f32.mrf.mxu0
  %v1996 = vadd.f32 0.0, %v1995
  %1997 = vdwg.mxu0
  %v2000 = vrot.slane %v1877, 1
  %v2001 = vrot.slane %v1877, 2
  %v2002 = vrot.slane %v1877, 3
  %v2003 = vrot.slane %v1877, 4
  %v2004 = vrot.slane %v1877, 5
  %v2005 = vrot.slane %v1877, 6
  %v2006 = vrot.slane %v1877, 7
  %v2007 = vrot.slane %v1880, 1
  %v2008 = vrot.slane %v1880, 2
  %v2009 = vrot.slane %v1880, 3
  %v2010 = vrot.slane %v1880, 4
  %v2011 = vrot.slane %v1880, 5
  %v2012 = vrot.slane %v1880, 6
  %v2013 = vrot.slane %v1880, 7
  %v2014 = vperm.slane %v1877, 0
  %v2015 = vperm.slane %v2000, 0
  %v2016 = vperm.slane %v2001, 0
  %v2017 = vperm.slane %v2002, 0
  %v2018 = vperm.slane %v2003, 0
  %v2019 = vperm.slane %v2004, 0
  %v2020 = vperm.slane %v2005, 0
  %v2021 = vperm.slane %v2006, 0
  %v2022 = vperm.slane %v1880, 0
  %v2023 = vperm.slane %v2007, 0
  %v2024 = vperm.slane %v2008, 0
  %v2025 = vperm.slane %v2009, 0
  %v2026 = vperm.slane %v2010, 0
  %v2027 = vperm.slane %v2011, 0
  %v2028 = vperm.slane %v2012, 0
  %v2029 = vperm.slane %v2013, 0
  %v2046 = vadd.f32 %v2014, %v1848
  %v2047 = vadd.f32 %v2014, %v1851
  %v2048 = vadd.f32 %v2015, %v1848
  %v2049 = vadd.f32 %v2015, %v1851
  %v2050 = vadd.f32 %v2016, %v1848
  %v2051 = vadd.f32 %v2016, %v1851
  %v2052 = vadd.f32 %v2017, %v1848
  %v2053 = vadd.f32 %v2017, %v1851
  %v2054 = vadd.f32 %v2018, %v1848
  %v2055 = vadd.f32 %v2018, %v1851
  %v2056 = vadd.f32 %v2019, %v1848
  %v2057 = vadd.f32 %v2019, %v1851
  %v2058 = vadd.f32 %v2020, %v1848
  %v2059 = vadd.f32 %v2020, %v1851
  %v2060 = vadd.f32 %v2021, %v1848
  %v2061 = vadd.f32 %v2021, %v1851
  %v2062 = vadd.f32 %v2022, %v1848
  %v2063 = vadd.f32 %v2022, %v1851
  %v2064 = vadd.f32 %v2023, %v1848
  %v2065 = vadd.f32 %v2023, %v1851
  %v2066 = vadd.f32 %v2024, %v1848
  %v2067 = vadd.f32 %v2024, %v1851
  %v2068 = vadd.f32 %v2025, %v1848
  %v2069 = vadd.f32 %v2025, %v1851
  %v2070 = vadd.f32 %v2026, %v1848
  %v2071 = vadd.f32 %v2026, %v1851
  %v2072 = vadd.f32 %v2027, %v1848
  %v2073 = vadd.f32 %v2027, %v1851
  %v2074 = vadd.f32 %v2028, %v1848
  %v2075 = vadd.f32 %v2028, %v1851
  %v2076 = vadd.f32 %v2029, %v1848
  %v2077 = vadd.f32 %v2029, %v1851
  %v2078 = vadd.f32 %v2046, %v1903
  %v2079 = vadd.f32 %v2047, %v1906
  %v2080 = vadd.f32 %v2048, %v1909
  %v2081 = vadd.f32 %v2049, %v1912
  %v2082 = vadd.f32 %v2050, %v1915
  %v2083 = vadd.f32 %v2051, %v1918
  %v2084 = vadd.f32 %v2052, %v1921
  %v2085 = vadd.f32 %v2053, %v1924
  %v2086 = vadd.f32 %v2054, %v1927
  %v2087 = vadd.f32 %v2055, %v1930
  %v2088 = vadd.f32 %v2056, %v1933
  %v2089 = vadd.f32 %v2057, %v1936
  %v2090 = vadd.f32 %v2058, %v1939
  %v2091 = vadd.f32 %v2059, %v1942
  %v2092 = vadd.f32 %v2060, %v1945
  %v2093 = vadd.f32 %v2061, %v1948
  %v2094 = vadd.f32 %v2062, %v1951
  %v2095 = vadd.f32 %v2063, %v1954
  %v2096 = vadd.f32 %v2064, %v1957
  %v2097 = vadd.f32 %v2065, %v1960
  %v2098 = vadd.f32 %v2066, %v1963
  %v2099 = vadd.f32 %v2067, %v1966
  %v2100 = vadd.f32 %v2068, %v1969
  %v2101 = vadd.f32 %v2069, %v1972
  %v2102 = vadd.f32 %v2070, %v1975
  %v2103 = vadd.f32 %v2071, %v1978
  %v2104 = vadd.f32 %v2072, %v1981
  %v2105 = vadd.f32 %v2073, %v1984
  %v2106 = vadd.f32 %v2074, %v1987
  %v2107 = vadd.f32 %v2075, %v1990
  %v2108 = vadd.f32 %v2076, %v1993
  %v2109 = vadd.f32 %v2077, %v1996
  %vm2110 = vcmp.gt.f32.partialorder %v2078, 0.0
  %vm2111 = vcmp.gt.f32.partialorder %v2079, 0.0
  %vm2112 = vcmp.gt.f32.partialorder %v2080, 0.0
  %vm2113 = vcmp.gt.f32.partialorder %v2081, 0.0
  %vm2114 = vcmp.gt.f32.partialorder %v2082, 0.0
  %vm2115 = vcmp.gt.f32.partialorder %v2083, 0.0
  %vm2116 = vcmp.gt.f32.partialorder %v2084, 0.0
  %vm2117 = vcmp.gt.f32.partialorder %v2085, 0.0
  %vm2118 = vcmp.gt.f32.partialorder %v2086, 0.0
  %vm2119 = vcmp.gt.f32.partialorder %v2087, 0.0
  %vm2120 = vcmp.gt.f32.partialorder %v2088, 0.0
  %vm2121 = vcmp.gt.f32.partialorder %v2089, 0.0
  %vm2122 = vcmp.gt.f32.partialorder %v2090, 0.0
  %vm2123 = vcmp.gt.f32.partialorder %v2091, 0.0
  %vm2124 = vcmp.gt.f32.partialorder %v2092, 0.0
  %vm2125 = vcmp.gt.f32.partialorder %v2093, 0.0
  %vm2126 = vcmp.gt.f32.partialorder %v2094, 0.0
  %vm2127 = vcmp.gt.f32.partialorder %v2095, 0.0
  %vm2128 = vcmp.gt.f32.partialorder %v2096, 0.0
  %vm2129 = vcmp.gt.f32.partialorder %v2097, 0.0
  %vm2130 = vcmp.gt.f32.partialorder %v2098, 0.0
  %vm2131 = vcmp.gt.f32.partialorder %v2099, 0.0
  %vm2132 = vcmp.gt.f32.partialorder %v2100, 0.0
  %vm2133 = vcmp.gt.f32.partialorder %v2101, 0.0
  %vm2134 = vcmp.gt.f32.partialorder %v2102, 0.0
  %vm2135 = vcmp.gt.f32.partialorder %v2103, 0.0
  %vm2136 = vcmp.gt.f32.partialorder %v2104, 0.0
  %vm2137 = vcmp.gt.f32.partialorder %v2105, 0.0
  %vm2138 = vcmp.gt.f32.partialorder %v2106, 0.0
  %vm2139 = vcmp.gt.f32.partialorder %v2107, 0.0
  %vm2140 = vcmp.gt.f32.partialorder %v2108, 0.0
  %vm2141 = vcmp.gt.f32.partialorder %v2109, 0.0
  %v2142 = vmul.f32 %v2078, 0.2
  %v2143 = vmul.f32 %v2079, 0.2
  %v2144 = vmul.f32 %v2080, 0.2
  %v2145 = vmul.f32 %v2081, 0.2
  %v2146 = vmul.f32 %v2082, 0.2
  %v2147 = vmul.f32 %v2083, 0.2
  %v2148 = vmul.f32 %v2084, 0.2
  %v2149 = vmul.f32 %v2085, 0.2
  %v2150 = vmul.f32 %v2086, 0.2
  %v2151 = vmul.f32 %v2087, 0.2
  %v2152 = vmul.f32 %v2088, 0.2
  %v2153 = vmul.f32 %v2089, 0.2
  %v2154 = vmul.f32 %v2090, 0.2
  %v2155 = vmul.f32 %v2091, 0.2
  %v2156 = vmul.f32 %v2092, 0.2
  %v2157 = vmul.f32 %v2093, 0.2
  %v2158 = vmul.f32 %v2094, 0.2
  %v2159 = vmul.f32 %v2095, 0.2
  %v2160 = vmul.f32 %v2096, 0.2
  %v2161 = vmul.f32 %v2097, 0.2
  %v2162 = vmul.f32 %v2098, 0.2
  %v2163 = vmul.f32 %v2099, 0.2
  %v2164 = vmul.f32 %v2100, 0.2
  %v2165 = vmul.f32 %v2101, 0.2
  %v2166 = vmul.f32 %v2102, 0.2
  %v2167 = vmul.f32 %v2103, 0.2
  %v2168 = vmul.f32 %v2104, 0.2
  %v2169 = vmul.f32 %v2105, 0.2
  %v2170 = vmul.f32 %v2106, 0.2
  %v2171 = vmul.f32 %v2107, 0.2
  %v2172 = vmul.f32 %v2108, 0.2
  %v2173 = vmul.f32 %v2109, 0.2
  %v2174 = vsel %vm2110, %v2078, %v2142
  %v2175 = vsel %vm2111, %v2079, %v2143
  %v2176 = vsel %vm2112, %v2080, %v2144
  %v2177 = vsel %vm2113, %v2081, %v2145
  %v2178 = vsel %vm2114, %v2082, %v2146
  %v2179 = vsel %vm2115, %v2083, %v2147
  %v2180 = vsel %vm2116, %v2084, %v2148
  %v2181 = vsel %vm2117, %v2085, %v2149
  %v2182 = vsel %vm2118, %v2086, %v2150
  %v2183 = vsel %vm2119, %v2087, %v2151
  %v2184 = vsel %vm2120, %v2088, %v2152
  %v2185 = vsel %vm2121, %v2089, %v2153
  %v2186 = vsel %vm2122, %v2090, %v2154
  %v2187 = vsel %vm2123, %v2091, %v2155
  %v2188 = vsel %vm2124, %v2092, %v2156
  %v2189 = vsel %vm2125, %v2093, %v2157
  %v2190 = vsel %vm2126, %v2094, %v2158
  %v2191 = vsel %vm2127, %v2095, %v2159
  %v2192 = vsel %vm2128, %v2096, %v2160
  %v2193 = vsel %vm2129, %v2097, %v2161
  %v2194 = vsel %vm2130, %v2098, %v2162
  %v2195 = vsel %vm2131, %v2099, %v2163
  %v2196 = vsel %vm2132, %v2100, %v2164
  %v2197 = vsel %vm2133, %v2101, %v2165
  %v2198 = vsel %vm2134, %v2102, %v2166
  %v2199 = vsel %vm2135, %v2103, %v2167
  %v2200 = vsel %vm2136, %v2104, %v2168
  %v2201 = vsel %vm2137, %v2105, %v2169
  %v2202 = vsel %vm2138, %v2106, %v2170
  %v2203 = vsel %vm2139, %v2107, %v2171
  %v2204 = vsel %vm2140, %v2108, %v2172
  %v2205 = vsel %vm2141, %v2109, %v2173
  %vm2206 = vcmask 121856
  %v2208 = vsel %vm2206, %v2174, 0
  %v2211 = vsel %vm2206, %v2175, 0
  %v2214 = vsel %vm2206, %v2176, 0
  %v2217 = vsel %vm2206, %v2177, 0
  %v2220 = vsel %vm2206, %v2178, 0
  %v2223 = vsel %vm2206, %v2179, 0
  %v2226 = vsel %vm2206, %v2180, 0
  %v2229 = vsel %vm2206, %v2181, 0
  %v2232 = vsel %vm2206, %v2182, 0
  %v2235 = vsel %vm2206, %v2183, 0
  %v2238 = vsel %vm2206, %v2184, 0
  %v2241 = vsel %vm2206, %v2185, 0
  %v2244 = vsel %vm2206, %v2186, 0
  %v2247 = vsel %vm2206, %v2187, 0
  %v2250 = vsel %vm2206, %v2188, 0
  %v2253 = vsel %vm2206, %v2189, 0
  %v2256 = vsel %vm2206, %v2190, 0
  %v2259 = vsel %vm2206, %v2191, 0
  %v2262 = vsel %vm2206, %v2192, 0
  %v2265 = vsel %vm2206, %v2193, 0
  %v2268 = vsel %vm2206, %v2194, 0
  %v2271 = vsel %vm2206, %v2195, 0
  %v2274 = vsel %vm2206, %v2196, 0
  %v2277 = vsel %vm2206, %v2197, 0
  %v2280 = vsel %vm2206, %v2198, 0
  %v2283 = vsel %vm2206, %v2199, 0
  %v2286 = vsel %vm2206, %v2200, 0
  %v2289 = vsel %vm2206, %v2201, 0
  %v2292 = vsel %vm2206, %v2202, 0
  %v2295 = vsel %vm2206, %v2203, 0
  %v2298 = vsel %vm2206, %v2204, 0
  %v2301 = vsel %vm2206, %v2205, 0
  %vm2303 = vcmask 1046528
  %v2305 = vsel %vm2303, %v1767, 0
  %2307 = vmatpush.msra.mxu0 0.0
  %2308 = vmatpush.msra.mxu0 0.0
  %2309 = vmatpush.msra.mxu0 0.0
  %2310 = vmatpush.msra.mxu0 0.0
  %2311 = vmatpush.msra.mxu0 0.0
  %2312 = vmatpush.msra.mxu0 0.0
  %2313 = vmatpush.msra.mxu0 0.0
  %2314 = vmatpush.msra.mxu0 0.0
  %2315 = vmatpush.msra.mxu0 0.0
  %2316 = vmatpush.msra.mxu0 0.0
  %2317 = vmatpush.msra.mxu0 0.0
  %2318 = vmatpush.msra.mxu0 0.0
  %2319 = vmatpush.msra.mxu0 0.0
  %2320 = vmatpush.msra.mxu0 0.0
  %2321 = vmatpush.msra.mxu0 %v2305
  %2322 = vmatpush.msra.mxu0 %v1766
  %2323 = vmatmul.f32.gmra.mxu0 %v2208
  %v2324 = vpop.f32.mrf.mxu0
  %v2325 = vadd.f32 0.0, %v2324
  %2326 = vmatmul.f32.gmra.mxu0 %v2211
  %v2327 = vpop.f32.mrf.mxu0
  %v2328 = vadd.f32 0.0, %v2327
  %2329 = vmatmul.f32.gmra.mxu0 %v2214
  %v2330 = vpop.f32.mrf.mxu0
  %v2331 = vadd.f32 0.0, %v2330
  %2332 = vmatmul.f32.gmra.mxu0 %v2217
  %v2333 = vpop.f32.mrf.mxu0
  %v2334 = vadd.f32 0.0, %v2333
  %2335 = vmatmul.f32.gmra.mxu0 %v2220
  %v2336 = vpop.f32.mrf.mxu0
  %v2337 = vadd.f32 0.0, %v2336
  %2338 = vmatmul.f32.gmra.mxu0 %v2223
  %v2339 = vpop.f32.mrf.mxu0
  %v2340 = vadd.f32 0.0, %v2339
  %2341 = vmatmul.f32.gmra.mxu0 %v2226
  %v2342 = vpop.f32.mrf.mxu0
  %v2343 = vadd.f32 0.0, %v2342
  %2344 = vmatmul.f32.gmra.mxu0 %v2229
  %v2345 = vpop.f32.mrf.mxu0
  %v2346 = vadd.f32 0.0, %v2345
  %2347 = vmatmul.f32.gmra.mxu0 %v2232
  %v2348 = vpop.f32.mrf.mxu0
  %v2349 = vadd.f32 0.0, %v2348
  %2350 = vmatmul.f32.gmra.mxu0 %v2235
  %v2351 = vpop.f32.mrf.mxu0
  %v2352 = vadd.f32 0.0, %v2351
  %2353 = vmatmul.f32.gmra.mxu0 %v2238
  %v2354 = vpop.f32.mrf.mxu0
  %v2355 = vadd.f32 0.0, %v2354
  %2356 = vmatmul.f32.gmra.mxu0 %v2241
  %v2357 = vpop.f32.mrf.mxu0
  %v2358 = vadd.f32 0.0, %v2357
  %2359 = vmatmul.f32.gmra.mxu0 %v2244
  %v2360 = vpop.f32.mrf.mxu0
  %v2361 = vadd.f32 0.0, %v2360
  %2362 = vmatmul.f32.gmra.mxu0 %v2247
  %v2363 = vpop.f32.mrf.mxu0
  %v2364 = vadd.f32 0.0, %v2363
  %2365 = vmatmul.f32.gmra.mxu0 %v2250
  %v2366 = vpop.f32.mrf.mxu0
  %v2367 = vadd.f32 0.0, %v2366
  %2368 = vmatmul.f32.gmra.mxu0 %v2253
  %v2369 = vpop.f32.mrf.mxu0
  %v2370 = vadd.f32 0.0, %v2369
  %2371 = vmatmul.f32.gmra.mxu0 %v2256
  %v2372 = vpop.f32.mrf.mxu0
  %v2373 = vadd.f32 0.0, %v2372
  %2374 = vmatmul.f32.gmra.mxu0 %v2259
  %v2375 = vpop.f32.mrf.mxu0
  %v2376 = vadd.f32 0.0, %v2375
  %2377 = vmatmul.f32.gmra.mxu0 %v2262
  %v2378 = vpop.f32.mrf.mxu0
  %v2379 = vadd.f32 0.0, %v2378
  %2380 = vmatmul.f32.gmra.mxu0 %v2265
  %v2381 = vpop.f32.mrf.mxu0
  %v2382 = vadd.f32 0.0, %v2381
  %2383 = vmatmul.f32.gmra.mxu0 %v2268
  %v2384 = vpop.f32.mrf.mxu0
  %v2385 = vadd.f32 0.0, %v2384
  %2386 = vmatmul.f32.gmra.mxu0 %v2271
  %v2387 = vpop.f32.mrf.mxu0
  %v2388 = vadd.f32 0.0, %v2387
  %2389 = vmatmul.f32.gmra.mxu0 %v2274
  %v2390 = vpop.f32.mrf.mxu0
  %v2391 = vadd.f32 0.0, %v2390
  %2392 = vmatmul.f32.gmra.mxu0 %v2277
  %v2393 = vpop.f32.mrf.mxu0
  %v2394 = vadd.f32 0.0, %v2393
  %2395 = vmatmul.f32.gmra.mxu0 %v2280
  %v2396 = vpop.f32.mrf.mxu0
  %v2397 = vadd.f32 0.0, %v2396
  %2398 = vmatmul.f32.gmra.mxu0 %v2283
  %v2399 = vpop.f32.mrf.mxu0
  %v2400 = vadd.f32 0.0, %v2399
  %2401 = vmatmul.f32.gmra.mxu0 %v2286
  %v2402 = vpop.f32.mrf.mxu0
  %v2403 = vadd.f32 0.0, %v2402
  %2404 = vmatmul.f32.gmra.mxu0 %v2289
  %v2405 = vpop.f32.mrf.mxu0
  %v2406 = vadd.f32 0.0, %v2405
  %2407 = vmatmul.f32.gmra.mxu0 %v2292
  %v2408 = vpop.f32.mrf.mxu0
  %v2409 = vadd.f32 0.0, %v2408
  %2410 = vmatmul.f32.gmra.mxu0 %v2295
  %v2411 = vpop.f32.mrf.mxu0
  %v2412 = vadd.f32 0.0, %v2411
  %2413 = vmatmul.f32.gmra.mxu0 %v2298
  %v2414 = vpop.f32.mrf.mxu0
  %v2415 = vadd.f32 0.0, %v2414
  %2416 = vmatmul.f32.gmra.mxu0 %v2301
  %v2417 = vpop.f32.mrf.mxu0
  %v2418 = vadd.f32 0.0, %v2417
  %2419 = vdwg.mxu0
  %v2420 = vadd.f32 %v2325, %v943
  %v2421 = vadd.f32 %v2328, %v948
  %v2422 = vadd.f32 %v2331, %v953
  %v2423 = vadd.f32 %v2334, %v958
  %v2424 = vadd.f32 %v2337, %v963
  %v2425 = vadd.f32 %v2340, %v968
  %v2426 = vadd.f32 %v2343, %v973
  %v2427 = vadd.f32 %v2346, %v978
  %v2428 = vadd.f32 %v2349, %v983
  %v2429 = vadd.f32 %v2352, %v988
  %v2430 = vadd.f32 %v2355, %v993
  %v2431 = vadd.f32 %v2358, %v998
  %v2432 = vadd.f32 %v2361, %v1003
  %v2433 = vadd.f32 %v2364, %v1008
  %v2434 = vadd.f32 %v2367, %v1013
  %v2435 = vadd.f32 %v2370, %v1018
  %v2436 = vadd.f32 %v2373, %v1023
  %v2437 = vadd.f32 %v2376, %v1028
  %v2438 = vadd.f32 %v2379, %v1033
  %v2439 = vadd.f32 %v2382, %v1038
  %v2440 = vadd.f32 %v2385, %v1043
  %v2441 = vadd.f32 %v2388, %v1048
  %v2442 = vadd.f32 %v2391, %v1053
  %v2443 = vadd.f32 %v2394, %v1058
  %v2444 = vadd.f32 %v2397, %v1063
  %v2445 = vadd.f32 %v2400, %v1068
  %v2446 = vadd.f32 %v2403, %v1073
  %v2447 = vadd.f32 %v2406, %v1078
  %v2448 = vadd.f32 %v2409, %v1083
  %v2449 = vadd.f32 %v2412, %v1088
  %v2450 = vadd.f32 %v2415, %v1093
  %v2451 = vadd.f32 %v2418, %v1098
  %v2452 = vsel %vm2206, %v2420, -inf
  %v2453 = vsel %vm2206, %v2421, -inf
  %v2454 = vmax.f32 %v2452, %v2453
  %v2455 = vrot.slane %v2454, 4
  %v2456 = vmax.f32 %v2454, %v2455
  %v2457 = vrot.slane %v2456, 2
  %v2458 = vmax.f32 %v2456, %v2457
  %v2459 = vrot.slane %v2458, 1
  %v2460 = vmax.f32 %v2458, %v2459
  %v2461 = vsel %vm2206, %v2422, -inf
  %v2462 = vsel %vm2206, %v2423, -inf
  %v2463 = vmax.f32 %v2461, %v2462
  %v2464 = vrot.slane %v2463, 4
  %v2465 = vmax.f32 %v2463, %v2464
  %v2466 = vrot.slane %v2465, 2
  %v2467 = vmax.f32 %v2465, %v2466
  %v2468 = vrot.slane %v2467, 1
  %v2469 = vmax.f32 %v2467, %v2468
  %v2470 = vsel %vm2206, %v2424, -inf
  %v2471 = vsel %vm2206, %v2425, -inf
  %v2472 = vmax.f32 %v2470, %v2471
  %v2473 = vrot.slane %v2472, 4
  %v2474 = vmax.f32 %v2472, %v2473
  %v2475 = vrot.slane %v2474, 2
  %v2476 = vmax.f32 %v2474, %v2475
  %v2477 = vrot.slane %v2476, 1
  %v2478 = vmax.f32 %v2476, %v2477
  %v2479 = vsel %vm2206, %v2426, -inf
  %v2480 = vsel %vm2206, %v2427, -inf
  %v2481 = vmax.f32 %v2479, %v2480
  %v2482 = vrot.slane %v2481, 4
  %v2483 = vmax.f32 %v2481, %v2482
  %v2484 = vrot.slane %v2483, 2
  %v2485 = vmax.f32 %v2483, %v2484
  %v2486 = vrot.slane %v2485, 1
  %v2487 = vmax.f32 %v2485, %v2486
  %v2488 = vsel %vm2206, %v2428, -inf
  %v2489 = vsel %vm2206, %v2429, -inf
  %v2490 = vmax.f32 %v2488, %v2489
  %v2491 = vrot.slane %v2490, 4
  %v2492 = vmax.f32 %v2490, %v2491
  %v2493 = vrot.slane %v2492, 2
  %v2494 = vmax.f32 %v2492, %v2493
  %v2495 = vrot.slane %v2494, 1
  %v2496 = vmax.f32 %v2494, %v2495
  %v2497 = vsel %vm2206, %v2430, -inf
  %v2498 = vsel %vm2206, %v2431, -inf
  %v2499 = vmax.f32 %v2497, %v2498
  %v2500 = vrot.slane %v2499, 4
  %v2501 = vmax.f32 %v2499, %v2500
  %v2502 = vrot.slane %v2501, 2
  %v2503 = vmax.f32 %v2501, %v2502
  %v2504 = vrot.slane %v2503, 1
  %v2505 = vmax.f32 %v2503, %v2504
  %v2506 = vsel %vm2206, %v2432, -inf
  %v2507 = vsel %vm2206, %v2433, -inf
  %v2508 = vmax.f32 %v2506, %v2507
  %v2509 = vrot.slane %v2508, 4
  %v2510 = vmax.f32 %v2508, %v2509
  %v2511 = vrot.slane %v2510, 2
  %v2512 = vmax.f32 %v2510, %v2511
  %v2513 = vrot.slane %v2512, 1
  %v2514 = vmax.f32 %v2512, %v2513
  %v2515 = vsel %vm2206, %v2434, -inf
  %v2516 = vsel %vm2206, %v2435, -inf
  %v2517 = vmax.f32 %v2515, %v2516
  %v2518 = vrot.slane %v2517, 4
  %v2519 = vmax.f32 %v2517, %v2518
  %v2520 = vrot.slane %v2519, 2
  %v2521 = vmax.f32 %v2519, %v2520
  %v2522 = vrot.slane %v2521, 1
  %v2523 = vmax.f32 %v2521, %v2522
  %v2524 = vsel %vm2206, %v2436, -inf
  %v2525 = vsel %vm2206, %v2437, -inf
  %v2526 = vmax.f32 %v2524, %v2525
  %v2527 = vrot.slane %v2526, 4
  %v2528 = vmax.f32 %v2526, %v2527
  %v2529 = vrot.slane %v2528, 2
  %v2530 = vmax.f32 %v2528, %v2529
  %v2531 = vrot.slane %v2530, 1
  %v2532 = vmax.f32 %v2530, %v2531
  %v2533 = vsel %vm2206, %v2438, -inf
  %v2534 = vsel %vm2206, %v2439, -inf
  %v2535 = vmax.f32 %v2533, %v2534
  %v2536 = vrot.slane %v2535, 4
  %v2537 = vmax.f32 %v2535, %v2536
  %v2538 = vrot.slane %v2537, 2
  %v2539 = vmax.f32 %v2537, %v2538
  %v2540 = vrot.slane %v2539, 1
  %v2541 = vmax.f32 %v2539, %v2540
  %v2542 = vsel %vm2206, %v2440, -inf
  %v2543 = vsel %vm2206, %v2441, -inf
  %v2544 = vmax.f32 %v2542, %v2543
  %v2545 = vrot.slane %v2544, 4
  %v2546 = vmax.f32 %v2544, %v2545
  %v2547 = vrot.slane %v2546, 2
  %v2548 = vmax.f32 %v2546, %v2547
  %v2549 = vrot.slane %v2548, 1
  %v2550 = vmax.f32 %v2548, %v2549
  %v2551 = vsel %vm2206, %v2442, -inf
  %v2552 = vsel %vm2206, %v2443, -inf
  %v2553 = vmax.f32 %v2551, %v2552
  %v2554 = vrot.slane %v2553, 4
  %v2555 = vmax.f32 %v2553, %v2554
  %v2556 = vrot.slane %v2555, 2
  %v2557 = vmax.f32 %v2555, %v2556
  %v2558 = vrot.slane %v2557, 1
  %v2559 = vmax.f32 %v2557, %v2558
  %v2560 = vsel %vm2206, %v2444, -inf
  %v2561 = vsel %vm2206, %v2445, -inf
  %v2562 = vmax.f32 %v2560, %v2561
  %v2563 = vrot.slane %v2562, 4
  %v2564 = vmax.f32 %v2562, %v2563
  %v2565 = vrot.slane %v2564, 2
  %v2566 = vmax.f32 %v2564, %v2565
  %v2567 = vrot.slane %v2566, 1
  %v2568 = vmax.f32 %v2566, %v2567
  %v2569 = vsel %vm2206, %v2446, -inf
  %v2570 = vsel %vm2206, %v2447, -inf
  %v2571 = vmax.f32 %v2569, %v2570
  %v2572 = vrot.slane %v2571, 4
  %v2573 = vmax.f32 %v2571, %v2572
  %v2574 = vrot.slane %v2573, 2
  %v2575 = vmax.f32 %v2573, %v2574
  %v2576 = vrot.slane %v2575, 1
  %v2577 = vmax.f32 %v2575, %v2576
  %v2578 = vsel %vm2206, %v2448, -inf
  %v2579 = vsel %vm2206, %v2449, -inf
  %v2580 = vmax.f32 %v2578, %v2579
  %v2581 = vrot.slane %v2580, 4
  %v2582 = vmax.f32 %v2580, %v2581
  %v2583 = vrot.slane %v2582, 2
  %v2584 = vmax.f32 %v2582, %v2583
  %v2585 = vrot.slane %v2584, 1
  %v2586 = vmax.f32 %v2584, %v2585
  %v2587 = vsel %vm2206, %v2450, -inf
  %v2588 = vsel %vm2206, %v2451, -inf
  %v2589 = vmax.f32 %v2587, %v2588
  %v2590 = vrot.slane %v2589, 4
  %v2591 = vmax.f32 %v2589, %v2590
  %v2592 = vrot.slane %v2591, 2
  %v2593 = vmax.f32 %v2591, %v2592
  %v2594 = vrot.slane %v2593, 1
  %v2595 = vmax.f32 %v2593, %v2594
  %v2596 = vsub.f32 %v2420, %v2460
  %v2597 = vsub.f32 %v2421, %v2460
  %v2598 = vsub.f32 %v2422, %v2469
  %v2599 = vsub.f32 %v2423, %v2469
  %v2600 = vsub.f32 %v2424, %v2478
  %v2601 = vsub.f32 %v2425, %v2478
  %v2602 = vsub.f32 %v2426, %v2487
  %v2603 = vsub.f32 %v2427, %v2487
  %v2604 = vsub.f32 %v2428, %v2496
  %v2605 = vsub.f32 %v2429, %v2496
  %v2606 = vsub.f32 %v2430, %v2505
  %v2607 = vsub.f32 %v2431, %v2505
  %v2608 = vsub.f32 %v2432, %v2514
  %v2609 = vsub.f32 %v2433, %v2514
  %v2610 = vsub.f32 %v2434, %v2523
  %v2611 = vsub.f32 %v2435, %v2523
  %v2612 = vsub.f32 %v2436, %v2532
  %v2613 = vsub.f32 %v2437, %v2532
  %v2614 = vsub.f32 %v2438, %v2541
  %v2615 = vsub.f32 %v2439, %v2541
  %v2616 = vsub.f32 %v2440, %v2550
  %v2617 = vsub.f32 %v2441, %v2550
  %v2618 = vsub.f32 %v2442, %v2559
  %v2619 = vsub.f32 %v2443, %v2559
  %v2620 = vsub.f32 %v2444, %v2568
  %v2621 = vsub.f32 %v2445, %v2568
  %v2622 = vsub.f32 %v2446, %v2577
  %v2623 = vsub.f32 %v2447, %v2577
  %v2624 = vsub.f32 %v2448, %v2586
  %v2625 = vsub.f32 %v2449, %v2586
  %v2626 = vsub.f32 %v2450, %v2595
  %v2627 = vsub.f32 %v2451, %v2595
  %v2628 = vmul.f32 %v2596, 1.442695
  %v2629 = vpow.pop %v2628
  %v2630 = vmul.f32 %v2597, 1.442695
  %v2631 = vpow.pop %v2630
  %v2632 = vmul.f32 %v2598, 1.442695
  %v2633 = vpow.pop %v2632
  %v2634 = vmul.f32 %v2599, 1.442695
  %v2635 = vpow.pop %v2634
  %v2636 = vmul.f32 %v2600, 1.442695
  %v2637 = vpow.pop %v2636
  %v2638 = vmul.f32 %v2601, 1.442695
  %v2639 = vpow.pop %v2638
  %v2640 = vmul.f32 %v2602, 1.442695
  %v2641 = vpow.pop %v2640
  %v2642 = vmul.f32 %v2603, 1.442695
  %v2643 = vpow.pop %v2642
  %v2644 = vmul.f32 %v2604, 1.442695
  %v2645 = vpow.pop %v2644
  %v2646 = vmul.f32 %v2605, 1.442695
  %v2647 = vpow.pop %v2646
  %v2648 = vmul.f32 %v2606, 1.442695
  %v2649 = vpow.pop %v2648
  %v2650 = vmul.f32 %v2607, 1.442695
  %v2651 = vpow.pop %v2650
  %v2652 = vmul.f32 %v2608, 1.442695
  %v2653 = vpow.pop %v2652
  %v2654 = vmul.f32 %v2609, 1.442695
  %v2655 = vpow.pop %v2654
  %v2656 = vmul.f32 %v2610, 1.442695
  %v2657 = vpow.pop %v2656
  %v2658 = vmul.f32 %v2611, 1.442695
  %v2659 = vpow.pop %v2658
  %v2660 = vmul.f32 %v2612, 1.442695
  %v2661 = vpow.pop %v2660
  %v2662 = vmul.f32 %v2613, 1.442695
  %v2663 = vpow.pop %v2662
  %v2664 = vmul.f32 %v2614, 1.442695
  %v2665 = vpow.pop %v2664
  %v2666 = vmul.f32 %v2615, 1.442695
  %v2667 = vpow.pop %v2666
  %v2668 = vmul.f32 %v2616, 1.442695
  %v2669 = vpow.pop %v2668
  %v2670 = vmul.f32 %v2617, 1.442695
  %v2671 = vpow.pop %v2670
  %v2672 = vmul.f32 %v2618, 1.442695
  %v2673 = vpow.pop %v2672
  %v2674 = vmul.f32 %v2619, 1.442695
  %v2675 = vpow.pop %v2674
  %v2676 = vmul.f32 %v2620, 1.442695
  %v2677 = vpow.pop %v2676
  %v2678 = vmul.f32 %v2621, 1.442695
  %v2679 = vpow.pop %v2678
  %v2680 = vmul.f32 %v2622, 1.442695
  %v2681 = vpow.pop %v2680
  %v2682 = vmul.f32 %v2623, 1.442695
  %v2683 = vpow.pop %v2682
  %v2684 = vmul.f32 %v2624, 1.442695
  %v2685 = vpow.pop %v2684
  %v2686 = vmul.f32 %v2625, 1.442695
  %v2687 = vpow.pop %v2686
  %v2688 = vmul.f32 %v2626, 1.442695
  %v2689 = vpow.pop %v2688
  %v2690 = vmul.f32 %v2627, 1.442695
  %v2691 = vpow.pop %v2690
  %v2692 = vsel %vm2206, %v2629, 0.0
  %v2693 = vsel %vm2206, %v2631, 0.0
  %v2694 = vadd.f32 %v2692, %v2693
  %v2695 = vrot.slane %v2694, 4
  %v2696 = vadd.f32 %v2694, %v2695
  %v2697 = vrot.slane %v2696, 2
  %v2698 = vadd.f32 %v2696, %v2697
  %v2699 = vrot.slane %v2698, 1
  %v2700 = vadd.f32 %v2698, %v2699
  %v2701 = vsel %vm2206, %v2633, 0.0
  %v2702 = vsel %vm2206, %v2635, 0.0
  %v2703 = vadd.f32 %v2701, %v2702
  %v2704 = vrot.slane %v2703, 4
  %v2705 = vadd.f32 %v2703, %v2704
  %v2706 = vrot.slane %v2705, 2
  %v2707 = vadd.f32 %v2705, %v2706
  %v2708 = vrot.slane %v2707, 1
  %v2709 = vadd.f32 %v2707, %v2708
  %v2710 = vsel %vm2206, %v2637, 0.0
  %v2711 = vsel %vm2206, %v2639, 0.0
  %v2712 = vadd.f32 %v2710, %v2711
  %v2713 = vrot.slane %v2712, 4
  %v2714 = vadd.f32 %v2712, %v2713
  %v2715 = vrot.slane %v2714, 2
  %v2716 = vadd.f32 %v2714, %v2715
  %v2717 = vrot.slane %v2716, 1
  %v2718 = vadd.f32 %v2716, %v2717
  %v2719 = vsel %vm2206, %v2641, 0.0
  %v2720 = vsel %vm2206, %v2643, 0.0
  %v2721 = vadd.f32 %v2719, %v2720
  %v2722 = vrot.slane %v2721, 4
  %v2723 = vadd.f32 %v2721, %v2722
  %v2724 = vrot.slane %v2723, 2
  %v2725 = vadd.f32 %v2723, %v2724
  %v2726 = vrot.slane %v2725, 1
  %v2727 = vadd.f32 %v2725, %v2726
  %v2728 = vsel %vm2206, %v2645, 0.0
  %v2729 = vsel %vm2206, %v2647, 0.0
  %v2730 = vadd.f32 %v2728, %v2729
  %v2731 = vrot.slane %v2730, 4
  %v2732 = vadd.f32 %v2730, %v2731
  %v2733 = vrot.slane %v2732, 2
  %v2734 = vadd.f32 %v2732, %v2733
  %v2735 = vrot.slane %v2734, 1
  %v2736 = vadd.f32 %v2734, %v2735
  %v2737 = vsel %vm2206, %v2649, 0.0
  %v2738 = vsel %vm2206, %v2651, 0.0
  %v2739 = vadd.f32 %v2737, %v2738
  %v2740 = vrot.slane %v2739, 4
  %v2741 = vadd.f32 %v2739, %v2740
  %v2742 = vrot.slane %v2741, 2
  %v2743 = vadd.f32 %v2741, %v2742
  %v2744 = vrot.slane %v2743, 1
  %v2745 = vadd.f32 %v2743, %v2744
  %v2746 = vsel %vm2206, %v2653, 0.0
  %v2747 = vsel %vm2206, %v2655, 0.0
  %v2748 = vadd.f32 %v2746, %v2747
  %v2749 = vrot.slane %v2748, 4
  %v2750 = vadd.f32 %v2748, %v2749
  %v2751 = vrot.slane %v2750, 2
  %v2752 = vadd.f32 %v2750, %v2751
  %v2753 = vrot.slane %v2752, 1
  %v2754 = vadd.f32 %v2752, %v2753
  %v2755 = vsel %vm2206, %v2657, 0.0
  %v2756 = vsel %vm2206, %v2659, 0.0
  %v2757 = vadd.f32 %v2755, %v2756
  %v2758 = vrot.slane %v2757, 4
  %v2759 = vadd.f32 %v2757, %v2758
  %v2760 = vrot.slane %v2759, 2
  %v2761 = vadd.f32 %v2759, %v2760
  %v2762 = vrot.slane %v2761, 1
  %v2763 = vadd.f32 %v2761, %v2762
  %v2764 = vsel %vm2206, %v2661, 0.0
  %v2765 = vsel %vm2206, %v2663, 0.0
  %v2766 = vadd.f32 %v2764, %v2765
  %v2767 = vrot.slane %v2766, 4
  %v2768 = vadd.f32 %v2766, %v2767
  %v2769 = vrot.slane %v2768, 2
  %v2770 = vadd.f32 %v2768, %v2769
  %v2771 = vrot.slane %v2770, 1
  %v2772 = vadd.f32 %v2770, %v2771
  %v2773 = vsel %vm2206, %v2665, 0.0
  %v2774 = vsel %vm2206, %v2667, 0.0
  %v2775 = vadd.f32 %v2773, %v2774
  %v2776 = vrot.slane %v2775, 4
  %v2777 = vadd.f32 %v2775, %v2776
  %v2778 = vrot.slane %v2777, 2
  %v2779 = vadd.f32 %v2777, %v2778
  %v2780 = vrot.slane %v2779, 1
  %v2781 = vadd.f32 %v2779, %v2780
  %v2782 = vsel %vm2206, %v2669, 0.0
  %v2783 = vsel %vm2206, %v2671, 0.0
  %v2784 = vadd.f32 %v2782, %v2783
  %v2785 = vrot.slane %v2784, 4
  %v2786 = vadd.f32 %v2784, %v2785
  %v2787 = vrot.slane %v2786, 2
  %v2788 = vadd.f32 %v2786, %v2787
  %v2789 = vrot.slane %v2788, 1
  %v2790 = vadd.f32 %v2788, %v2789
  %v2791 = vsel %vm2206, %v2673, 0.0
  %v2792 = vsel %vm2206, %v2675, 0.0
  %v2793 = vadd.f32 %v2791, %v2792
  %v2794 = vrot.slane %v2793, 4
  %v2795 = vadd.f32 %v2793, %v2794
  %v2796 = vrot.slane %v2795, 2
  %v2797 = vadd.f32 %v2795, %v2796
  %v2798 = vrot.slane %v2797, 1
  %v2799 = vadd.f32 %v2797, %v2798
  %v2800 = vsel %vm2206, %v2677, 0.0
  %v2801 = vsel %vm2206, %v2679, 0.0
  %v2802 = vadd.f32 %v2800, %v2801
  %v2803 = vrot.slane %v2802, 4
  %v2804 = vadd.f32 %v2802, %v2803
  %v2805 = vrot.slane %v2804, 2
  %v2806 = vadd.f32 %v2804, %v2805
  %v2807 = vrot.slane %v2806, 1
  %v2808 = vadd.f32 %v2806, %v2807
  %v2809 = vsel %vm2206, %v2681, 0.0
  %v2810 = vsel %vm2206, %v2683, 0.0
  %v2811 = vadd.f32 %v2809, %v2810
  %v2812 = vrot.slane %v2811, 4
  %v2813 = vadd.f32 %v2811, %v2812
  %v2814 = vrot.slane %v2813, 2
  %v2815 = vadd.f32 %v2813, %v2814
  %v2816 = vrot.slane %v2815, 1
  %v2817 = vadd.f32 %v2815, %v2816
  %v2818 = vsel %vm2206, %v2685, 0.0
  %v2819 = vsel %vm2206, %v2687, 0.0
  %v2820 = vadd.f32 %v2818, %v2819
  %v2821 = vrot.slane %v2820, 4
  %v2822 = vadd.f32 %v2820, %v2821
  %v2823 = vrot.slane %v2822, 2
  %v2824 = vadd.f32 %v2822, %v2823
  %v2825 = vrot.slane %v2824, 1
  %v2826 = vadd.f32 %v2824, %v2825
  %v2827 = vsel %vm2206, %v2689, 0.0
  %v2828 = vsel %vm2206, %v2691, 0.0
  %v2829 = vadd.f32 %v2827, %v2828
  %v2830 = vrot.slane %v2829, 4
  %v2831 = vadd.f32 %v2829, %v2830
  %v2832 = vrot.slane %v2831, 2
  %v2833 = vadd.f32 %v2831, %v2832
  %v2834 = vrot.slane %v2833, 1
  %v2835 = vadd.f32 %v2833, %v2834
  %v2836 = vrcp.pop %v2700
  %v2837 = vrcp.pop %v2709
  %v2838 = vrcp.pop %v2718
  %v2839 = vrcp.pop %v2727
  %v2840 = vrcp.pop %v2736
  %v2841 = vrcp.pop %v2745
  %v2842 = vrcp.pop %v2754
  %v2843 = vrcp.pop %v2763
  %v2844 = vrcp.pop %v2772
  %v2845 = vrcp.pop %v2781
  %v2846 = vrcp.pop %v2790
  %v2847 = vrcp.pop %v2799
  %v2848 = vrcp.pop %v2808
  %v2849 = vrcp.pop %v2817
  %v2850 = vrcp.pop %v2826
  %v2851 = vrcp.pop %v2835
  %v2852 = vmul.f32 %v2629, %v2836
  %v2853 = vmul.f32 %v2631, %v2836
  %v2854 = vmul.f32 %v2633, %v2837
  %v2855 = vmul.f32 %v2635, %v2837
  %v2856 = vmul.f32 %v2637, %v2838
  %v2857 = vmul.f32 %v2639, %v2838
  %v2858 = vmul.f32 %v2641, %v2839
  %v2859 = vmul.f32 %v2643, %v2839
  %v2860 = vmul.f32 %v2645, %v2840
  %v2861 = vmul.f32 %v2647, %v2840
  %v2862 = vmul.f32 %v2649, %v2841
  %v2863 = vmul.f32 %v2651, %v2841
  %v2864 = vmul.f32 %v2653, %v2842
  %v2865 = vmul.f32 %v2655, %v2842
  %v2866 = vmul.f32 %v2657, %v2843
  %v2867 = vmul.f32 %v2659, %v2843
  %v2868 = vmul.f32 %v2661, %v2844
  %v2869 = vmul.f32 %v2663, %v2844
  %v2870 = vmul.f32 %v2665, %v2845
  %v2871 = vmul.f32 %v2667, %v2845
  %v2872 = vmul.f32 %v2669, %v2846
  %v2873 = vmul.f32 %v2671, %v2846
  %v2874 = vmul.f32 %v2673, %v2847
  %v2875 = vmul.f32 %v2675, %v2847
  %v2876 = vmul.f32 %v2677, %v2848
  %v2877 = vmul.f32 %v2679, %v2848
  %v2878 = vmul.f32 %v2681, %v2849
  %v2879 = vmul.f32 %v2683, %v2849
  %v2880 = vmul.f32 %v2685, %v2850
  %v2881 = vmul.f32 %v2687, %v2850
  %v2882 = vmul.f32 %v2689, %v2851
  %v2883 = vmul.f32 %v2691, %v2851
  %v2884 = vmul.f32 %v2852, %v1848
  %v2885 = vmul.f32 %v2853, %v1851
  %v2886 = vmul.f32 %v2854, %v1848
  %v2887 = vmul.f32 %v2855, %v1851
  %v2888 = vmul.f32 %v2856, %v1848
  %v2889 = vmul.f32 %v2857, %v1851
  %v2890 = vmul.f32 %v2858, %v1848
  %v2891 = vmul.f32 %v2859, %v1851
  %v2892 = vmul.f32 %v2860, %v1848
  %v2893 = vmul.f32 %v2861, %v1851
  %v2894 = vmul.f32 %v2862, %v1848
  %v2895 = vmul.f32 %v2863, %v1851
  %v2896 = vmul.f32 %v2864, %v1848
  %v2897 = vmul.f32 %v2865, %v1851
  %v2898 = vmul.f32 %v2866, %v1848
  %v2899 = vmul.f32 %v2867, %v1851
  %v2900 = vmul.f32 %v2868, %v1848
  %v2901 = vmul.f32 %v2869, %v1851
  %v2902 = vmul.f32 %v2870, %v1848
  %v2903 = vmul.f32 %v2871, %v1851
  %v2904 = vmul.f32 %v2872, %v1848
  %v2905 = vmul.f32 %v2873, %v1851
  %v2906 = vmul.f32 %v2874, %v1848
  %v2907 = vmul.f32 %v2875, %v1851
  %v2908 = vmul.f32 %v2876, %v1848
  %v2909 = vmul.f32 %v2877, %v1851
  %v2910 = vmul.f32 %v2878, %v1848
  %v2911 = vmul.f32 %v2879, %v1851
  %v2912 = vmul.f32 %v2880, %v1848
  %v2913 = vmul.f32 %v2881, %v1851
  %v2914 = vmul.f32 %v2882, %v1848
  %v2915 = vmul.f32 %v2883, %v1851
  %v2916 = vsel %vm2206, %v2884, 0.0
  %v2917 = vsel %vm2206, %v2885, 0.0
  %v2918 = vadd.f32 %v2916, %v2917
  %v2919 = vrot.slane %v2918, 4
  %v2920 = vadd.f32 %v2918, %v2919
  %v2921 = vrot.slane %v2920, 2
  %v2922 = vadd.f32 %v2920, %v2921
  %v2923 = vrot.slane %v2922, 1
  %v2924 = vadd.f32 %v2922, %v2923
  %v2925 = vsel %vm2206, %v2886, 0.0
  %v2926 = vsel %vm2206, %v2887, 0.0
  %v2927 = vadd.f32 %v2925, %v2926
  %v2928 = vrot.slane %v2927, 4
  %v2929 = vadd.f32 %v2927, %v2928
  %v2930 = vrot.slane %v2929, 2
  %v2931 = vadd.f32 %v2929, %v2930
  %v2932 = vrot.slane %v2931, 1
  %v2933 = vadd.f32 %v2931, %v2932
  %v2934 = vsel %vm2206, %v2888, 0.0
  %v2935 = vsel %vm2206, %v2889, 0.0
  %v2936 = vadd.f32 %v2934, %v2935
  %v2937 = vrot.slane %v2936, 4
  %v2938 = vadd.f32 %v2936, %v2937
  %v2939 = vrot.slane %v2938, 2
  %v2940 = vadd.f32 %v2938, %v2939
  %v2941 = vrot.slane %v2940, 1
  %v2942 = vadd.f32 %v2940, %v2941
  %v2943 = vsel %vm2206, %v2890, 0.0
  %v2944 = vsel %vm2206, %v2891, 0.0
  %v2945 = vadd.f32 %v2943, %v2944
  %v2946 = vrot.slane %v2945, 4
  %v2947 = vadd.f32 %v2945, %v2946
  %v2948 = vrot.slane %v2947, 2
  %v2949 = vadd.f32 %v2947, %v2948
  %v2950 = vrot.slane %v2949, 1
  %v2951 = vadd.f32 %v2949, %v2950
  %v2952 = vsel %vm2206, %v2892, 0.0
  %v2953 = vsel %vm2206, %v2893, 0.0
  %v2954 = vadd.f32 %v2952, %v2953
  %v2955 = vrot.slane %v2954, 4
  %v2956 = vadd.f32 %v2954, %v2955
  %v2957 = vrot.slane %v2956, 2
  %v2958 = vadd.f32 %v2956, %v2957
  %v2959 = vrot.slane %v2958, 1
  %v2960 = vadd.f32 %v2958, %v2959
  %v2961 = vsel %vm2206, %v2894, 0.0
  %v2962 = vsel %vm2206, %v2895, 0.0
  %v2963 = vadd.f32 %v2961, %v2962
  %v2964 = vrot.slane %v2963, 4
  %v2965 = vadd.f32 %v2963, %v2964
  %v2966 = vrot.slane %v2965, 2
  %v2967 = vadd.f32 %v2965, %v2966
  %v2968 = vrot.slane %v2967, 1
  %v2969 = vadd.f32 %v2967, %v2968
  %v2970 = vsel %vm2206, %v2896, 0.0
  %v2971 = vsel %vm2206, %v2897, 0.0
  %v2972 = vadd.f32 %v2970, %v2971
  %v2973 = vrot.slane %v2972, 4
  %v2974 = vadd.f32 %v2972, %v2973
  %v2975 = vrot.slane %v2974, 2
  %v2976 = vadd.f32 %v2974, %v2975
  %v2977 = vrot.slane %v2976, 1
  %v2978 = vadd.f32 %v2976, %v2977
  %v2979 = vsel %vm2206, %v2898, 0.0
  %v2980 = vsel %vm2206, %v2899, 0.0
  %v2981 = vadd.f32 %v2979, %v2980
  %v2982 = vrot.slane %v2981, 4
  %v2983 = vadd.f32 %v2981, %v2982
  %v2984 = vrot.slane %v2983, 2
  %v2985 = vadd.f32 %v2983, %v2984
  %v2986 = vrot.slane %v2985, 1
  %v2987 = vadd.f32 %v2985, %v2986
  %v2988 = vsel %vm2206, %v2900, 0.0
  %v2989 = vsel %vm2206, %v2901, 0.0
  %v2990 = vadd.f32 %v2988, %v2989
  %v2991 = vrot.slane %v2990, 4
  %v2992 = vadd.f32 %v2990, %v2991
  %v2993 = vrot.slane %v2992, 2
  %v2994 = vadd.f32 %v2992, %v2993
  %v2995 = vrot.slane %v2994, 1
  %v2996 = vadd.f32 %v2994, %v2995
  %v2997 = vsel %vm2206, %v2902, 0.0
  %v2998 = vsel %vm2206, %v2903, 0.0
  %v2999 = vadd.f32 %v2997, %v2998
  %v3000 = vrot.slane %v2999, 4
  %v3001 = vadd.f32 %v2999, %v3000
  %v3002 = vrot.slane %v3001, 2
  %v3003 = vadd.f32 %v3001, %v3002
  %v3004 = vrot.slane %v3003, 1
  %v3005 = vadd.f32 %v3003, %v3004
  %v3006 = vsel %vm2206, %v2904, 0.0
  %v3007 = vsel %vm2206, %v2905, 0.0
  %v3008 = vadd.f32 %v3006, %v3007
  %v3009 = vrot.slane %v3008, 4
  %v3010 = vadd.f32 %v3008, %v3009
  %v3011 = vrot.slane %v3010, 2
  %v3012 = vadd.f32 %v3010, %v3011
  %v3013 = vrot.slane %v3012, 1
  %v3014 = vadd.f32 %v3012, %v3013
  %v3015 = vsel %vm2206, %v2906, 0.0
  %v3016 = vsel %vm2206, %v2907, 0.0
  %v3017 = vadd.f32 %v3015, %v3016
  %v3018 = vrot.slane %v3017, 4
  %v3019 = vadd.f32 %v3017, %v3018
  %v3020 = vrot.slane %v3019, 2
  %v3021 = vadd.f32 %v3019, %v3020
  %v3022 = vrot.slane %v3021, 1
  %v3023 = vadd.f32 %v3021, %v3022
  %v3024 = vsel %vm2206, %v2908, 0.0
  %v3025 = vsel %vm2206, %v2909, 0.0
  %v3026 = vadd.f32 %v3024, %v3025
  %v3027 = vrot.slane %v3026, 4
  %v3028 = vadd.f32 %v3026, %v3027
  %v3029 = vrot.slane %v3028, 2
  %v3030 = vadd.f32 %v3028, %v3029
  %v3031 = vrot.slane %v3030, 1
  %v3032 = vadd.f32 %v3030, %v3031
  %v3033 = vsel %vm2206, %v2910, 0.0
  %v3034 = vsel %vm2206, %v2911, 0.0
  %v3035 = vadd.f32 %v3033, %v3034
  %v3036 = vrot.slane %v3035, 4
  %v3037 = vadd.f32 %v3035, %v3036
  %v3038 = vrot.slane %v3037, 2
  %v3039 = vadd.f32 %v3037, %v3038
  %v3040 = vrot.slane %v3039, 1
  %v3041 = vadd.f32 %v3039, %v3040
  %v3042 = vsel %vm2206, %v2912, 0.0
  %v3043 = vsel %vm2206, %v2913, 0.0
  %v3044 = vadd.f32 %v3042, %v3043
  %v3045 = vrot.slane %v3044, 4
  %v3046 = vadd.f32 %v3044, %v3045
  %v3047 = vrot.slane %v3046, 2
  %v3048 = vadd.f32 %v3046, %v3047
  %v3049 = vrot.slane %v3048, 1
  %v3050 = vadd.f32 %v3048, %v3049
  %v3051 = vsel %vm2206, %v2914, 0.0
  %v3052 = vsel %vm2206, %v2915, 0.0
  %v3053 = vadd.f32 %v3051, %v3052
  %v3054 = vrot.slane %v3053, 4
  %v3055 = vadd.f32 %v3053, %v3054
  %v3056 = vrot.slane %v3055, 2
  %v3057 = vadd.f32 %v3055, %v3056
  %v3058 = vrot.slane %v3057, 1
  %v3059 = vadd.f32 %v3057, %v3058
  %v3061 = vperm.slane %v1768, 0
  %v3063 = vadd.f32 %v2924, %v3061
  %v3064 = vadd.f32 %v2933, %v3061
  %v3065 = vadd.f32 %v2942, %v3061
  %v3066 = vadd.f32 %v2951, %v3061
  %v3067 = vadd.f32 %v2960, %v3061
  %v3068 = vadd.f32 %v2969, %v3061
  %v3069 = vadd.f32 %v2978, %v3061
  %v3070 = vadd.f32 %v2987, %v3061
  %v3071 = vadd.f32 %v2996, %v3061
  %v3072 = vadd.f32 %v3005, %v3061
  %v3073 = vadd.f32 %v3014, %v3061
  %v3074 = vadd.f32 %v3023, %v3061
  %v3075 = vadd.f32 %v3032, %v3061
  %v3076 = vadd.f32 %v3041, %v3061
  %v3077 = vadd.f32 %v3050, %v3061
  %v3078 = vadd.f32 %v3059, %v3061
  %vm3079 = vcmp.gt.f32.partialorder %v3063, 0.0
  %vm3080 = vcmp.gt.f32.partialorder %v3064, 0.0
  %vm3081 = vcmp.gt.f32.partialorder %v3065, 0.0
  %vm3082 = vcmp.gt.f32.partialorder %v3066, 0.0
  %vm3083 = vcmp.gt.f32.partialorder %v3067, 0.0
  %vm3084 = vcmp.gt.f32.partialorder %v3068, 0.0
  %vm3085 = vcmp.gt.f32.partialorder %v3069, 0.0
  %vm3086 = vcmp.gt.f32.partialorder %v3070, 0.0
  %vm3087 = vcmp.gt.f32.partialorder %v3071, 0.0
  %vm3088 = vcmp.gt.f32.partialorder %v3072, 0.0
  %vm3089 = vcmp.gt.f32.partialorder %v3073, 0.0
  %vm3090 = vcmp.gt.f32.partialorder %v3074, 0.0
  %vm3091 = vcmp.gt.f32.partialorder %v3075, 0.0
  %vm3092 = vcmp.gt.f32.partialorder %v3076, 0.0
  %vm3093 = vcmp.gt.f32.partialorder %v3077, 0.0
  %vm3094 = vcmp.gt.f32.partialorder %v3078, 0.0
  %v3095 = vmul.f32 %v3063, 0.01
  %v3096 = vmul.f32 %v3064, 0.01
  %v3097 = vmul.f32 %v3065, 0.01
  %v3098 = vmul.f32 %v3066, 0.01
  %v3099 = vmul.f32 %v3067, 0.01
  %v3100 = vmul.f32 %v3068, 0.01
  %v3101 = vmul.f32 %v3069, 0.01
  %v3102 = vmul.f32 %v3070, 0.01
  %v3103 = vmul.f32 %v3071, 0.01
  %v3104 = vmul.f32 %v3072, 0.01
  %v3105 = vmul.f32 %v3073, 0.01
  %v3106 = vmul.f32 %v3074, 0.01
  %v3107 = vmul.f32 %v3075, 0.01
  %v3108 = vmul.f32 %v3076, 0.01
  %v3109 = vmul.f32 %v3077, 0.01
  %v3110 = vmul.f32 %v3078, 0.01
  %v3111 = vsel %vm3079, %v3063, %v3095
  %v3112 = vsel %vm3080, %v3064, %v3096
  %v3113 = vsel %vm3081, %v3065, %v3097
  %v3114 = vsel %vm3082, %v3066, %v3098
  %v3115 = vsel %vm3083, %v3067, %v3099
  %v3116 = vsel %vm3084, %v3068, %v3100
  %v3117 = vsel %vm3085, %v3069, %v3101
  %v3118 = vsel %vm3086, %v3070, %v3102
  %v3119 = vsel %vm3087, %v3071, %v3103
  %v3120 = vsel %vm3088, %v3072, %v3104
  %v3121 = vsel %vm3089, %v3073, %v3105
  %v3122 = vsel %vm3090, %v3074, %v3106
  %v3123 = vsel %vm3091, %v3075, %v3107
  %v3124 = vsel %vm3092, %v3076, %v3108
  %v3125 = vsel %vm3093, %v3077, %v3109
  %v3126 = vsel %vm3094, %v3078, %v3110
  %v3127 = vld [vmem:[%s39] sm:$0xff]
  %v3128 = vld [vmem:[%s39 + $0x8] sm:$0x7f]
  %v3129 = vld [vmem:[%s41] sm:$0x1]
  %v3130 = vld [vmem:[%s43] sm:$0xff]
  %v3131 = vld [vmem:[%s43 + $0x8] sm:$0x7f]
  %v3132 = vld [vmem:[%s45] sm:$0x1]
  %v3133 = vld [vmem:[%s47] sm:$0xf]
  %v3134 = vld [vmem:[%s49] sm:$0xff]
  %v3135 = vld [vmem:[%s49 + $0x8] sm:$0x7f]
  %v3136 = vld [vmem:[%s51] sm:$0x1]
  %v3138 = vperm.slane %v3129, 0
  %v3156 = vrot.slane %v3112, 7
  %v3157 = vsel %vm1789, %v3156, %v3111
  %v3158 = vrot.slane %v3113, 6
  %v3159 = vsel %vm1792, %v3158, %v3157
  %v3160 = vrot.slane %v3114, 5
  %v3161 = vsel %vm1795, %v3160, %v3159
  %v3162 = vrot.slane %v3115, 4
  %v3163 = vsel %vm1798, %v3162, %v3161
  %v3164 = vrot.slane %v3116, 3
  %v3165 = vsel %vm1801, %v3164, %v3163
  %v3166 = vrot.slane %v3117, 2
  %v3167 = vsel %vm1804, %v3166, %v3165
  %v3168 = vrot.slane %v3118, 1
  %v3169 = vsel %vm1807, %v3168, %v3167
  %v3170 = vrot.slane %v3120, 7
  %v3171 = vsel %vm1789, %v3170, %v3119
  %v3172 = vrot.slane %v3121, 6
  %v3173 = vsel %vm1792, %v3172, %v3171
  %v3174 = vrot.slane %v3122, 5
  %v3175 = vsel %vm1795, %v3174, %v3173
  %v3176 = vrot.slane %v3123, 4
  %v3177 = vsel %vm1798, %v3176, %v3175
  %v3178 = vrot.slane %v3124, 3
  %v3179 = vsel %vm1801, %v3178, %v3177
  %v3180 = vrot.slane %v3125, 2
  %v3181 = vsel %vm1804, %v3180, %v3179
  %v3182 = vrot.slane %v3126, 1
  %v3183 = vsel %vm1807, %v3182, %v3181
  %v3184 = vsel %vm2206, %v3169, 0
  %v3186 = vsel %vm2206, %v3183, 0
  %v3189 = vsel %vm2303, %v3128, 0
  %3191 = vmatpush.msra.mxu0 0.0
  %3192 = vmatpush.msra.mxu0 0.0
  %3193 = vmatpush.msra.mxu0 0.0
  %3194 = vmatpush.msra.mxu0 0.0
  %3195 = vmatpush.msra.mxu0 0.0
  %3196 = vmatpush.msra.mxu0 0.0
  %3197 = vmatpush.msra.mxu0 0.0
  %3198 = vmatpush.msra.mxu0 0.0
  %3199 = vmatpush.msra.mxu0 0.0
  %3200 = vmatpush.msra.mxu0 0.0
  %3201 = vmatpush.msra.mxu0 0.0
  %3202 = vmatpush.msra.mxu0 0.0
  %3203 = vmatpush.msra.mxu0 0.0
  %3204 = vmatpush.msra.mxu0 0.0
  %3205 = vmatpush.msra.mxu0 %v3189
  %3206 = vmatpush.msra.mxu0 %v3127
  %3207 = vmatmul.f32.gmra.mxu0 %v3184
  %v3208 = vpop.f32.mrf.mxu0
  %v3209 = vadd.f32 %v3138, %v3208
  %3210 = vmatmul.f32.gmra.mxu0 %v3186
  %v3211 = vpop.f32.mrf.mxu0
  %v3212 = vadd.f32 %v3138, %v3211
  %3213 = vdwg.mxu0
  %v3215 = vperm.slane %v3132, 0
  %v3218 = vsel %vm2303, %v3131, 0
  %3220 = vmatpush.msra.mxu0 0.0
  %3221 = vmatpush.msra.mxu0 0.0
  %3222 = vmatpush.msra.mxu0 0.0
  %3223 = vmatpush.msra.mxu0 0.0
  %3224 = vmatpush.msra.mxu0 0.0
  %3225 = vmatpush.msra.mxu0 0.0
  %3226 = vmatpush.msra.mxu0 0.0
  %3227 = vmatpush.msra.mxu0 0.0
  %3228 = vmatpush.msra.mxu0 0.0
  %3229 = vmatpush.msra.mxu0 0.0
  %3230 = vmatpush.msra.mxu0 0.0
  %3231 = vmatpush.msra.mxu0 0.0
  %3232 = vmatpush.msra.mxu0 0.0
  %3233 = vmatpush.msra.mxu0 0.0
  %3234 = vmatpush.msra.mxu0 %v3218
  %3235 = vmatpush.msra.mxu0 %v3130
  %3236 = vmatmul.f32.gmra.mxu0 %v3184
  %v3237 = vpop.f32.mrf.mxu0
  %v3238 = vadd.f32 %v3215, %v3237
  %3239 = vmatmul.f32.gmra.mxu0 %v3186
  %v3240 = vpop.f32.mrf.mxu0
  %v3241 = vadd.f32 %v3215, %v3240
  %3242 = vdwg.mxu0
  %v3244 = vsel %vm401, %v3133, 0
  %3246 = vmatpush.msra.mxu0 0.0
  %3247 = vmatpush.msra.mxu0 0.0
  %3248 = vmatpush.msra.mxu0 0.0
  %3249 = vmatpush.msra.mxu0 0.0
  %3250 = vmatpush.msra.mxu0 0.0
  %3251 = vmatpush.msra.mxu0 0.0
  %3252 = vmatpush.msra.mxu0 0.0
  %3253 = vmatpush.msra.mxu0 0.0
  %3254 = vmatpush.msra.mxu0 0.0
  %3255 = vmatpush.msra.mxu0 0.0
  %3256 = vmatpush.msra.mxu0 0.0
  %3257 = vmatpush.msra.mxu0 0.0
  %3258 = vmatpush.msra.mxu0 0.0
  %3259 = vmatpush.msra.mxu0 0.0
  %3260 = vmatpush.msra.mxu0 0.0
  %3261 = vmatpush.msra.mxu0 %v3244
  %3262 = vmatmul.f32.gmra.mxu0 %v306
  %v3263 = vpop.f32.mrf.mxu0
  %v3264 = vadd.f32 0.0, %v3263
  %3265 = vmatmul.f32.gmra.mxu0 %v309
  %v3266 = vpop.f32.mrf.mxu0
  %v3267 = vadd.f32 0.0, %v3266
  %3268 = vmatmul.f32.gmra.mxu0 %v312
  %v3269 = vpop.f32.mrf.mxu0
  %v3270 = vadd.f32 0.0, %v3269
  %3271 = vmatmul.f32.gmra.mxu0 %v315
  %v3272 = vpop.f32.mrf.mxu0
  %v3273 = vadd.f32 0.0, %v3272
  %3274 = vmatmul.f32.gmra.mxu0 %v318
  %v3275 = vpop.f32.mrf.mxu0
  %v3276 = vadd.f32 0.0, %v3275
  %3277 = vmatmul.f32.gmra.mxu0 %v321
  %v3278 = vpop.f32.mrf.mxu0
  %v3279 = vadd.f32 0.0, %v3278
  %3280 = vmatmul.f32.gmra.mxu0 %v324
  %v3281 = vpop.f32.mrf.mxu0
  %v3282 = vadd.f32 0.0, %v3281
  %3283 = vmatmul.f32.gmra.mxu0 %v327
  %v3284 = vpop.f32.mrf.mxu0
  %v3285 = vadd.f32 0.0, %v3284
  %3286 = vmatmul.f32.gmra.mxu0 %v330
  %v3287 = vpop.f32.mrf.mxu0
  %v3288 = vadd.f32 0.0, %v3287
  %3289 = vmatmul.f32.gmra.mxu0 %v333
  %v3290 = vpop.f32.mrf.mxu0
  %v3291 = vadd.f32 0.0, %v3290
  %3292 = vmatmul.f32.gmra.mxu0 %v336
  %v3293 = vpop.f32.mrf.mxu0
  %v3294 = vadd.f32 0.0, %v3293
  %3295 = vmatmul.f32.gmra.mxu0 %v339
  %v3296 = vpop.f32.mrf.mxu0
  %v3297 = vadd.f32 0.0, %v3296
  %3298 = vmatmul.f32.gmra.mxu0 %v342
  %v3299 = vpop.f32.mrf.mxu0
  %v3300 = vadd.f32 0.0, %v3299
  %3301 = vmatmul.f32.gmra.mxu0 %v345
  %v3302 = vpop.f32.mrf.mxu0
  %v3303 = vadd.f32 0.0, %v3302
  %3304 = vmatmul.f32.gmra.mxu0 %v348
  %v3305 = vpop.f32.mrf.mxu0
  %v3306 = vadd.f32 0.0, %v3305
  %3307 = vmatmul.f32.gmra.mxu0 %v351
  %v3308 = vpop.f32.mrf.mxu0
  %v3309 = vadd.f32 0.0, %v3308
  %3310 = vmatmul.f32.gmra.mxu0 %v354
  %v3311 = vpop.f32.mrf.mxu0
  %v3312 = vadd.f32 0.0, %v3311
  %3313 = vmatmul.f32.gmra.mxu0 %v357
  %v3314 = vpop.f32.mrf.mxu0
  %v3315 = vadd.f32 0.0, %v3314
  %3316 = vmatmul.f32.gmra.mxu0 %v360
  %v3317 = vpop.f32.mrf.mxu0
  %v3318 = vadd.f32 0.0, %v3317
  %3319 = vmatmul.f32.gmra.mxu0 %v363
  %v3320 = vpop.f32.mrf.mxu0
  %v3321 = vadd.f32 0.0, %v3320
  %3322 = vmatmul.f32.gmra.mxu0 %v366
  %v3323 = vpop.f32.mrf.mxu0
  %v3324 = vadd.f32 0.0, %v3323
  %3325 = vmatmul.f32.gmra.mxu0 %v369
  %v3326 = vpop.f32.mrf.mxu0
  %v3327 = vadd.f32 0.0, %v3326
  %3328 = vmatmul.f32.gmra.mxu0 %v372
  %v3329 = vpop.f32.mrf.mxu0
  %v3330 = vadd.f32 0.0, %v3329
  %3331 = vmatmul.f32.gmra.mxu0 %v375
  %v3332 = vpop.f32.mrf.mxu0
  %v3333 = vadd.f32 0.0, %v3332
  %3334 = vmatmul.f32.gmra.mxu0 %v378
  %v3335 = vpop.f32.mrf.mxu0
  %v3336 = vadd.f32 0.0, %v3335
  %3337 = vmatmul.f32.gmra.mxu0 %v381
  %v3338 = vpop.f32.mrf.mxu0
  %v3339 = vadd.f32 0.0, %v3338
  %3340 = vmatmul.f32.gmra.mxu0 %v384
  %v3341 = vpop.f32.mrf.mxu0
  %v3342 = vadd.f32 0.0, %v3341
  %3343 = vmatmul.f32.gmra.mxu0 %v387
  %v3344 = vpop.f32.mrf.mxu0
  %v3345 = vadd.f32 0.0, %v3344
  %3346 = vmatmul.f32.gmra.mxu0 %v390
  %v3347 = vpop.f32.mrf.mxu0
  %v3348 = vadd.f32 0.0, %v3347
  %3349 = vmatmul.f32.gmra.mxu0 %v393
  %v3350 = vpop.f32.mrf.mxu0
  %v3351 = vadd.f32 0.0, %v3350
  %3352 = vmatmul.f32.gmra.mxu0 %v396
  %v3353 = vpop.f32.mrf.mxu0
  %v3354 = vadd.f32 0.0, %v3353
  %3355 = vmatmul.f32.gmra.mxu0 %v399
  %v3356 = vpop.f32.mrf.mxu0
  %v3357 = vadd.f32 0.0, %v3356
  %3358 = vdwg.mxu0
  %v3361 = vrot.slane %v3238, 1
  %v3362 = vrot.slane %v3238, 2
  %v3363 = vrot.slane %v3238, 3
  %v3364 = vrot.slane %v3238, 4
  %v3365 = vrot.slane %v3238, 5
  %v3366 = vrot.slane %v3238, 6
  %v3367 = vrot.slane %v3238, 7
  %v3368 = vrot.slane %v3241, 1
  %v3369 = vrot.slane %v3241, 2
  %v3370 = vrot.slane %v3241, 3
  %v3371 = vrot.slane %v3241, 4
  %v3372 = vrot.slane %v3241, 5
  %v3373 = vrot.slane %v3241, 6
  %v3374 = vrot.slane %v3241, 7
  %v3375 = vperm.slane %v3238, 0
  %v3376 = vperm.slane %v3361, 0
  %v3377 = vperm.slane %v3362, 0
  %v3378 = vperm.slane %v3363, 0
  %v3379 = vperm.slane %v3364, 0
  %v3380 = vperm.slane %v3365, 0
  %v3381 = vperm.slane %v3366, 0
  %v3382 = vperm.slane %v3367, 0
  %v3383 = vperm.slane %v3241, 0
  %v3384 = vperm.slane %v3368, 0
  %v3385 = vperm.slane %v3369, 0
  %v3386 = vperm.slane %v3370, 0
  %v3387 = vperm.slane %v3371, 0
  %v3388 = vperm.slane %v3372, 0
  %v3389 = vperm.slane %v3373, 0
  %v3390 = vperm.slane %v3374, 0
  %v3407 = vadd.f32 %v3375, %v3209
  %v3408 = vadd.f32 %v3375, %v3212
  %v3409 = vadd.f32 %v3376, %v3209
  %v3410 = vadd.f32 %v3376, %v3212
  %v3411 = vadd.f32 %v3377, %v3209
  %v3412 = vadd.f32 %v3377, %v3212
  %v3413 = vadd.f32 %v3378, %v3209
  %v3414 = vadd.f32 %v3378, %v3212
  %v3415 = vadd.f32 %v3379, %v3209
  %v3416 = vadd.f32 %v3379, %v3212
  %v3417 = vadd.f32 %v3380, %v3209
  %v3418 = vadd.f32 %v3380, %v3212
  %v3419 = vadd.f32 %v3381, %v3209
  %v3420 = vadd.f32 %v3381, %v3212
  %v3421 = vadd.f32 %v3382, %v3209
  %v3422 = vadd.f32 %v3382, %v3212
  %v3423 = vadd.f32 %v3383, %v3209
  %v3424 = vadd.f32 %v3383, %v3212
  %v3425 = vadd.f32 %v3384, %v3209
  %v3426 = vadd.f32 %v3384, %v3212
  %v3427 = vadd.f32 %v3385, %v3209
  %v3428 = vadd.f32 %v3385, %v3212
  %v3429 = vadd.f32 %v3386, %v3209
  %v3430 = vadd.f32 %v3386, %v3212
  %v3431 = vadd.f32 %v3387, %v3209
  %v3432 = vadd.f32 %v3387, %v3212
  %v3433 = vadd.f32 %v3388, %v3209
  %v3434 = vadd.f32 %v3388, %v3212
  %v3435 = vadd.f32 %v3389, %v3209
  %v3436 = vadd.f32 %v3389, %v3212
  %v3437 = vadd.f32 %v3390, %v3209
  %v3438 = vadd.f32 %v3390, %v3212
  %v3439 = vadd.f32 %v3407, %v3264
  %v3440 = vadd.f32 %v3408, %v3267
  %v3441 = vadd.f32 %v3409, %v3270
  %v3442 = vadd.f32 %v3410, %v3273
  %v3443 = vadd.f32 %v3411, %v3276
  %v3444 = vadd.f32 %v3412, %v3279
  %v3445 = vadd.f32 %v3413, %v3282
  %v3446 = vadd.f32 %v3414, %v3285
  %v3447 = vadd.f32 %v3415, %v3288
  %v3448 = vadd.f32 %v3416, %v3291
  %v3449 = vadd.f32 %v3417, %v3294
  %v3450 = vadd.f32 %v3418, %v3297
  %v3451 = vadd.f32 %v3419, %v3300
  %v3452 = vadd.f32 %v3420, %v3303
  %v3453 = vadd.f32 %v3421, %v3306
  %v3454 = vadd.f32 %v3422, %v3309
  %v3455 = vadd.f32 %v3423, %v3312
  %v3456 = vadd.f32 %v3424, %v3315
  %v3457 = vadd.f32 %v3425, %v3318
  %v3458 = vadd.f32 %v3426, %v3321
  %v3459 = vadd.f32 %v3427, %v3324
  %v3460 = vadd.f32 %v3428, %v3327
  %v3461 = vadd.f32 %v3429, %v3330
  %v3462 = vadd.f32 %v3430, %v3333
  %v3463 = vadd.f32 %v3431, %v3336
  %v3464 = vadd.f32 %v3432, %v3339
  %v3465 = vadd.f32 %v3433, %v3342
  %v3466 = vadd.f32 %v3434, %v3345
  %v3467 = vadd.f32 %v3435, %v3348
  %v3468 = vadd.f32 %v3436, %v3351
  %v3469 = vadd.f32 %v3437, %v3354
  %v3470 = vadd.f32 %v3438, %v3357
  %vm3471 = vcmp.gt.f32.partialorder %v3439, 0.0
  %vm3472 = vcmp.gt.f32.partialorder %v3440, 0.0
  %vm3473 = vcmp.gt.f32.partialorder %v3441, 0.0
  %vm3474 = vcmp.gt.f32.partialorder %v3442, 0.0
  %vm3475 = vcmp.gt.f32.partialorder %v3443, 0.0
  %vm3476 = vcmp.gt.f32.partialorder %v3444, 0.0
  %vm3477 = vcmp.gt.f32.partialorder %v3445, 0.0
  %vm3478 = vcmp.gt.f32.partialorder %v3446, 0.0
  %vm3479 = vcmp.gt.f32.partialorder %v3447, 0.0
  %vm3480 = vcmp.gt.f32.partialorder %v3448, 0.0
  %vm3481 = vcmp.gt.f32.partialorder %v3449, 0.0
  %vm3482 = vcmp.gt.f32.partialorder %v3450, 0.0
  %vm3483 = vcmp.gt.f32.partialorder %v3451, 0.0
  %vm3484 = vcmp.gt.f32.partialorder %v3452, 0.0
  %vm3485 = vcmp.gt.f32.partialorder %v3453, 0.0
  %vm3486 = vcmp.gt.f32.partialorder %v3454, 0.0
  %vm3487 = vcmp.gt.f32.partialorder %v3455, 0.0
  %vm3488 = vcmp.gt.f32.partialorder %v3456, 0.0
  %vm3489 = vcmp.gt.f32.partialorder %v3457, 0.0
  %vm3490 = vcmp.gt.f32.partialorder %v3458, 0.0
  %vm3491 = vcmp.gt.f32.partialorder %v3459, 0.0
  %vm3492 = vcmp.gt.f32.partialorder %v3460, 0.0
  %vm3493 = vcmp.gt.f32.partialorder %v3461, 0.0
  %vm3494 = vcmp.gt.f32.partialorder %v3462, 0.0
  %vm3495 = vcmp.gt.f32.partialorder %v3463, 0.0
  %vm3496 = vcmp.gt.f32.partialorder %v3464, 0.0
  %vm3497 = vcmp.gt.f32.partialorder %v3465, 0.0
  %vm3498 = vcmp.gt.f32.partialorder %v3466, 0.0
  %vm3499 = vcmp.gt.f32.partialorder %v3467, 0.0
  %vm3500 = vcmp.gt.f32.partialorder %v3468, 0.0
  %vm3501 = vcmp.gt.f32.partialorder %v3469, 0.0
  %vm3502 = vcmp.gt.f32.partialorder %v3470, 0.0
  %v3503 = vmul.f32 %v3439, 0.2
  %v3504 = vmul.f32 %v3440, 0.2
  %v3505 = vmul.f32 %v3441, 0.2
  %v3506 = vmul.f32 %v3442, 0.2
  %v3507 = vmul.f32 %v3443, 0.2
  %v3508 = vmul.f32 %v3444, 0.2
  %v3509 = vmul.f32 %v3445, 0.2
  %v3510 = vmul.f32 %v3446, 0.2
  %v3511 = vmul.f32 %v3447, 0.2
  %v3512 = vmul.f32 %v3448, 0.2
  %v3513 = vmul.f32 %v3449, 0.2
  %v3514 = vmul.f32 %v3450, 0.2
  %v3515 = vmul.f32 %v3451, 0.2
  %v3516 = vmul.f32 %v3452, 0.2
  %v3517 = vmul.f32 %v3453, 0.2
  %v3518 = vmul.f32 %v3454, 0.2
  %v3519 = vmul.f32 %v3455, 0.2
  %v3520 = vmul.f32 %v3456, 0.2
  %v3521 = vmul.f32 %v3457, 0.2
  %v3522 = vmul.f32 %v3458, 0.2
  %v3523 = vmul.f32 %v3459, 0.2
  %v3524 = vmul.f32 %v3460, 0.2
  %v3525 = vmul.f32 %v3461, 0.2
  %v3526 = vmul.f32 %v3462, 0.2
  %v3527 = vmul.f32 %v3463, 0.2
  %v3528 = vmul.f32 %v3464, 0.2
  %v3529 = vmul.f32 %v3465, 0.2
  %v3530 = vmul.f32 %v3466, 0.2
  %v3531 = vmul.f32 %v3467, 0.2
  %v3532 = vmul.f32 %v3468, 0.2
  %v3533 = vmul.f32 %v3469, 0.2
  %v3534 = vmul.f32 %v3470, 0.2
  %v3535 = vsel %vm3471, %v3439, %v3503
  %v3536 = vsel %vm3472, %v3440, %v3504
  %v3537 = vsel %vm3473, %v3441, %v3505
  %v3538 = vsel %vm3474, %v3442, %v3506
  %v3539 = vsel %vm3475, %v3443, %v3507
  %v3540 = vsel %vm3476, %v3444, %v3508
  %v3541 = vsel %vm3477, %v3445, %v3509
  %v3542 = vsel %vm3478, %v3446, %v3510
  %v3543 = vsel %vm3479, %v3447, %v3511
  %v3544 = vsel %vm3480, %v3448, %v3512
  %v3545 = vsel %vm3481, %v3449, %v3513
  %v3546 = vsel %vm3482, %v3450, %v3514
  %v3547 = vsel %vm3483, %v3451, %v3515
  %v3548 = vsel %vm3484, %v3452, %v3516
  %v3549 = vsel %vm3485, %v3453, %v3517
  %v3550 = vsel %vm3486, %v3454, %v3518
  %v3551 = vsel %vm3487, %v3455, %v3519
  %v3552 = vsel %vm3488, %v3456, %v3520
  %v3553 = vsel %vm3489, %v3457, %v3521
  %v3554 = vsel %vm3490, %v3458, %v3522
  %v3555 = vsel %vm3491, %v3459, %v3523
  %v3556 = vsel %vm3492, %v3460, %v3524
  %v3557 = vsel %vm3493, %v3461, %v3525
  %v3558 = vsel %vm3494, %v3462, %v3526
  %v3559 = vsel %vm3495, %v3463, %v3527
  %v3560 = vsel %vm3496, %v3464, %v3528
  %v3561 = vsel %vm3497, %v3465, %v3529
  %v3562 = vsel %vm3498, %v3466, %v3530
  %v3563 = vsel %vm3499, %v3467, %v3531
  %v3564 = vsel %vm3500, %v3468, %v3532
  %v3565 = vsel %vm3501, %v3469, %v3533
  %v3566 = vsel %vm3502, %v3470, %v3534
  %v3568 = vsel %vm2206, %v3535, 0
  %v3571 = vsel %vm2206, %v3536, 0
  %v3574 = vsel %vm2206, %v3537, 0
  %v3577 = vsel %vm2206, %v3538, 0
  %v3580 = vsel %vm2206, %v3539, 0
  %v3583 = vsel %vm2206, %v3540, 0
  %v3586 = vsel %vm2206, %v3541, 0
  %v3589 = vsel %vm2206, %v3542, 0
  %v3592 = vsel %vm2206, %v3543, 0
  %v3595 = vsel %vm2206, %v3544, 0
  %v3598 = vsel %vm2206, %v3545, 0
  %v3601 = vsel %vm2206, %v3546, 0
  %v3604 = vsel %vm2206, %v3547, 0
  %v3607 = vsel %vm2206, %v3548, 0
  %v3610 = vsel %vm2206, %v3549, 0
  %v3613 = vsel %vm2206, %v3550, 0
  %v3616 = vsel %vm2206, %v3551, 0
  %v3619 = vsel %vm2206, %v3552, 0
  %v3622 = vsel %vm2206, %v3553, 0
  %v3625 = vsel %vm2206, %v3554, 0
  %v3628 = vsel %vm2206, %v3555, 0
  %v3631 = vsel %vm2206, %v3556, 0
  %v3634 = vsel %vm2206, %v3557, 0
  %v3637 = vsel %vm2206, %v3558, 0
  %v3640 = vsel %vm2206, %v3559, 0
  %v3643 = vsel %vm2206, %v3560, 0
  %v3646 = vsel %vm2206, %v3561, 0
  %v3649 = vsel %vm2206, %v3562, 0
  %v3652 = vsel %vm2206, %v3563, 0
  %v3655 = vsel %vm2206, %v3564, 0
  %v3658 = vsel %vm2206, %v3565, 0
  %v3661 = vsel %vm2206, %v3566, 0
  %v3664 = vsel %vm2303, %v3135, 0
  %3666 = vmatpush.msra.mxu0 0.0
  %3667 = vmatpush.msra.mxu0 0.0
  %3668 = vmatpush.msra.mxu0 0.0
  %3669 = vmatpush.msra.mxu0 0.0
  %3670 = vmatpush.msra.mxu0 0.0
  %3671 = vmatpush.msra.mxu0 0.0
  %3672 = vmatpush.msra.mxu0 0.0
  %3673 = vmatpush.msra.mxu0 0.0
  %3674 = vmatpush.msra.mxu0 0.0
  %3675 = vmatpush.msra.mxu0 0.0
  %3676 = vmatpush.msra.mxu0 0.0
  %3677 = vmatpush.msra.mxu0 0.0
  %3678 = vmatpush.msra.mxu0 0.0
  %3679 = vmatpush.msra.mxu0 0.0
  %3680 = vmatpush.msra.mxu0 %v3664
  %3681 = vmatpush.msra.mxu0 %v3134
  %3682 = vmatmul.f32.gmra.mxu0 %v3568
  %v3683 = vpop.f32.mrf.mxu0
  %v3684 = vadd.f32 0.0, %v3683
  %3685 = vmatmul.f32.gmra.mxu0 %v3571
  %v3686 = vpop.f32.mrf.mxu0
  %v3687 = vadd.f32 0.0, %v3686
  %3688 = vmatmul.f32.gmra.mxu0 %v3574
  %v3689 = vpop.f32.mrf.mxu0
  %v3690 = vadd.f32 0.0, %v3689
  %3691 = vmatmul.f32.gmra.mxu0 %v3577
  %v3692 = vpop.f32.mrf.mxu0
  %v3693 = vadd.f32 0.0, %v3692
  %3694 = vmatmul.f32.gmra.mxu0 %v3580
  %v3695 = vpop.f32.mrf.mxu0
  %v3696 = vadd.f32 0.0, %v3695
  %3697 = vmatmul.f32.gmra.mxu0 %v3583
  %v3698 = vpop.f32.mrf.mxu0
  %v3699 = vadd.f32 0.0, %v3698
  %3700 = vmatmul.f32.gmra.mxu0 %v3586
  %v3701 = vpop.f32.mrf.mxu0
  %v3702 = vadd.f32 0.0, %v3701
  %3703 = vmatmul.f32.gmra.mxu0 %v3589
  %v3704 = vpop.f32.mrf.mxu0
  %v3705 = vadd.f32 0.0, %v3704
  %3706 = vmatmul.f32.gmra.mxu0 %v3592
  %v3707 = vpop.f32.mrf.mxu0
  %v3708 = vadd.f32 0.0, %v3707
  %3709 = vmatmul.f32.gmra.mxu0 %v3595
  %v3710 = vpop.f32.mrf.mxu0
  %v3711 = vadd.f32 0.0, %v3710
  %3712 = vmatmul.f32.gmra.mxu0 %v3598
  %v3713 = vpop.f32.mrf.mxu0
  %v3714 = vadd.f32 0.0, %v3713
  %3715 = vmatmul.f32.gmra.mxu0 %v3601
  %v3716 = vpop.f32.mrf.mxu0
  %v3717 = vadd.f32 0.0, %v3716
  %3718 = vmatmul.f32.gmra.mxu0 %v3604
  %v3719 = vpop.f32.mrf.mxu0
  %v3720 = vadd.f32 0.0, %v3719
  %3721 = vmatmul.f32.gmra.mxu0 %v3607
  %v3722 = vpop.f32.mrf.mxu0
  %v3723 = vadd.f32 0.0, %v3722
  %3724 = vmatmul.f32.gmra.mxu0 %v3610
  %v3725 = vpop.f32.mrf.mxu0
  %v3726 = vadd.f32 0.0, %v3725
  %3727 = vmatmul.f32.gmra.mxu0 %v3613
  %v3728 = vpop.f32.mrf.mxu0
  %v3729 = vadd.f32 0.0, %v3728
  %3730 = vmatmul.f32.gmra.mxu0 %v3616
  %v3731 = vpop.f32.mrf.mxu0
  %v3732 = vadd.f32 0.0, %v3731
  %3733 = vmatmul.f32.gmra.mxu0 %v3619
  %v3734 = vpop.f32.mrf.mxu0
  %v3735 = vadd.f32 0.0, %v3734
  %3736 = vmatmul.f32.gmra.mxu0 %v3622
  %v3737 = vpop.f32.mrf.mxu0
  %v3738 = vadd.f32 0.0, %v3737
  %3739 = vmatmul.f32.gmra.mxu0 %v3625
  %v3740 = vpop.f32.mrf.mxu0
  %v3741 = vadd.f32 0.0, %v3740
  %3742 = vmatmul.f32.gmra.mxu0 %v3628
  %v3743 = vpop.f32.mrf.mxu0
  %v3744 = vadd.f32 0.0, %v3743
  %3745 = vmatmul.f32.gmra.mxu0 %v3631
  %v3746 = vpop.f32.mrf.mxu0
  %v3747 = vadd.f32 0.0, %v3746
  %3748 = vmatmul.f32.gmra.mxu0 %v3634
  %v3749 = vpop.f32.mrf.mxu0
  %v3750 = vadd.f32 0.0, %v3749
  %3751 = vmatmul.f32.gmra.mxu0 %v3637
  %v3752 = vpop.f32.mrf.mxu0
  %v3753 = vadd.f32 0.0, %v3752
  %3754 = vmatmul.f32.gmra.mxu0 %v3640
  %v3755 = vpop.f32.mrf.mxu0
  %v3756 = vadd.f32 0.0, %v3755
  %3757 = vmatmul.f32.gmra.mxu0 %v3643
  %v3758 = vpop.f32.mrf.mxu0
  %v3759 = vadd.f32 0.0, %v3758
  %3760 = vmatmul.f32.gmra.mxu0 %v3646
  %v3761 = vpop.f32.mrf.mxu0
  %v3762 = vadd.f32 0.0, %v3761
  %3763 = vmatmul.f32.gmra.mxu0 %v3649
  %v3764 = vpop.f32.mrf.mxu0
  %v3765 = vadd.f32 0.0, %v3764
  %3766 = vmatmul.f32.gmra.mxu0 %v3652
  %v3767 = vpop.f32.mrf.mxu0
  %v3768 = vadd.f32 0.0, %v3767
  %3769 = vmatmul.f32.gmra.mxu0 %v3655
  %v3770 = vpop.f32.mrf.mxu0
  %v3771 = vadd.f32 0.0, %v3770
  %3772 = vmatmul.f32.gmra.mxu0 %v3658
  %v3773 = vpop.f32.mrf.mxu0
  %v3774 = vadd.f32 0.0, %v3773
  %3775 = vmatmul.f32.gmra.mxu0 %v3661
  %v3776 = vpop.f32.mrf.mxu0
  %v3777 = vadd.f32 0.0, %v3776
  %3778 = vdwg.mxu0
  %v3779 = vadd.f32 %v3684, %v943
  %v3780 = vadd.f32 %v3687, %v948
  %v3781 = vadd.f32 %v3690, %v953
  %v3782 = vadd.f32 %v3693, %v958
  %v3783 = vadd.f32 %v3696, %v963
  %v3784 = vadd.f32 %v3699, %v968
  %v3785 = vadd.f32 %v3702, %v973
  %v3786 = vadd.f32 %v3705, %v978
  %v3787 = vadd.f32 %v3708, %v983
  %v3788 = vadd.f32 %v3711, %v988
  %v3789 = vadd.f32 %v3714, %v993
  %v3790 = vadd.f32 %v3717, %v998
  %v3791 = vadd.f32 %v3720, %v1003
  %v3792 = vadd.f32 %v3723, %v1008
  %v3793 = vadd.f32 %v3726, %v1013
  %v3794 = vadd.f32 %v3729, %v1018
  %v3795 = vadd.f32 %v3732, %v1023
  %v3796 = vadd.f32 %v3735, %v1028
  %v3797 = vadd.f32 %v3738, %v1033
  %v3798 = vadd.f32 %v3741, %v1038
  %v3799 = vadd.f32 %v3744, %v1043
  %v3800 = vadd.f32 %v3747, %v1048
  %v3801 = vadd.f32 %v3750, %v1053
  %v3802 = vadd.f32 %v3753, %v1058
  %v3803 = vadd.f32 %v3756, %v1063
  %v3804 = vadd.f32 %v3759, %v1068
  %v3805 = vadd.f32 %v3762, %v1073
  %v3806 = vadd.f32 %v3765, %v1078
  %v3807 = vadd.f32 %v3768, %v1083
  %v3808 = vadd.f32 %v3771, %v1088
  %v3809 = vadd.f32 %v3774, %v1093
  %v3810 = vadd.f32 %v3777, %v1098
  %v3811 = vsel %vm2206, %v3779, -inf
  %v3812 = vsel %vm2206, %v3780, -inf
  %v3813 = vmax.f32 %v3811, %v3812
  %v3814 = vrot.slane %v3813, 4
  %v3815 = vmax.f32 %v3813, %v3814
  %v3816 = vrot.slane %v3815, 2
  %v3817 = vmax.f32 %v3815, %v3816
  %v3818 = vrot.slane %v3817, 1
  %v3819 = vmax.f32 %v3817, %v3818
  %v3820 = vsel %vm2206, %v3781, -inf
  %v3821 = vsel %vm2206, %v3782, -inf
  %v3822 = vmax.f32 %v3820, %v3821
  %v3823 = vrot.slane %v3822, 4
  %v3824 = vmax.f32 %v3822, %v3823
  %v3825 = vrot.slane %v3824, 2
  %v3826 = vmax.f32 %v3824, %v3825
  %v3827 = vrot.slane %v3826, 1
  %v3828 = vmax.f32 %v3826, %v3827
  %v3829 = vsel %vm2206, %v3783, -inf
  %v3830 = vsel %vm2206, %v3784, -inf
  %v3831 = vmax.f32 %v3829, %v3830
  %v3832 = vrot.slane %v3831, 4
  %v3833 = vmax.f32 %v3831, %v3832
  %v3834 = vrot.slane %v3833, 2
  %v3835 = vmax.f32 %v3833, %v3834
  %v3836 = vrot.slane %v3835, 1
  %v3837 = vmax.f32 %v3835, %v3836
  %v3838 = vsel %vm2206, %v3785, -inf
  %v3839 = vsel %vm2206, %v3786, -inf
  %v3840 = vmax.f32 %v3838, %v3839
  %v3841 = vrot.slane %v3840, 4
  %v3842 = vmax.f32 %v3840, %v3841
  %v3843 = vrot.slane %v3842, 2
  %v3844 = vmax.f32 %v3842, %v3843
  %v3845 = vrot.slane %v3844, 1
  %v3846 = vmax.f32 %v3844, %v3845
  %v3847 = vsel %vm2206, %v3787, -inf
  %v3848 = vsel %vm2206, %v3788, -inf
  %v3849 = vmax.f32 %v3847, %v3848
  %v3850 = vrot.slane %v3849, 4
  %v3851 = vmax.f32 %v3849, %v3850
  %v3852 = vrot.slane %v3851, 2
  %v3853 = vmax.f32 %v3851, %v3852
  %v3854 = vrot.slane %v3853, 1
  %v3855 = vmax.f32 %v3853, %v3854
  %v3856 = vsel %vm2206, %v3789, -inf
  %v3857 = vsel %vm2206, %v3790, -inf
  %v3858 = vmax.f32 %v3856, %v3857
  %v3859 = vrot.slane %v3858, 4
  %v3860 = vmax.f32 %v3858, %v3859
  %v3861 = vrot.slane %v3860, 2
  %v3862 = vmax.f32 %v3860, %v3861
  %v3863 = vrot.slane %v3862, 1
  %v3864 = vmax.f32 %v3862, %v3863
  %v3865 = vsel %vm2206, %v3791, -inf
  %v3866 = vsel %vm2206, %v3792, -inf
  %v3867 = vmax.f32 %v3865, %v3866
  %v3868 = vrot.slane %v3867, 4
  %v3869 = vmax.f32 %v3867, %v3868
  %v3870 = vrot.slane %v3869, 2
  %v3871 = vmax.f32 %v3869, %v3870
  %v3872 = vrot.slane %v3871, 1
  %v3873 = vmax.f32 %v3871, %v3872
  %v3874 = vsel %vm2206, %v3793, -inf
  %v3875 = vsel %vm2206, %v3794, -inf
  %v3876 = vmax.f32 %v3874, %v3875
  %v3877 = vrot.slane %v3876, 4
  %v3878 = vmax.f32 %v3876, %v3877
  %v3879 = vrot.slane %v3878, 2
  %v3880 = vmax.f32 %v3878, %v3879
  %v3881 = vrot.slane %v3880, 1
  %v3882 = vmax.f32 %v3880, %v3881
  %v3883 = vsel %vm2206, %v3795, -inf
  %v3884 = vsel %vm2206, %v3796, -inf
  %v3885 = vmax.f32 %v3883, %v3884
  %v3886 = vrot.slane %v3885, 4
  %v3887 = vmax.f32 %v3885, %v3886
  %v3888 = vrot.slane %v3887, 2
  %v3889 = vmax.f32 %v3887, %v3888
  %v3890 = vrot.slane %v3889, 1
  %v3891 = vmax.f32 %v3889, %v3890
  %v3892 = vsel %vm2206, %v3797, -inf
  %v3893 = vsel %vm2206, %v3798, -inf
  %v3894 = vmax.f32 %v3892, %v3893
  %v3895 = vrot.slane %v3894, 4
  %v3896 = vmax.f32 %v3894, %v3895
  %v3897 = vrot.slane %v3896, 2
  %v3898 = vmax.f32 %v3896, %v3897
  %v3899 = vrot.slane %v3898, 1
  %v3900 = vmax.f32 %v3898, %v3899
  %v3901 = vsel %vm2206, %v3799, -inf
  %v3902 = vsel %vm2206, %v3800, -inf
  %v3903 = vmax.f32 %v3901, %v3902
  %v3904 = vrot.slane %v3903, 4
  %v3905 = vmax.f32 %v3903, %v3904
  %v3906 = vrot.slane %v3905, 2
  %v3907 = vmax.f32 %v3905, %v3906
  %v3908 = vrot.slane %v3907, 1
  %v3909 = vmax.f32 %v3907, %v3908
  %v3910 = vsel %vm2206, %v3801, -inf
  %v3911 = vsel %vm2206, %v3802, -inf
  %v3912 = vmax.f32 %v3910, %v3911
  %v3913 = vrot.slane %v3912, 4
  %v3914 = vmax.f32 %v3912, %v3913
  %v3915 = vrot.slane %v3914, 2
  %v3916 = vmax.f32 %v3914, %v3915
  %v3917 = vrot.slane %v3916, 1
  %v3918 = vmax.f32 %v3916, %v3917
  %v3919 = vsel %vm2206, %v3803, -inf
  %v3920 = vsel %vm2206, %v3804, -inf
  %v3921 = vmax.f32 %v3919, %v3920
  %v3922 = vrot.slane %v3921, 4
  %v3923 = vmax.f32 %v3921, %v3922
  %v3924 = vrot.slane %v3923, 2
  %v3925 = vmax.f32 %v3923, %v3924
  %v3926 = vrot.slane %v3925, 1
  %v3927 = vmax.f32 %v3925, %v3926
  %v3928 = vsel %vm2206, %v3805, -inf
  %v3929 = vsel %vm2206, %v3806, -inf
  %v3930 = vmax.f32 %v3928, %v3929
  %v3931 = vrot.slane %v3930, 4
  %v3932 = vmax.f32 %v3930, %v3931
  %v3933 = vrot.slane %v3932, 2
  %v3934 = vmax.f32 %v3932, %v3933
  %v3935 = vrot.slane %v3934, 1
  %v3936 = vmax.f32 %v3934, %v3935
  %v3937 = vsel %vm2206, %v3807, -inf
  %v3938 = vsel %vm2206, %v3808, -inf
  %v3939 = vmax.f32 %v3937, %v3938
  %v3940 = vrot.slane %v3939, 4
  %v3941 = vmax.f32 %v3939, %v3940
  %v3942 = vrot.slane %v3941, 2
  %v3943 = vmax.f32 %v3941, %v3942
  %v3944 = vrot.slane %v3943, 1
  %v3945 = vmax.f32 %v3943, %v3944
  %v3946 = vsel %vm2206, %v3809, -inf
  %v3947 = vsel %vm2206, %v3810, -inf
  %v3948 = vmax.f32 %v3946, %v3947
  %v3949 = vrot.slane %v3948, 4
  %v3950 = vmax.f32 %v3948, %v3949
  %v3951 = vrot.slane %v3950, 2
  %v3952 = vmax.f32 %v3950, %v3951
  %v3953 = vrot.slane %v3952, 1
  %v3954 = vmax.f32 %v3952, %v3953
  %v3955 = vsub.f32 %v3779, %v3819
  %v3956 = vsub.f32 %v3780, %v3819
  %v3957 = vsub.f32 %v3781, %v3828
  %v3958 = vsub.f32 %v3782, %v3828
  %v3959 = vsub.f32 %v3783, %v3837
  %v3960 = vsub.f32 %v3784, %v3837
  %v3961 = vsub.f32 %v3785, %v3846
  %v3962 = vsub.f32 %v3786, %v3846
  %v3963 = vsub.f32 %v3787, %v3855
  %v3964 = vsub.f32 %v3788, %v3855
  %v3965 = vsub.f32 %v3789, %v3864
  %v3966 = vsub.f32 %v3790, %v3864
  %v3967 = vsub.f32 %v3791, %v3873
  %v3968 = vsub.f32 %v3792, %v3873
  %v3969 = vsub.f32 %v3793, %v3882
  %v3970 = vsub.f32 %v3794, %v3882
  %v3971 = vsub.f32 %v3795, %v3891
  %v3972 = vsub.f32 %v3796, %v3891
  %v3973 = vsub.f32 %v3797, %v3900
  %v3974 = vsub.f32 %v3798, %v3900
  %v3975 = vsub.f32 %v3799, %v3909
  %v3976 = vsub.f32 %v3800, %v3909
  %v3977 = vsub.f32 %v3801, %v3918
  %v3978 = vsub.f32 %v3802, %v3918
  %v3979 = vsub.f32 %v3803, %v3927
  %v3980 = vsub.f32 %v3804, %v3927
  %v3981 = vsub.f32 %v3805, %v3936
  %v3982 = vsub.f32 %v3806, %v3936
  %v3983 = vsub.f32 %v3807, %v3945
  %v3984 = vsub.f32 %v3808, %v3945
  %v3985 = vsub.f32 %v3809, %v3954
  %v3986 = vsub.f32 %v3810, %v3954
  %v3987 = vmul.f32 %v3955, 1.442695
  %v3988 = vpow.pop %v3987
  %v3989 = vmul.f32 %v3956, 1.442695
  %v3990 = vpow.pop %v3989
  %v3991 = vmul.f32 %v3957, 1.442695
  %v3992 = vpow.pop %v3991
  %v3993 = vmul.f32 %v3958, 1.442695
  %v3994 = vpow.pop %v3993
  %v3995 = vmul.f32 %v3959, 1.442695
  %v3996 = vpow.pop %v3995
  %v3997 = vmul.f32 %v3960, 1.442695
  %v3998 = vpow.pop %v3997
  %v3999 = vmul.f32 %v3961, 1.442695
  %v4000 = vpow.pop %v3999
  %v4001 = vmul.f32 %v3962, 1.442695
  %v4002 = vpow.pop %v4001
  %v4003 = vmul.f32 %v3963, 1.442695
  %v4004 = vpow.pop %v4003
  %v4005 = vmul.f32 %v3964, 1.442695
  %v4006 = vpow.pop %v4005
  %v4007 = vmul.f32 %v3965, 1.442695
  %v4008 = vpow.pop %v4007
  %v4009 = vmul.f32 %v3966, 1.442695
  %v4010 = vpow.pop %v4009
  %v4011 = vmul.f32 %v3967, 1.442695
  %v4012 = vpow.pop %v4011
  %v4013 = vmul.f32 %v3968, 1.442695
  %v4014 = vpow.pop %v4013
  %v4015 = vmul.f32 %v3969, 1.442695
  %v4016 = vpow.pop %v4015
  %v4017 = vmul.f32 %v3970, 1.442695
  %v4018 = vpow.pop %v4017
  %v4019 = vmul.f32 %v3971, 1.442695
  %v4020 = vpow.pop %v4019
  %v4021 = vmul.f32 %v3972, 1.442695
  %v4022 = vpow.pop %v4021
  %v4023 = vmul.f32 %v3973, 1.442695
  %v4024 = vpow.pop %v4023
  %v4025 = vmul.f32 %v3974, 1.442695
  %v4026 = vpow.pop %v4025
  %v4027 = vmul.f32 %v3975, 1.442695
  %v4028 = vpow.pop %v4027
  %v4029 = vmul.f32 %v3976, 1.442695
  %v4030 = vpow.pop %v4029
  %v4031 = vmul.f32 %v3977, 1.442695
  %v4032 = vpow.pop %v4031
  %v4033 = vmul.f32 %v3978, 1.442695
  %v4034 = vpow.pop %v4033
  %v4035 = vmul.f32 %v3979, 1.442695
  %v4036 = vpow.pop %v4035
  %v4037 = vmul.f32 %v3980, 1.442695
  %v4038 = vpow.pop %v4037
  %v4039 = vmul.f32 %v3981, 1.442695
  %v4040 = vpow.pop %v4039
  %v4041 = vmul.f32 %v3982, 1.442695
  %v4042 = vpow.pop %v4041
  %v4043 = vmul.f32 %v3983, 1.442695
  %v4044 = vpow.pop %v4043
  %v4045 = vmul.f32 %v3984, 1.442695
  %v4046 = vpow.pop %v4045
  %v4047 = vmul.f32 %v3985, 1.442695
  %v4048 = vpow.pop %v4047
  %v4049 = vmul.f32 %v3986, 1.442695
  %v4050 = vpow.pop %v4049
  %v4051 = vsel %vm2206, %v3988, 0.0
  %v4052 = vsel %vm2206, %v3990, 0.0
  %v4053 = vadd.f32 %v4051, %v4052
  %v4054 = vrot.slane %v4053, 4
  %v4055 = vadd.f32 %v4053, %v4054
  %v4056 = vrot.slane %v4055, 2
  %v4057 = vadd.f32 %v4055, %v4056
  %v4058 = vrot.slane %v4057, 1
  %v4059 = vadd.f32 %v4057, %v4058
  %v4060 = vsel %vm2206, %v3992, 0.0
  %v4061 = vsel %vm2206, %v3994, 0.0
  %v4062 = vadd.f32 %v4060, %v4061
  %v4063 = vrot.slane %v4062, 4
  %v4064 = vadd.f32 %v4062, %v4063
  %v4065 = vrot.slane %v4064, 2
  %v4066 = vadd.f32 %v4064, %v4065
  %v4067 = vrot.slane %v4066, 1
  %v4068 = vadd.f32 %v4066, %v4067
  %v4069 = vsel %vm2206, %v3996, 0.0
  %v4070 = vsel %vm2206, %v3998, 0.0
  %v4071 = vadd.f32 %v4069, %v4070
  %v4072 = vrot.slane %v4071, 4
  %v4073 = vadd.f32 %v4071, %v4072
  %v4074 = vrot.slane %v4073, 2
  %v4075 = vadd.f32 %v4073, %v4074
  %v4076 = vrot.slane %v4075, 1
  %v4077 = vadd.f32 %v4075, %v4076
  %v4078 = vsel %vm2206, %v4000, 0.0
  %v4079 = vsel %vm2206, %v4002, 0.0
  %v4080 = vadd.f32 %v4078, %v4079
  %v4081 = vrot.slane %v4080, 4
  %v4082 = vadd.f32 %v4080, %v4081
  %v4083 = vrot.slane %v4082, 2
  %v4084 = vadd.f32 %v4082, %v4083
  %v4085 = vrot.slane %v4084, 1
  %v4086 = vadd.f32 %v4084, %v4085
  %v4087 = vsel %vm2206, %v4004, 0.0
  %v4088 = vsel %vm2206, %v4006, 0.0
  %v4089 = vadd.f32 %v4087, %v4088
  %v4090 = vrot.slane %v4089, 4
  %v4091 = vadd.f32 %v4089, %v4090
  %v4092 = vrot.slane %v4091, 2
  %v4093 = vadd.f32 %v4091, %v4092
  %v4094 = vrot.slane %v4093, 1
  %v4095 = vadd.f32 %v4093, %v4094
  %v4096 = vsel %vm2206, %v4008, 0.0
  %v4097 = vsel %vm2206, %v4010, 0.0
  %v4098 = vadd.f32 %v4096, %v4097
  %v4099 = vrot.slane %v4098, 4
  %v4100 = vadd.f32 %v4098, %v4099
  %v4101 = vrot.slane %v4100, 2
  %v4102 = vadd.f32 %v4100, %v4101
  %v4103 = vrot.slane %v4102, 1
  %v4104 = vadd.f32 %v4102, %v4103
  %v4105 = vsel %vm2206, %v4012, 0.0
  %v4106 = vsel %vm2206, %v4014, 0.0
  %v4107 = vadd.f32 %v4105, %v4106
  %v4108 = vrot.slane %v4107, 4
  %v4109 = vadd.f32 %v4107, %v4108
  %v4110 = vrot.slane %v4109, 2
  %v4111 = vadd.f32 %v4109, %v4110
  %v4112 = vrot.slane %v4111, 1
  %v4113 = vadd.f32 %v4111, %v4112
  %v4114 = vsel %vm2206, %v4016, 0.0
  %v4115 = vsel %vm2206, %v4018, 0.0
  %v4116 = vadd.f32 %v4114, %v4115
  %v4117 = vrot.slane %v4116, 4
  %v4118 = vadd.f32 %v4116, %v4117
  %v4119 = vrot.slane %v4118, 2
  %v4120 = vadd.f32 %v4118, %v4119
  %v4121 = vrot.slane %v4120, 1
  %v4122 = vadd.f32 %v4120, %v4121
  %v4123 = vsel %vm2206, %v4020, 0.0
  %v4124 = vsel %vm2206, %v4022, 0.0
  %v4125 = vadd.f32 %v4123, %v4124
  %v4126 = vrot.slane %v4125, 4
  %v4127 = vadd.f32 %v4125, %v4126
  %v4128 = vrot.slane %v4127, 2
  %v4129 = vadd.f32 %v4127, %v4128
  %v4130 = vrot.slane %v4129, 1
  %v4131 = vadd.f32 %v4129, %v4130
  %v4132 = vsel %vm2206, %v4024, 0.0
  %v4133 = vsel %vm2206, %v4026, 0.0
  %v4134 = vadd.f32 %v4132, %v4133
  %v4135 = vrot.slane %v4134, 4
  %v4136 = vadd.f32 %v4134, %v4135
  %v4137 = vrot.slane %v4136, 2
  %v4138 = vadd.f32 %v4136, %v4137
  %v4139 = vrot.slane %v4138, 1
  %v4140 = vadd.f32 %v4138, %v4139
  %v4141 = vsel %vm2206, %v4028, 0.0
  %v4142 = vsel %vm2206, %v4030, 0.0
  %v4143 = vadd.f32 %v4141, %v4142
  %v4144 = vrot.slane %v4143, 4
  %v4145 = vadd.f32 %v4143, %v4144
  %v4146 = vrot.slane %v4145, 2
  %v4147 = vadd.f32 %v4145, %v4146
  %v4148 = vrot.slane %v4147, 1
  %v4149 = vadd.f32 %v4147, %v4148
  %v4150 = vsel %vm2206, %v4032, 0.0
  %v4151 = vsel %vm2206, %v4034, 0.0
  %v4152 = vadd.f32 %v4150, %v4151
  %v4153 = vrot.slane %v4152, 4
  %v4154 = vadd.f32 %v4152, %v4153
  %v4155 = vrot.slane %v4154, 2
  %v4156 = vadd.f32 %v4154, %v4155
  %v4157 = vrot.slane %v4156, 1
  %v4158 = vadd.f32 %v4156, %v4157
  %v4159 = vsel %vm2206, %v4036, 0.0
  %v4160 = vsel %vm2206, %v4038, 0.0
  %v4161 = vadd.f32 %v4159, %v4160
  %v4162 = vrot.slane %v4161, 4
  %v4163 = vadd.f32 %v4161, %v4162
  %v4164 = vrot.slane %v4163, 2
  %v4165 = vadd.f32 %v4163, %v4164
  %v4166 = vrot.slane %v4165, 1
  %v4167 = vadd.f32 %v4165, %v4166
  %v4168 = vsel %vm2206, %v4040, 0.0
  %v4169 = vsel %vm2206, %v4042, 0.0
  %v4170 = vadd.f32 %v4168, %v4169
  %v4171 = vrot.slane %v4170, 4
  %v4172 = vadd.f32 %v4170, %v4171
  %v4173 = vrot.slane %v4172, 2
  %v4174 = vadd.f32 %v4172, %v4173
  %v4175 = vrot.slane %v4174, 1
  %v4176 = vadd.f32 %v4174, %v4175
  %v4177 = vsel %vm2206, %v4044, 0.0
  %v4178 = vsel %vm2206, %v4046, 0.0
  %v4179 = vadd.f32 %v4177, %v4178
  %v4180 = vrot.slane %v4179, 4
  %v4181 = vadd.f32 %v4179, %v4180
  %v4182 = vrot.slane %v4181, 2
  %v4183 = vadd.f32 %v4181, %v4182
  %v4184 = vrot.slane %v4183, 1
  %v4185 = vadd.f32 %v4183, %v4184
  %v4186 = vsel %vm2206, %v4048, 0.0
  %v4187 = vsel %vm2206, %v4050, 0.0
  %v4188 = vadd.f32 %v4186, %v4187
  %v4189 = vrot.slane %v4188, 4
  %v4190 = vadd.f32 %v4188, %v4189
  %v4191 = vrot.slane %v4190, 2
  %v4192 = vadd.f32 %v4190, %v4191
  %v4193 = vrot.slane %v4192, 1
  %v4194 = vadd.f32 %v4192, %v4193
  %v4195 = vrcp.pop %v4059
  %v4196 = vrcp.pop %v4068
  %v4197 = vrcp.pop %v4077
  %v4198 = vrcp.pop %v4086
  %v4199 = vrcp.pop %v4095
  %v4200 = vrcp.pop %v4104
  %v4201 = vrcp.pop %v4113
  %v4202 = vrcp.pop %v4122
  %v4203 = vrcp.pop %v4131
  %v4204 = vrcp.pop %v4140
  %v4205 = vrcp.pop %v4149
  %v4206 = vrcp.pop %v4158
  %v4207 = vrcp.pop %v4167
  %v4208 = vrcp.pop %v4176
  %v4209 = vrcp.pop %v4185
  %v4210 = vrcp.pop %v4194
  %v4211 = vmul.f32 %v3988, %v4195
  %v4212 = vmul.f32 %v3990, %v4195
  %v4213 = vmul.f32 %v3992, %v4196
  %v4214 = vmul.f32 %v3994, %v4196
  %v4215 = vmul.f32 %v3996, %v4197
  %v4216 = vmul.f32 %v3998, %v4197
  %v4217 = vmul.f32 %v4000, %v4198
  %v4218 = vmul.f32 %v4002, %v4198
  %v4219 = vmul.f32 %v4004, %v4199
  %v4220 = vmul.f32 %v4006, %v4199
  %v4221 = vmul.f32 %v4008, %v4200
  %v4222 = vmul.f32 %v4010, %v4200
  %v4223 = vmul.f32 %v4012, %v4201
  %v4224 = vmul.f32 %v4014, %v4201
  %v4225 = vmul.f32 %v4016, %v4202
  %v4226 = vmul.f32 %v4018, %v4202
  %v4227 = vmul.f32 %v4020, %v4203
  %v4228 = vmul.f32 %v4022, %v4203
  %v4229 = vmul.f32 %v4024, %v4204
  %v4230 = vmul.f32 %v4026, %v4204
  %v4231 = vmul.f32 %v4028, %v4205
  %v4232 = vmul.f32 %v4030, %v4205
  %v4233 = vmul.f32 %v4032, %v4206
  %v4234 = vmul.f32 %v4034, %v4206
  %v4235 = vmul.f32 %v4036, %v4207
  %v4236 = vmul.f32 %v4038, %v4207
  %v4237 = vmul.f32 %v4040, %v4208
  %v4238 = vmul.f32 %v4042, %v4208
  %v4239 = vmul.f32 %v4044, %v4209
  %v4240 = vmul.f32 %v4046, %v4209
  %v4241 = vmul.f32 %v4048, %v4210
  %v4242 = vmul.f32 %v4050, %v4210
  %v4243 = vmul.f32 %v4211, %v3209
  %v4244 = vmul.f32 %v4212, %v3212
  %v4245 = vmul.f32 %v4213, %v3209
  %v4246 = vmul.f32 %v4214, %v3212
  %v4247 = vmul.f32 %v4215, %v3209
  %v4248 = vmul.f32 %v4216, %v3212
  %v4249 = vmul.f32 %v4217, %v3209
  %v4250 = vmul.f32 %v4218, %v3212
  %v4251 = vmul.f32 %v4219, %v3209
  %v4252 = vmul.f32 %v4220, %v3212
  %v4253 = vmul.f32 %v4221, %v3209
  %v4254 = vmul.f32 %v4222, %v3212
  %v4255 = vmul.f32 %v4223, %v3209
  %v4256 = vmul.f32 %v4224, %v3212
  %v4257 = vmul.f32 %v4225, %v3209
  %v4258 = vmul.f32 %v4226, %v3212
  %v4259 = vmul.f32 %v4227, %v3209
  %v4260 = vmul.f32 %v4228, %v3212
  %v4261 = vmul.f32 %v4229, %v3209
  %v4262 = vmul.f32 %v4230, %v3212
  %v4263 = vmul.f32 %v4231, %v3209
  %v4264 = vmul.f32 %v4232, %v3212
  %v4265 = vmul.f32 %v4233, %v3209
  %v4266 = vmul.f32 %v4234, %v3212
  %v4267 = vmul.f32 %v4235, %v3209
  %v4268 = vmul.f32 %v4236, %v3212
  %v4269 = vmul.f32 %v4237, %v3209
  %v4270 = vmul.f32 %v4238, %v3212
  %v4271 = vmul.f32 %v4239, %v3209
  %v4272 = vmul.f32 %v4240, %v3212
  %v4273 = vmul.f32 %v4241, %v3209
  %v4274 = vmul.f32 %v4242, %v3212
  %v4275 = vsel %vm2206, %v4243, 0.0
  %v4276 = vsel %vm2206, %v4244, 0.0
  %v4277 = vadd.f32 %v4275, %v4276
  %v4278 = vrot.slane %v4277, 4
  %v4279 = vadd.f32 %v4277, %v4278
  %v4280 = vrot.slane %v4279, 2
  %v4281 = vadd.f32 %v4279, %v4280
  %v4282 = vrot.slane %v4281, 1
  %v4283 = vadd.f32 %v4281, %v4282
  %v4284 = vsel %vm2206, %v4245, 0.0
  %v4285 = vsel %vm2206, %v4246, 0.0
  %v4286 = vadd.f32 %v4284, %v4285
  %v4287 = vrot.slane %v4286, 4
  %v4288 = vadd.f32 %v4286, %v4287
  %v4289 = vrot.slane %v4288, 2
  %v4290 = vadd.f32 %v4288, %v4289
  %v4291 = vrot.slane %v4290, 1
  %v4292 = vadd.f32 %v4290, %v4291
  %v4293 = vsel %vm2206, %v4247, 0.0
  %v4294 = vsel %vm2206, %v4248, 0.0
  %v4295 = vadd.f32 %v4293, %v4294
  %v4296 = vrot.slane %v4295, 4
  %v4297 = vadd.f32 %v4295, %v4296
  %v4298 = vrot.slane %v4297, 2
  %v4299 = vadd.f32 %v4297, %v4298
  %v4300 = vrot.slane %v4299, 1
  %v4301 = vadd.f32 %v4299, %v4300
  %v4302 = vsel %vm2206, %v4249, 0.0
  %v4303 = vsel %vm2206, %v4250, 0.0
  %v4304 = vadd.f32 %v4302, %v4303
  %v4305 = vrot.slane %v4304, 4
  %v4306 = vadd.f32 %v4304, %v4305
  %v4307 = vrot.slane %v4306, 2
  %v4308 = vadd.f32 %v4306, %v4307
  %v4309 = vrot.slane %v4308, 1
  %v4310 = vadd.f32 %v4308, %v4309
  %v4311 = vsel %vm2206, %v4251, 0.0
  %v4312 = vsel %vm2206, %v4252, 0.0
  %v4313 = vadd.f32 %v4311, %v4312
  %v4314 = vrot.slane %v4313, 4
  %v4315 = vadd.f32 %v4313, %v4314
  %v4316 = vrot.slane %v4315, 2
  %v4317 = vadd.f32 %v4315, %v4316
  %v4318 = vrot.slane %v4317, 1
  %v4319 = vadd.f32 %v4317, %v4318
  %v4320 = vsel %vm2206, %v4253, 0.0
  %v4321 = vsel %vm2206, %v4254, 0.0
  %v4322 = vadd.f32 %v4320, %v4321
  %v4323 = vrot.slane %v4322, 4
  %v4324 = vadd.f32 %v4322, %v4323
  %v4325 = vrot.slane %v4324, 2
  %v4326 = vadd.f32 %v4324, %v4325
  %v4327 = vrot.slane %v4326, 1
  %v4328 = vadd.f32 %v4326, %v4327
  %v4329 = vsel %vm2206, %v4255, 0.0
  %v4330 = vsel %vm2206, %v4256, 0.0
  %v4331 = vadd.f32 %v4329, %v4330
  %v4332 = vrot.slane %v4331, 4
  %v4333 = vadd.f32 %v4331, %v4332
  %v4334 = vrot.slane %v4333, 2
  %v4335 = vadd.f32 %v4333, %v4334
  %v4336 = vrot.slane %v4335, 1
  %v4337 = vadd.f32 %v4335, %v4336
  %v4338 = vsel %vm2206, %v4257, 0.0
  %v4339 = vsel %vm2206, %v4258, 0.0
  %v4340 = vadd.f32 %v4338, %v4339
  %v4341 = vrot.slane %v4340, 4
  %v4342 = vadd.f32 %v4340, %v4341
  %v4343 = vrot.slane %v4342, 2
  %v4344 = vadd.f32 %v4342, %v4343
  %v4345 = vrot.slane %v4344, 1
  %v4346 = vadd.f32 %v4344, %v4345
  %v4347 = vsel %vm2206, %v4259, 0.0
  %v4348 = vsel %vm2206, %v4260, 0.0
  %v4349 = vadd.f32 %v4347, %v4348
  %v4350 = vrot.slane %v4349, 4
  %v4351 = vadd.f32 %v4349, %v4350
  %v4352 = vrot.slane %v4351, 2
  %v4353 = vadd.f32 %v4351, %v4352
  %v4354 = vrot.slane %v4353, 1
  %v4355 = vadd.f32 %v4353, %v4354
  %v4356 = vsel %vm2206, %v4261, 0.0
  %v4357 = vsel %vm2206, %v4262, 0.0
  %v4358 = vadd.f32 %v4356, %v4357
  %v4359 = vrot.slane %v4358, 4
  %v4360 = vadd.f32 %v4358, %v4359
  %v4361 = vrot.slane %v4360, 2
  %v4362 = vadd.f32 %v4360, %v4361
  %v4363 = vrot.slane %v4362, 1
  %v4364 = vadd.f32 %v4362, %v4363
  %v4365 = vsel %vm2206, %v4263, 0.0
  %v4366 = vsel %vm2206, %v4264, 0.0
  %v4367 = vadd.f32 %v4365, %v4366
  %v4368 = vrot.slane %v4367, 4
  %v4369 = vadd.f32 %v4367, %v4368
  %v4370 = vrot.slane %v4369, 2
  %v4371 = vadd.f32 %v4369, %v4370
  %v4372 = vrot.slane %v4371, 1
  %v4373 = vadd.f32 %v4371, %v4372
  %v4374 = vsel %vm2206, %v4265, 0.0
  %v4375 = vsel %vm2206, %v4266, 0.0
  %v4376 = vadd.f32 %v4374, %v4375
  %v4377 = vrot.slane %v4376, 4
  %v4378 = vadd.f32 %v4376, %v4377
  %v4379 = vrot.slane %v4378, 2
  %v4380 = vadd.f32 %v4378, %v4379
  %v4381 = vrot.slane %v4380, 1
  %v4382 = vadd.f32 %v4380, %v4381
  %v4383 = vsel %vm2206, %v4267, 0.0
  %v4384 = vsel %vm2206, %v4268, 0.0
  %v4385 = vadd.f32 %v4383, %v4384
  %v4386 = vrot.slane %v4385, 4
  %v4387 = vadd.f32 %v4385, %v4386
  %v4388 = vrot.slane %v4387, 2
  %v4389 = vadd.f32 %v4387, %v4388
  %v4390 = vrot.slane %v4389, 1
  %v4391 = vadd.f32 %v4389, %v4390
  %v4392 = vsel %vm2206, %v4269, 0.0
  %v4393 = vsel %vm2206, %v4270, 0.0
  %v4394 = vadd.f32 %v4392, %v4393
  %v4395 = vrot.slane %v4394, 4
  %v4396 = vadd.f32 %v4394, %v4395
  %v4397 = vrot.slane %v4396, 2
  %v4398 = vadd.f32 %v4396, %v4397
  %v4399 = vrot.slane %v4398, 1
  %v4400 = vadd.f32 %v4398, %v4399
  %v4401 = vsel %vm2206, %v4271, 0.0
  %v4402 = vsel %vm2206, %v4272, 0.0
  %v4403 = vadd.f32 %v4401, %v4402
  %v4404 = vrot.slane %v4403, 4
  %v4405 = vadd.f32 %v4403, %v4404
  %v4406 = vrot.slane %v4405, 2
  %v4407 = vadd.f32 %v4405, %v4406
  %v4408 = vrot.slane %v4407, 1
  %v4409 = vadd.f32 %v4407, %v4408
  %v4410 = vsel %vm2206, %v4273, 0.0
  %v4411 = vsel %vm2206, %v4274, 0.0
  %v4412 = vadd.f32 %v4410, %v4411
  %v4413 = vrot.slane %v4412, 4
  %v4414 = vadd.f32 %v4412, %v4413
  %v4415 = vrot.slane %v4414, 2
  %v4416 = vadd.f32 %v4414, %v4415
  %v4417 = vrot.slane %v4416, 1
  %v4418 = vadd.f32 %v4416, %v4417
  %v4420 = vperm.slane %v3136, 0
  %v4422 = vadd.f32 %v4283, %v4420
  %v4423 = vadd.f32 %v4292, %v4420
  %v4424 = vadd.f32 %v4301, %v4420
  %v4425 = vadd.f32 %v4310, %v4420
  %v4426 = vadd.f32 %v4319, %v4420
  %v4427 = vadd.f32 %v4328, %v4420
  %v4428 = vadd.f32 %v4337, %v4420
  %v4429 = vadd.f32 %v4346, %v4420
  %v4430 = vadd.f32 %v4355, %v4420
  %v4431 = vadd.f32 %v4364, %v4420
  %v4432 = vadd.f32 %v4373, %v4420
  %v4433 = vadd.f32 %v4382, %v4420
  %v4434 = vadd.f32 %v4391, %v4420
  %v4435 = vadd.f32 %v4400, %v4420
  %v4436 = vadd.f32 %v4409, %v4420
  %v4437 = vadd.f32 %v4418, %v4420
  %v4438 = vld [vmem:[%s53] sm:$0xff]
  %v4439 = vld [vmem:[%s53 + $0x8] sm:$0x7f]
  %v4440 = vld [vmem:[%s55] sm:$0x1]
  %v4441 = vld [vmem:[%s57] sm:$0xff]
  %v4442 = vld [vmem:[%s57 + $0x8] sm:$0x7f]
  %v4443 = vld [vmem:[%s59] sm:$0x1]
  %v4444 = vld [vmem:[%s61] sm:$0xf]
  %v4445 = vld [vmem:[%s63] sm:$0xff]
  %v4446 = vld [vmem:[%s63 + $0x8] sm:$0x7f]
  %v4447 = vld [vmem:[%s65] sm:$0x1]
  %v4449 = vperm.slane %v4440, 0
  %v4467 = vrot.slane %v4423, 7
  %v4468 = vsel %vm1789, %v4467, %v4422
  %v4469 = vrot.slane %v4424, 6
  %v4470 = vsel %vm1792, %v4469, %v4468
  %v4471 = vrot.slane %v4425, 5
  %v4472 = vsel %vm1795, %v4471, %v4470
  %v4473 = vrot.slane %v4426, 4
  %v4474 = vsel %vm1798, %v4473, %v4472
  %v4475 = vrot.slane %v4427, 3
  %v4476 = vsel %vm1801, %v4475, %v4474
  %v4477 = vrot.slane %v4428, 2
  %v4478 = vsel %vm1804, %v4477, %v4476
  %v4479 = vrot.slane %v4429, 1
  %v4480 = vsel %vm1807, %v4479, %v4478
  %v4481 = vrot.slane %v4431, 7
  %v4482 = vsel %vm1789, %v4481, %v4430
  %v4483 = vrot.slane %v4432, 6
  %v4484 = vsel %vm1792, %v4483, %v4482
  %v4485 = vrot.slane %v4433, 5
  %v4486 = vsel %vm1795, %v4485, %v4484
  %v4487 = vrot.slane %v4434, 4
  %v4488 = vsel %vm1798, %v4487, %v4486
  %v4489 = vrot.slane %v4435, 3
  %v4490 = vsel %vm1801, %v4489, %v4488
  %v4491 = vrot.slane %v4436, 2
  %v4492 = vsel %vm1804, %v4491, %v4490
  %v4493 = vrot.slane %v4437, 1
  %v4494 = vsel %vm1807, %v4493, %v4492
  %v4495 = vsel %vm2206, %v4480, 0
  %v4497 = vsel %vm2206, %v4494, 0
  %v4500 = vsel %vm2303, %v4439, 0
  %4502 = vmatpush.msra.mxu0 0.0
  %4503 = vmatpush.msra.mxu0 0.0
  %4504 = vmatpush.msra.mxu0 0.0
  %4505 = vmatpush.msra.mxu0 0.0
  %4506 = vmatpush.msra.mxu0 0.0
  %4507 = vmatpush.msra.mxu0 0.0
  %4508 = vmatpush.msra.mxu0 0.0
  %4509 = vmatpush.msra.mxu0 0.0
  %4510 = vmatpush.msra.mxu0 0.0
  %4511 = vmatpush.msra.mxu0 0.0
  %4512 = vmatpush.msra.mxu0 0.0
  %4513 = vmatpush.msra.mxu0 0.0
  %4514 = vmatpush.msra.mxu0 0.0
  %4515 = vmatpush.msra.mxu0 0.0
  %4516 = vmatpush.msra.mxu0 %v4500
  %4517 = vmatpush.msra.mxu0 %v4438
  %4518 = vmatmul.f32.gmra.mxu0 %v4495
  %v4519 = vpop.f32.mrf.mxu0
  %v4520 = vadd.f32 %v4449, %v4519
  %4521 = vmatmul.f32.gmra.mxu0 %v4497
  %v4522 = vpop.f32.mrf.mxu0
  %v4523 = vadd.f32 %v4449, %v4522
  %4524 = vdwg.mxu0
  %v4526 = vperm.slane %v4443, 0
  %v4529 = vsel %vm2303, %v4442, 0
  %4531 = vmatpush.msra.mxu0 0.0
  %4532 = vmatpush.msra.mxu0 0.0
  %4533 = vmatpush.msra.mxu0 0.0
  %4534 = vmatpush.msra.mxu0 0.0
  %4535 = vmatpush.msra.mxu0 0.0
  %4536 = vmatpush.msra.mxu0 0.0
  %4537 = vmatpush.msra.mxu0 0.0
  %4538 = vmatpush.msra.mxu0 0.0
  %4539 = vmatpush.msra.mxu0 0.0
  %4540 = vmatpush.msra.mxu0 0.0
  %4541 = vmatpush.msra.mxu0 0.0
  %4542 = vmatpush.msra.mxu0 0.0
  %4543 = vmatpush.msra.mxu0 0.0
  %4544 = vmatpush.msra.mxu0 0.0
  %4545 = vmatpush.msra.mxu0 %v4529
  %4546 = vmatpush.msra.mxu0 %v4441
  %4547 = vmatmul.f32.gmra.mxu0 %v4495
  %v4548 = vpop.f32.mrf.mxu0
  %v4549 = vadd.f32 %v4526, %v4548
  %4550 = vmatmul.f32.gmra.mxu0 %v4497
  %v4551 = vpop.f32.mrf.mxu0
  %v4552 = vadd.f32 %v4526, %v4551
  %4553 = vdwg.mxu0
  %v4555 = vsel %vm401, %v4444, 0
  %4557 = vmatpush.msra.mxu0 0.0
  %4558 = vmatpush.msra.mxu0 0.0
  %4559 = vmatpush.msra.mxu0 0.0
  %4560 = vmatpush.msra.mxu0 0.0
  %4561 = vmatpush.msra.mxu0 0.0
  %4562 = vmatpush.msra.mxu0 0.0
  %4563 = vmatpush.msra.mxu0 0.0
  %4564 = vmatpush.msra.mxu0 0.0
  %4565 = vmatpush.msra.mxu0 0.0
  %4566 = vmatpush.msra.mxu0 0.0
  %4567 = vmatpush.msra.mxu0 0.0
  %4568 = vmatpush.msra.mxu0 0.0
  %4569 = vmatpush.msra.mxu0 0.0
  %4570 = vmatpush.msra.mxu0 0.0
  %4571 = vmatpush.msra.mxu0 0.0
  %4572 = vmatpush.msra.mxu0 %v4555
  %4573 = vmatmul.f32.gmra.mxu0 %v306
  %v4574 = vpop.f32.mrf.mxu0
  %v4575 = vadd.f32 0.0, %v4574
  %4576 = vmatmul.f32.gmra.mxu0 %v309
  %v4577 = vpop.f32.mrf.mxu0
  %v4578 = vadd.f32 0.0, %v4577
  %4579 = vmatmul.f32.gmra.mxu0 %v312
  %v4580 = vpop.f32.mrf.mxu0
  %v4581 = vadd.f32 0.0, %v4580
  %4582 = vmatmul.f32.gmra.mxu0 %v315
  %v4583 = vpop.f32.mrf.mxu0
  %v4584 = vadd.f32 0.0, %v4583
  %4585 = vmatmul.f32.gmra.mxu0 %v318
  %v4586 = vpop.f32.mrf.mxu0
  %v4587 = vadd.f32 0.0, %v4586
  %4588 = vmatmul.f32.gmra.mxu0 %v321
  %v4589 = vpop.f32.mrf.mxu0
  %v4590 = vadd.f32 0.0, %v4589
  %4591 = vmatmul.f32.gmra.mxu0 %v324
  %v4592 = vpop.f32.mrf.mxu0
  %v4593 = vadd.f32 0.0, %v4592
  %4594 = vmatmul.f32.gmra.mxu0 %v327
  %v4595 = vpop.f32.mrf.mxu0
  %v4596 = vadd.f32 0.0, %v4595
  %4597 = vmatmul.f32.gmra.mxu0 %v330
  %v4598 = vpop.f32.mrf.mxu0
  %v4599 = vadd.f32 0.0, %v4598
  %4600 = vmatmul.f32.gmra.mxu0 %v333
  %v4601 = vpop.f32.mrf.mxu0
  %v4602 = vadd.f32 0.0, %v4601
  %4603 = vmatmul.f32.gmra.mxu0 %v336
  %v4604 = vpop.f32.mrf.mxu0
  %v4605 = vadd.f32 0.0, %v4604
  %4606 = vmatmul.f32.gmra.mxu0 %v339
  %v4607 = vpop.f32.mrf.mxu0
  %v4608 = vadd.f32 0.0, %v4607
  %4609 = vmatmul.f32.gmra.mxu0 %v342
  %v4610 = vpop.f32.mrf.mxu0
  %v4611 = vadd.f32 0.0, %v4610
  %4612 = vmatmul.f32.gmra.mxu0 %v345
  %v4613 = vpop.f32.mrf.mxu0
  %v4614 = vadd.f32 0.0, %v4613
  %4615 = vmatmul.f32.gmra.mxu0 %v348
  %v4616 = vpop.f32.mrf.mxu0
  %v4617 = vadd.f32 0.0, %v4616
  %4618 = vmatmul.f32.gmra.mxu0 %v351
  %v4619 = vpop.f32.mrf.mxu0
  %v4620 = vadd.f32 0.0, %v4619
  %4621 = vmatmul.f32.gmra.mxu0 %v354
  %v4622 = vpop.f32.mrf.mxu0
  %v4623 = vadd.f32 0.0, %v4622
  %4624 = vmatmul.f32.gmra.mxu0 %v357
  %v4625 = vpop.f32.mrf.mxu0
  %v4626 = vadd.f32 0.0, %v4625
  %4627 = vmatmul.f32.gmra.mxu0 %v360
  %v4628 = vpop.f32.mrf.mxu0
  %v4629 = vadd.f32 0.0, %v4628
  %4630 = vmatmul.f32.gmra.mxu0 %v363
  %v4631 = vpop.f32.mrf.mxu0
  %v4632 = vadd.f32 0.0, %v4631
  %4633 = vmatmul.f32.gmra.mxu0 %v366
  %v4634 = vpop.f32.mrf.mxu0
  %v4635 = vadd.f32 0.0, %v4634
  %4636 = vmatmul.f32.gmra.mxu0 %v369
  %v4637 = vpop.f32.mrf.mxu0
  %v4638 = vadd.f32 0.0, %v4637
  %4639 = vmatmul.f32.gmra.mxu0 %v372
  %v4640 = vpop.f32.mrf.mxu0
  %v4641 = vadd.f32 0.0, %v4640
  %4642 = vmatmul.f32.gmra.mxu0 %v375
  %v4643 = vpop.f32.mrf.mxu0
  %v4644 = vadd.f32 0.0, %v4643
  %4645 = vmatmul.f32.gmra.mxu0 %v378
  %v4646 = vpop.f32.mrf.mxu0
  %v4647 = vadd.f32 0.0, %v4646
  %4648 = vmatmul.f32.gmra.mxu0 %v381
  %v4649 = vpop.f32.mrf.mxu0
  %v4650 = vadd.f32 0.0, %v4649
  %4651 = vmatmul.f32.gmra.mxu0 %v384
  %v4652 = vpop.f32.mrf.mxu0
  %v4653 = vadd.f32 0.0, %v4652
  %4654 = vmatmul.f32.gmra.mxu0 %v387
  %v4655 = vpop.f32.mrf.mxu0
  %v4656 = vadd.f32 0.0, %v4655
  %4657 = vmatmul.f32.gmra.mxu0 %v390
  %v4658 = vpop.f32.mrf.mxu0
  %v4659 = vadd.f32 0.0, %v4658
  %4660 = vmatmul.f32.gmra.mxu0 %v393
  %v4661 = vpop.f32.mrf.mxu0
  %v4662 = vadd.f32 0.0, %v4661
  %4663 = vmatmul.f32.gmra.mxu0 %v396
  %v4664 = vpop.f32.mrf.mxu0
  %v4665 = vadd.f32 0.0, %v4664
  %4666 = vmatmul.f32.gmra.mxu0 %v399
  %v4667 = vpop.f32.mrf.mxu0
  %v4668 = vadd.f32 0.0, %v4667
  %4669 = vdwg.mxu0
  %v4672 = vrot.slane %v4549, 1
  %v4673 = vrot.slane %v4549, 2
  %v4674 = vrot.slane %v4549, 3
  %v4675 = vrot.slane %v4549, 4
  %v4676 = vrot.slane %v4549, 5
  %v4677 = vrot.slane %v4549, 6
  %v4678 = vrot.slane %v4549, 7
  %v4679 = vrot.slane %v4552, 1
  %v4680 = vrot.slane %v4552, 2
  %v4681 = vrot.slane %v4552, 3
  %v4682 = vrot.slane %v4552, 4
  %v4683 = vrot.slane %v4552, 5
  %v4684 = vrot.slane %v4552, 6
  %v4685 = vrot.slane %v4552, 7
  %v4686 = vperm.slane %v4549, 0
  %v4687 = vperm.slane %v4672, 0
  %v4688 = vperm.slane %v4673, 0
  %v4689 = vperm.slane %v4674, 0
  %v4690 = vperm.slane %v4675, 0
  %v4691 = vperm.slane %v4676, 0
  %v4692 = vperm.slane %v4677, 0
  %v4693 = vperm.slane %v4678, 0
  %v4694 = vperm.slane %v4552, 0
  %v4695 = vperm.slane %v4679, 0
  %v4696 = vperm.slane %v4680, 0
  %v4697 = vperm.slane %v4681, 0
  %v4698 = vperm.slane %v4682, 0
  %v4699 = vperm.slane %v4683, 0
  %v4700 = vperm.slane %v4684, 0
  %v4701 = vperm.slane %v4685, 0
  %v4718 = vadd.f32 %v4686, %v4520
  %v4719 = vadd.f32 %v4686, %v4523
  %v4720 = vadd.f32 %v4687, %v4520
  %v4721 = vadd.f32 %v4687, %v4523
  %v4722 = vadd.f32 %v4688, %v4520
  %v4723 = vadd.f32 %v4688, %v4523
  %v4724 = vadd.f32 %v4689, %v4520
  %v4725 = vadd.f32 %v4689, %v4523
  %v4726 = vadd.f32 %v4690, %v4520
  %v4727 = vadd.f32 %v4690, %v4523
  %v4728 = vadd.f32 %v4691, %v4520
  %v4729 = vadd.f32 %v4691, %v4523
  %v4730 = vadd.f32 %v4692, %v4520
  %v4731 = vadd.f32 %v4692, %v4523
  %v4732 = vadd.f32 %v4693, %v4520
  %v4733 = vadd.f32 %v4693, %v4523
  %v4734 = vadd.f32 %v4694, %v4520
  %v4735 = vadd.f32 %v4694, %v4523
  %v4736 = vadd.f32 %v4695, %v4520
  %v4737 = vadd.f32 %v4695, %v4523
  %v4738 = vadd.f32 %v4696, %v4520
  %v4739 = vadd.f32 %v4696, %v4523
  %v4740 = vadd.f32 %v4697, %v4520
  %v4741 = vadd.f32 %v4697, %v4523
  %v4742 = vadd.f32 %v4698, %v4520
  %v4743 = vadd.f32 %v4698, %v4523
  %v4744 = vadd.f32 %v4699, %v4520
  %v4745 = vadd.f32 %v4699, %v4523
  %v4746 = vadd.f32 %v4700, %v4520
  %v4747 = vadd.f32 %v4700, %v4523
  %v4748 = vadd.f32 %v4701, %v4520
  %v4749 = vadd.f32 %v4701, %v4523
  %v4750 = vadd.f32 %v4718, %v4575
  %v4751 = vadd.f32 %v4719, %v4578
  %v4752 = vadd.f32 %v4720, %v4581
  %v4753 = vadd.f32 %v4721, %v4584
  %v4754 = vadd.f32 %v4722, %v4587
  %v4755 = vadd.f32 %v4723, %v4590
  %v4756 = vadd.f32 %v4724, %v4593
  %v4757 = vadd.f32 %v4725, %v4596
  %v4758 = vadd.f32 %v4726, %v4599
  %v4759 = vadd.f32 %v4727, %v4602
  %v4760 = vadd.f32 %v4728, %v4605
  %v4761 = vadd.f32 %v4729, %v4608
  %v4762 = vadd.f32 %v4730, %v4611
  %v4763 = vadd.f32 %v4731, %v4614
  %v4764 = vadd.f32 %v4732, %v4617
  %v4765 = vadd.f32 %v4733, %v4620
  %v4766 = vadd.f32 %v4734, %v4623
  %v4767 = vadd.f32 %v4735, %v4626
  %v4768 = vadd.f32 %v4736, %v4629
  %v4769 = vadd.f32 %v4737, %v4632
  %v4770 = vadd.f32 %v4738, %v4635
  %v4771 = vadd.f32 %v4739, %v4638
  %v4772 = vadd.f32 %v4740, %v4641
  %v4773 = vadd.f32 %v4741, %v4644
  %v4774 = vadd.f32 %v4742, %v4647
  %v4775 = vadd.f32 %v4743, %v4650
  %v4776 = vadd.f32 %v4744, %v4653
  %v4777 = vadd.f32 %v4745, %v4656
  %v4778 = vadd.f32 %v4746, %v4659
  %v4779 = vadd.f32 %v4747, %v4662
  %v4780 = vadd.f32 %v4748, %v4665
  %v4781 = vadd.f32 %v4749, %v4668
  %vm4782 = vcmp.gt.f32.partialorder %v4750, 0.0
  %vm4783 = vcmp.gt.f32.partialorder %v4751, 0.0
  %vm4784 = vcmp.gt.f32.partialorder %v4752, 0.0
  %vm4785 = vcmp.gt.f32.partialorder %v4753, 0.0
  %vm4786 = vcmp.gt.f32.partialorder %v4754, 0.0
  %vm4787 = vcmp.gt.f32.partialorder %v4755, 0.0
  %vm4788 = vcmp.gt.f32.partialorder %v4756, 0.0
  %vm4789 = vcmp.gt.f32.partialorder %v4757, 0.0
  %vm4790 = vcmp.gt.f32.partialorder %v4758, 0.0
  %vm4791 = vcmp.gt.f32.partialorder %v4759, 0.0
  %vm4792 = vcmp.gt.f32.partialorder %v4760, 0.0
  %vm4793 = vcmp.gt.f32.partialorder %v4761, 0.0
  %vm4794 = vcmp.gt.f32.partialorder %v4762, 0.0
  %vm4795 = vcmp.gt.f32.partialorder %v4763, 0.0
  %vm4796 = vcmp.gt.f32.partialorder %v4764, 0.0
  %vm4797 = vcmp.gt.f32.partialorder %v4765, 0.0
  %vm4798 = vcmp.gt.f32.partialorder %v4766, 0.0
  %vm4799 = vcmp.gt.f32.partialorder %v4767, 0.0
  %vm4800 = vcmp.gt.f32.partialorder %v4768, 0.0
  %vm4801 = vcmp.gt.f32.partialorder %v4769, 0.0
  %vm4802 = vcmp.gt.f32.partialorder %v4770, 0.0
  %vm4803 = vcmp.gt.f32.partialorder %v4771, 0.0
  %vm4804 = vcmp.gt.f32.partialorder %v4772, 0.0
  %vm4805 = vcmp.gt.f32.partialorder %v4773, 0.0
  %vm4806 = vcmp.gt.f32.partialorder %v4774, 0.0
  %vm4807 = vcmp.gt.f32.partialorder %v4775, 0.0
  %vm4808 = vcmp.gt.f32.partialorder %v4776, 0.0
  %vm4809 = vcmp.gt.f32.partialorder %v4777, 0.0
  %vm4810 = vcmp.gt.f32.partialorder %v4778, 0.0
  %vm4811 = vcmp.gt.f32.partialorder %v4779, 0.0
  %vm4812 = vcmp.gt.f32.partialorder %v4780, 0.0
  %vm4813 = vcmp.gt.f32.partialorder %v4781, 0.0
  %v4814 = vmul.f32 %v4750, 0.2
  %v4815 = vmul.f32 %v4751, 0.2
  %v4816 = vmul.f32 %v4752, 0.2
  %v4817 = vmul.f32 %v4753, 0.2
  %v4818 = vmul.f32 %v4754, 0.2
  %v4819 = vmul.f32 %v4755, 0.2
  %v4820 = vmul.f32 %v4756, 0.2
  %v4821 = vmul.f32 %v4757, 0.2
  %v4822 = vmul.f32 %v4758, 0.2
  %v4823 = vmul.f32 %v4759, 0.2
  %v4824 = vmul.f32 %v4760, 0.2
  %v4825 = vmul.f32 %v4761, 0.2
  %v4826 = vmul.f32 %v4762, 0.2
  %v4827 = vmul.f32 %v4763, 0.2
  %v4828 = vmul.f32 %v4764, 0.2
  %v4829 = vmul.f32 %v4765, 0.2
  %v4830 = vmul.f32 %v4766, 0.2
  %v4831 = vmul.f32 %v4767, 0.2
  %v4832 = vmul.f32 %v4768, 0.2
  %v4833 = vmul.f32 %v4769, 0.2
  %v4834 = vmul.f32 %v4770, 0.2
  %v4835 = vmul.f32 %v4771, 0.2
  %v4836 = vmul.f32 %v4772, 0.2
  %v4837 = vmul.f32 %v4773, 0.2
  %v4838 = vmul.f32 %v4774, 0.2
  %v4839 = vmul.f32 %v4775, 0.2
  %v4840 = vmul.f32 %v4776, 0.2
  %v4841 = vmul.f32 %v4777, 0.2
  %v4842 = vmul.f32 %v4778, 0.2
  %v4843 = vmul.f32 %v4779, 0.2
  %v4844 = vmul.f32 %v4780, 0.2
  %v4845 = vmul.f32 %v4781, 0.2
  %v4846 = vsel %vm4782, %v4750, %v4814
  %v4847 = vsel %vm4783, %v4751, %v4815
  %v4848 = vsel %vm4784, %v4752, %v4816
  %v4849 = vsel %vm4785, %v4753, %v4817
  %v4850 = vsel %vm4786, %v4754, %v4818
  %v4851 = vsel %vm4787, %v4755, %v4819
  %v4852 = vsel %vm4788, %v4756, %v4820
  %v4853 = vsel %vm4789, %v4757, %v4821
  %v4854 = vsel %vm4790, %v4758, %v4822
  %v4855 = vsel %vm4791, %v4759, %v4823
  %v4856 = vsel %vm4792, %v4760, %v4824
  %v4857 = vsel %vm4793, %v4761, %v4825
  %v4858 = vsel %vm4794, %v4762, %v4826
  %v4859 = vsel %vm4795, %v4763, %v4827
  %v4860 = vsel %vm4796, %v4764, %v4828
  %v4861 = vsel %vm4797, %v4765, %v4829
  %v4862 = vsel %vm4798, %v4766, %v4830
  %v4863 = vsel %vm4799, %v4767, %v4831
  %v4864 = vsel %vm4800, %v4768, %v4832
  %v4865 = vsel %vm4801, %v4769, %v4833
  %v4866 = vsel %vm4802, %v4770, %v4834
  %v4867 = vsel %vm4803, %v4771, %v4835
  %v4868 = vsel %vm4804, %v4772, %v4836
  %v4869 = vsel %vm4805, %v4773, %v4837
  %v4870 = vsel %vm4806, %v4774, %v4838
  %v4871 = vsel %vm4807, %v4775, %v4839
  %v4872 = vsel %vm4808, %v4776, %v4840
  %v4873 = vsel %vm4809, %v4777, %v4841
  %v4874 = vsel %vm4810, %v4778, %v4842
  %v4875 = vsel %vm4811, %v4779, %v4843
  %v4876 = vsel %vm4812, %v4780, %v4844
  %v4877 = vsel %vm4813, %v4781, %v4845
  %v4879 = vsel %vm2206, %v4846, 0
  %v4882 = vsel %vm2206, %v4847, 0
  %v4885 = vsel %vm2206, %v4848, 0
  %v4888 = vsel %vm2206, %v4849, 0
  %v4891 = vsel %vm2206, %v4850, 0
  %v4894 = vsel %vm2206, %v4851, 0
  %v4897 = vsel %vm2206, %v4852, 0
  %v4900 = vsel %vm2206, %v4853, 0
  %v4903 = vsel %vm2206, %v4854, 0
  %v4906 = vsel %vm2206, %v4855, 0
  %v4909 = vsel %vm2206, %v4856, 0
  %v4912 = vsel %vm2206, %v4857, 0
  %v4915 = vsel %vm2206, %v4858, 0
  %v4918 = vsel %vm2206, %v4859, 0
  %v4921 = vsel %vm2206, %v4860, 0
  %v4924 = vsel %vm2206, %v4861, 0
  %v4927 = vsel %vm2206, %v4862, 0
  %v4930 = vsel %vm2206, %v4863, 0
  %v4933 = vsel %vm2206, %v4864, 0
  %v4936 = vsel %vm2206, %v4865, 0
  %v4939 = vsel %vm2206, %v4866, 0
  %v4942 = vsel %vm2206, %v4867, 0
  %v4945 = vsel %vm2206, %v4868, 0
  %v4948 = vsel %vm2206, %v4869, 0
  %v4951 = vsel %vm2206, %v4870, 0
  %v4954 = vsel %vm2206, %v4871, 0
  %v4957 = vsel %vm2206, %v4872, 0
  %v4960 = vsel %vm2206, %v4873, 0
  %v4963 = vsel %vm2206, %v4874, 0
  %v4966 = vsel %vm2206, %v4875, 0
  %v4969 = vsel %vm2206, %v4876, 0
  %v4972 = vsel %vm2206, %v4877, 0
  %v4975 = vsel %vm2303, %v4446, 0
  %4977 = vmatpush.msra.mxu0 0.0
  %4978 = vmatpush.msra.mxu0 0.0
  %4979 = vmatpush.msra.mxu0 0.0
  %4980 = vmatpush.msra.mxu0 0.0
  %4981 = vmatpush.msra.mxu0 0.0
  %4982 = vmatpush.msra.mxu0 0.0
  %4983 = vmatpush.msra.mxu0 0.0
  %4984 = vmatpush.msra.mxu0 0.0
  %4985 = vmatpush.msra.mxu0 0.0
  %4986 = vmatpush.msra.mxu0 0.0
  %4987 = vmatpush.msra.mxu0 0.0
  %4988 = vmatpush.msra.mxu0 0.0
  %4989 = vmatpush.msra.mxu0 0.0
  %4990 = vmatpush.msra.mxu0 0.0
  %4991 = vmatpush.msra.mxu0 %v4975
  %4992 = vmatpush.msra.mxu0 %v4445
  %4993 = vmatmul.f32.gmra.mxu0 %v4879
  %v4994 = vpop.f32.mrf.mxu0
  %v4995 = vadd.f32 0.0, %v4994
  %4996 = vmatmul.f32.gmra.mxu0 %v4882
  %v4997 = vpop.f32.mrf.mxu0
  %v4998 = vadd.f32 0.0, %v4997
  %4999 = vmatmul.f32.gmra.mxu0 %v4885
  %v5000 = vpop.f32.mrf.mxu0
  %v5001 = vadd.f32 0.0, %v5000
  %5002 = vmatmul.f32.gmra.mxu0 %v4888
  %v5003 = vpop.f32.mrf.mxu0
  %v5004 = vadd.f32 0.0, %v5003
  %5005 = vmatmul.f32.gmra.mxu0 %v4891
  %v5006 = vpop.f32.mrf.mxu0
  %v5007 = vadd.f32 0.0, %v5006
  %5008 = vmatmul.f32.gmra.mxu0 %v4894
  %v5009 = vpop.f32.mrf.mxu0
  %v5010 = vadd.f32 0.0, %v5009
  %5011 = vmatmul.f32.gmra.mxu0 %v4897
  %v5012 = vpop.f32.mrf.mxu0
  %v5013 = vadd.f32 0.0, %v5012
  %5014 = vmatmul.f32.gmra.mxu0 %v4900
  %v5015 = vpop.f32.mrf.mxu0
  %v5016 = vadd.f32 0.0, %v5015
  %5017 = vmatmul.f32.gmra.mxu0 %v4903
  %v5018 = vpop.f32.mrf.mxu0
  %v5019 = vadd.f32 0.0, %v5018
  %5020 = vmatmul.f32.gmra.mxu0 %v4906
  %v5021 = vpop.f32.mrf.mxu0
  %v5022 = vadd.f32 0.0, %v5021
  %5023 = vmatmul.f32.gmra.mxu0 %v4909
  %v5024 = vpop.f32.mrf.mxu0
  %v5025 = vadd.f32 0.0, %v5024
  %5026 = vmatmul.f32.gmra.mxu0 %v4912
  %v5027 = vpop.f32.mrf.mxu0
  %v5028 = vadd.f32 0.0, %v5027
  %5029 = vmatmul.f32.gmra.mxu0 %v4915
  %v5030 = vpop.f32.mrf.mxu0
  %v5031 = vadd.f32 0.0, %v5030
  %5032 = vmatmul.f32.gmra.mxu0 %v4918
  %v5033 = vpop.f32.mrf.mxu0
  %v5034 = vadd.f32 0.0, %v5033
  %5035 = vmatmul.f32.gmra.mxu0 %v4921
  %v5036 = vpop.f32.mrf.mxu0
  %v5037 = vadd.f32 0.0, %v5036
  %5038 = vmatmul.f32.gmra.mxu0 %v4924
  %v5039 = vpop.f32.mrf.mxu0
  %v5040 = vadd.f32 0.0, %v5039
  %5041 = vmatmul.f32.gmra.mxu0 %v4927
  %v5042 = vpop.f32.mrf.mxu0
  %v5043 = vadd.f32 0.0, %v5042
  %5044 = vmatmul.f32.gmra.mxu0 %v4930
  %v5045 = vpop.f32.mrf.mxu0
  %v5046 = vadd.f32 0.0, %v5045
  %5047 = vmatmul.f32.gmra.mxu0 %v4933
  %v5048 = vpop.f32.mrf.mxu0
  %v5049 = vadd.f32 0.0, %v5048
  %5050 = vmatmul.f32.gmra.mxu0 %v4936
  %v5051 = vpop.f32.mrf.mxu0
  %v5052 = vadd.f32 0.0, %v5051
  %5053 = vmatmul.f32.gmra.mxu0 %v4939
  %v5054 = vpop.f32.mrf.mxu0
  %v5055 = vadd.f32 0.0, %v5054
  %5056 = vmatmul.f32.gmra.mxu0 %v4942
  %v5057 = vpop.f32.mrf.mxu0
  %v5058 = vadd.f32 0.0, %v5057
  %5059 = vmatmul.f32.gmra.mxu0 %v4945
  %v5060 = vpop.f32.mrf.mxu0
  %v5061 = vadd.f32 0.0, %v5060
  %5062 = vmatmul.f32.gmra.mxu0 %v4948
  %v5063 = vpop.f32.mrf.mxu0
  %v5064 = vadd.f32 0.0, %v5063
  %5065 = vmatmul.f32.gmra.mxu0 %v4951
  %v5066 = vpop.f32.mrf.mxu0
  %v5067 = vadd.f32 0.0, %v5066
  %5068 = vmatmul.f32.gmra.mxu0 %v4954
  %v5069 = vpop.f32.mrf.mxu0
  %v5070 = vadd.f32 0.0, %v5069
  %5071 = vmatmul.f32.gmra.mxu0 %v4957
  %v5072 = vpop.f32.mrf.mxu0
  %v5073 = vadd.f32 0.0, %v5072
  %5074 = vmatmul.f32.gmra.mxu0 %v4960
  %v5075 = vpop.f32.mrf.mxu0
  %v5076 = vadd.f32 0.0, %v5075
  %5077 = vmatmul.f32.gmra.mxu0 %v4963
  %v5078 = vpop.f32.mrf.mxu0
  %v5079 = vadd.f32 0.0, %v5078
  %5080 = vmatmul.f32.gmra.mxu0 %v4966
  %v5081 = vpop.f32.mrf.mxu0
  %v5082 = vadd.f32 0.0, %v5081
  %5083 = vmatmul.f32.gmra.mxu0 %v4969
  %v5084 = vpop.f32.mrf.mxu0
  %v5085 = vadd.f32 0.0, %v5084
  %5086 = vmatmul.f32.gmra.mxu0 %v4972
  %v5087 = vpop.f32.mrf.mxu0
  %v5088 = vadd.f32 0.0, %v5087
  %5089 = vdwg.mxu0
  %v5090 = vadd.f32 %v4995, %v943
  %v5091 = vadd.f32 %v4998, %v948
  %v5092 = vadd.f32 %v5001, %v953
  %v5093 = vadd.f32 %v5004, %v958
  %v5094 = vadd.f32 %v5007, %v963
  %v5095 = vadd.f32 %v5010, %v968
  %v5096 = vadd.f32 %v5013, %v973
  %v5097 = vadd.f32 %v5016, %v978
  %v5098 = vadd.f32 %v5019, %v983
  %v5099 = vadd.f32 %v5022, %v988
  %v5100 = vadd.f32 %v5025, %v993
  %v5101 = vadd.f32 %v5028, %v998
  %v5102 = vadd.f32 %v5031, %v1003
  %v5103 = vadd.f32 %v5034, %v1008
  %v5104 = vadd.f32 %v5037, %v1013
  %v5105 = vadd.f32 %v5040, %v1018
  %v5106 = vadd.f32 %v5043, %v1023
  %v5107 = vadd.f32 %v5046, %v1028
  %v5108 = vadd.f32 %v5049, %v1033
  %v5109 = vadd.f32 %v5052, %v1038
  %v5110 = vadd.f32 %v5055, %v1043
  %v5111 = vadd.f32 %v5058, %v1048
  %v5112 = vadd.f32 %v5061, %v1053
  %v5113 = vadd.f32 %v5064, %v1058
  %v5114 = vadd.f32 %v5067, %v1063
  %v5115 = vadd.f32 %v5070, %v1068
  %v5116 = vadd.f32 %v5073, %v1073
  %v5117 = vadd.f32 %v5076, %v1078
  %v5118 = vadd.f32 %v5079, %v1083
  %v5119 = vadd.f32 %v5082, %v1088
  %v5120 = vadd.f32 %v5085, %v1093
  %v5121 = vadd.f32 %v5088, %v1098
  %v5122 = vsel %vm2206, %v5090, -inf
  %v5123 = vsel %vm2206, %v5091, -inf
  %v5124 = vmax.f32 %v5122, %v5123
  %v5125 = vrot.slane %v5124, 4
  %v5126 = vmax.f32 %v5124, %v5125
  %v5127 = vrot.slane %v5126, 2
  %v5128 = vmax.f32 %v5126, %v5127
  %v5129 = vrot.slane %v5128, 1
  %v5130 = vmax.f32 %v5128, %v5129
  %v5131 = vsel %vm2206, %v5092, -inf
  %v5132 = vsel %vm2206, %v5093, -inf
  %v5133 = vmax.f32 %v5131, %v5132
  %v5134 = vrot.slane %v5133, 4
  %v5135 = vmax.f32 %v5133, %v5134
  %v5136 = vrot.slane %v5135, 2
  %v5137 = vmax.f32 %v5135, %v5136
  %v5138 = vrot.slane %v5137, 1
  %v5139 = vmax.f32 %v5137, %v5138
  %v5140 = vsel %vm2206, %v5094, -inf
  %v5141 = vsel %vm2206, %v5095, -inf
  %v5142 = vmax.f32 %v5140, %v5141
  %v5143 = vrot.slane %v5142, 4
  %v5144 = vmax.f32 %v5142, %v5143
  %v5145 = vrot.slane %v5144, 2
  %v5146 = vmax.f32 %v5144, %v5145
  %v5147 = vrot.slane %v5146, 1
  %v5148 = vmax.f32 %v5146, %v5147
  %v5149 = vsel %vm2206, %v5096, -inf
  %v5150 = vsel %vm2206, %v5097, -inf
  %v5151 = vmax.f32 %v5149, %v5150
  %v5152 = vrot.slane %v5151, 4
  %v5153 = vmax.f32 %v5151, %v5152
  %v5154 = vrot.slane %v5153, 2
  %v5155 = vmax.f32 %v5153, %v5154
  %v5156 = vrot.slane %v5155, 1
  %v5157 = vmax.f32 %v5155, %v5156
  %v5158 = vsel %vm2206, %v5098, -inf
  %v5159 = vsel %vm2206, %v5099, -inf
  %v5160 = vmax.f32 %v5158, %v5159
  %v5161 = vrot.slane %v5160, 4
  %v5162 = vmax.f32 %v5160, %v5161
  %v5163 = vrot.slane %v5162, 2
  %v5164 = vmax.f32 %v5162, %v5163
  %v5165 = vrot.slane %v5164, 1
  %v5166 = vmax.f32 %v5164, %v5165
  %v5167 = vsel %vm2206, %v5100, -inf
  %v5168 = vsel %vm2206, %v5101, -inf
  %v5169 = vmax.f32 %v5167, %v5168
  %v5170 = vrot.slane %v5169, 4
  %v5171 = vmax.f32 %v5169, %v5170
  %v5172 = vrot.slane %v5171, 2
  %v5173 = vmax.f32 %v5171, %v5172
  %v5174 = vrot.slane %v5173, 1
  %v5175 = vmax.f32 %v5173, %v5174
  %v5176 = vsel %vm2206, %v5102, -inf
  %v5177 = vsel %vm2206, %v5103, -inf
  %v5178 = vmax.f32 %v5176, %v5177
  %v5179 = vrot.slane %v5178, 4
  %v5180 = vmax.f32 %v5178, %v5179
  %v5181 = vrot.slane %v5180, 2
  %v5182 = vmax.f32 %v5180, %v5181
  %v5183 = vrot.slane %v5182, 1
  %v5184 = vmax.f32 %v5182, %v5183
  %v5185 = vsel %vm2206, %v5104, -inf
  %v5186 = vsel %vm2206, %v5105, -inf
  %v5187 = vmax.f32 %v5185, %v5186
  %v5188 = vrot.slane %v5187, 4
  %v5189 = vmax.f32 %v5187, %v5188
  %v5190 = vrot.slane %v5189, 2
  %v5191 = vmax.f32 %v5189, %v5190
  %v5192 = vrot.slane %v5191, 1
  %v5193 = vmax.f32 %v5191, %v5192
  %v5194 = vsel %vm2206, %v5106, -inf
  %v5195 = vsel %vm2206, %v5107, -inf
  %v5196 = vmax.f32 %v5194, %v5195
  %v5197 = vrot.slane %v5196, 4
  %v5198 = vmax.f32 %v5196, %v5197
  %v5199 = vrot.slane %v5198, 2
  %v5200 = vmax.f32 %v5198, %v5199
  %v5201 = vrot.slane %v5200, 1
  %v5202 = vmax.f32 %v5200, %v5201
  %v5203 = vsel %vm2206, %v5108, -inf
  %v5204 = vsel %vm2206, %v5109, -inf
  %v5205 = vmax.f32 %v5203, %v5204
  %v5206 = vrot.slane %v5205, 4
  %v5207 = vmax.f32 %v5205, %v5206
  %v5208 = vrot.slane %v5207, 2
  %v5209 = vmax.f32 %v5207, %v5208
  %v5210 = vrot.slane %v5209, 1
  %v5211 = vmax.f32 %v5209, %v5210
  %v5212 = vsel %vm2206, %v5110, -inf
  %v5213 = vsel %vm2206, %v5111, -inf
  %v5214 = vmax.f32 %v5212, %v5213
  %v5215 = vrot.slane %v5214, 4
  %v5216 = vmax.f32 %v5214, %v5215
  %v5217 = vrot.slane %v5216, 2
  %v5218 = vmax.f32 %v5216, %v5217
  %v5219 = vrot.slane %v5218, 1
  %v5220 = vmax.f32 %v5218, %v5219
  %v5221 = vsel %vm2206, %v5112, -inf
  %v5222 = vsel %vm2206, %v5113, -inf
  %v5223 = vmax.f32 %v5221, %v5222
  %v5224 = vrot.slane %v5223, 4
  %v5225 = vmax.f32 %v5223, %v5224
  %v5226 = vrot.slane %v5225, 2
  %v5227 = vmax.f32 %v5225, %v5226
  %v5228 = vrot.slane %v5227, 1
  %v5229 = vmax.f32 %v5227, %v5228
  %v5230 = vsel %vm2206, %v5114, -inf
  %v5231 = vsel %vm2206, %v5115, -inf
  %v5232 = vmax.f32 %v5230, %v5231
  %v5233 = vrot.slane %v5232, 4
  %v5234 = vmax.f32 %v5232, %v5233
  %v5235 = vrot.slane %v5234, 2
  %v5236 = vmax.f32 %v5234, %v5235
  %v5237 = vrot.slane %v5236, 1
  %v5238 = vmax.f32 %v5236, %v5237
  %v5239 = vsel %vm2206, %v5116, -inf
  %v5240 = vsel %vm2206, %v5117, -inf
  %v5241 = vmax.f32 %v5239, %v5240
  %v5242 = vrot.slane %v5241, 4
  %v5243 = vmax.f32 %v5241, %v5242
  %v5244 = vrot.slane %v5243, 2
  %v5245 = vmax.f32 %v5243, %v5244
  %v5246 = vrot.slane %v5245, 1
  %v5247 = vmax.f32 %v5245, %v5246
  %v5248 = vsel %vm2206, %v5118, -inf
  %v5249 = vsel %vm2206, %v5119, -inf
  %v5250 = vmax.f32 %v5248, %v5249
  %v5251 = vrot.slane %v5250, 4
  %v5252 = vmax.f32 %v5250, %v5251
  %v5253 = vrot.slane %v5252, 2
  %v5254 = vmax.f32 %v5252, %v5253
  %v5255 = vrot.slane %v5254, 1
  %v5256 = vmax.f32 %v5254, %v5255
  %v5257 = vsel %vm2206, %v5120, -inf
  %v5258 = vsel %vm2206, %v5121, -inf
  %v5259 = vmax.f32 %v5257, %v5258
  %v5260 = vrot.slane %v5259, 4
  %v5261 = vmax.f32 %v5259, %v5260
  %v5262 = vrot.slane %v5261, 2
  %v5263 = vmax.f32 %v5261, %v5262
  %v5264 = vrot.slane %v5263, 1
  %v5265 = vmax.f32 %v5263, %v5264
  %v5266 = vsub.f32 %v5090, %v5130
  %v5267 = vsub.f32 %v5091, %v5130
  %v5268 = vsub.f32 %v5092, %v5139
  %v5269 = vsub.f32 %v5093, %v5139
  %v5270 = vsub.f32 %v5094, %v5148
  %v5271 = vsub.f32 %v5095, %v5148
  %v5272 = vsub.f32 %v5096, %v5157
  %v5273 = vsub.f32 %v5097, %v5157
  %v5274 = vsub.f32 %v5098, %v5166
  %v5275 = vsub.f32 %v5099, %v5166
  %v5276 = vsub.f32 %v5100, %v5175
  %v5277 = vsub.f32 %v5101, %v5175
  %v5278 = vsub.f32 %v5102, %v5184
  %v5279 = vsub.f32 %v5103, %v5184
  %v5280 = vsub.f32 %v5104, %v5193
  %v5281 = vsub.f32 %v5105, %v5193
  %v5282 = vsub.f32 %v5106, %v5202
  %v5283 = vsub.f32 %v5107, %v5202
  %v5284 = vsub.f32 %v5108, %v5211
  %v5285 = vsub.f32 %v5109, %v5211
  %v5286 = vsub.f32 %v5110, %v5220
  %v5287 = vsub.f32 %v5111, %v5220
  %v5288 = vsub.f32 %v5112, %v5229
  %v5289 = vsub.f32 %v5113, %v5229
  %v5290 = vsub.f32 %v5114, %v5238
  %v5291 = vsub.f32 %v5115, %v5238
  %v5292 = vsub.f32 %v5116, %v5247
  %v5293 = vsub.f32 %v5117, %v5247
  %v5294 = vsub.f32 %v5118, %v5256
  %v5295 = vsub.f32 %v5119, %v5256
  %v5296 = vsub.f32 %v5120, %v5265
  %v5297 = vsub.f32 %v5121, %v5265
  %v5298 = vmul.f32 %v5266, 1.442695
  %v5299 = vpow.pop %v5298
  %v5300 = vmul.f32 %v5267, 1.442695
  %v5301 = vpow.pop %v5300
  %v5302 = vmul.f32 %v5268, 1.442695
  %v5303 = vpow.pop %v5302
  %v5304 = vmul.f32 %v5269, 1.442695
  %v5305 = vpow.pop %v5304
  %v5306 = vmul.f32 %v5270, 1.442695
  %v5307 = vpow.pop %v5306
  %v5308 = vmul.f32 %v5271, 1.442695
  %v5309 = vpow.pop %v5308
  %v5310 = vmul.f32 %v5272, 1.442695
  %v5311 = vpow.pop %v5310
  %v5312 = vmul.f32 %v5273, 1.442695
  %v5313 = vpow.pop %v5312
  %v5314 = vmul.f32 %v5274, 1.442695
  %v5315 = vpow.pop %v5314
  %v5316 = vmul.f32 %v5275, 1.442695
  %v5317 = vpow.pop %v5316
  %v5318 = vmul.f32 %v5276, 1.442695
  %v5319 = vpow.pop %v5318
  %v5320 = vmul.f32 %v5277, 1.442695
  %v5321 = vpow.pop %v5320
  %v5322 = vmul.f32 %v5278, 1.442695
  %v5323 = vpow.pop %v5322
  %v5324 = vmul.f32 %v5279, 1.442695
  %v5325 = vpow.pop %v5324
  %v5326 = vmul.f32 %v5280, 1.442695
  %v5327 = vpow.pop %v5326
  %v5328 = vmul.f32 %v5281, 1.442695
  %v5329 = vpow.pop %v5328
  %v5330 = vmul.f32 %v5282, 1.442695
  %v5331 = vpow.pop %v5330
  %v5332 = vmul.f32 %v5283, 1.442695
  %v5333 = vpow.pop %v5332
  %v5334 = vmul.f32 %v5284, 1.442695
  %v5335 = vpow.pop %v5334
  %v5336 = vmul.f32 %v5285, 1.442695
  %v5337 = vpow.pop %v5336
  %v5338 = vmul.f32 %v5286, 1.442695
  %v5339 = vpow.pop %v5338
  %v5340 = vmul.f32 %v5287, 1.442695
  %v5341 = vpow.pop %v5340
  %v5342 = vmul.f32 %v5288, 1.442695
  %v5343 = vpow.pop %v5342
  %v5344 = vmul.f32 %v5289, 1.442695
  %v5345 = vpow.pop %v5344
  %v5346 = vmul.f32 %v5290, 1.442695
  %v5347 = vpow.pop %v5346
  %v5348 = vmul.f32 %v5291, 1.442695
  %v5349 = vpow.pop %v5348
  %v5350 = vmul.f32 %v5292, 1.442695
  %v5351 = vpow.pop %v5350
  %v5352 = vmul.f32 %v5293, 1.442695
  %v5353 = vpow.pop %v5352
  %v5354 = vmul.f32 %v5294, 1.442695
  %v5355 = vpow.pop %v5354
  %v5356 = vmul.f32 %v5295, 1.442695
  %v5357 = vpow.pop %v5356
  %v5358 = vmul.f32 %v5296, 1.442695
  %v5359 = vpow.pop %v5358
  %v5360 = vmul.f32 %v5297, 1.442695
  %v5361 = vpow.pop %v5360
  %v5362 = vsel %vm2206, %v5299, 0.0
  %v5363 = vsel %vm2206, %v5301, 0.0
  %v5364 = vadd.f32 %v5362, %v5363
  %v5365 = vrot.slane %v5364, 4
  %v5366 = vadd.f32 %v5364, %v5365
  %v5367 = vrot.slane %v5366, 2
  %v5368 = vadd.f32 %v5366, %v5367
  %v5369 = vrot.slane %v5368, 1
  %v5370 = vadd.f32 %v5368, %v5369
  %v5371 = vsel %vm2206, %v5303, 0.0
  %v5372 = vsel %vm2206, %v5305, 0.0
  %v5373 = vadd.f32 %v5371, %v5372
  %v5374 = vrot.slane %v5373, 4
  %v5375 = vadd.f32 %v5373, %v5374
  %v5376 = vrot.slane %v5375, 2
  %v5377 = vadd.f32 %v5375, %v5376
  %v5378 = vrot.slane %v5377, 1
  %v5379 = vadd.f32 %v5377, %v5378
  %v5380 = vsel %vm2206, %v5307, 0.0
  %v5381 = vsel %vm2206, %v5309, 0.0
  %v5382 = vadd.f32 %v5380, %v5381
  %v5383 = vrot.slane %v5382, 4
  %v5384 = vadd.f32 %v5382, %v5383
  %v5385 = vrot.slane %v5384, 2
  %v5386 = vadd.f32 %v5384, %v5385
  %v5387 = vrot.slane %v5386, 1
  %v5388 = vadd.f32 %v5386, %v5387
  %v5389 = vsel %vm2206, %v5311, 0.0
  %v5390 = vsel %vm2206, %v5313, 0.0
  %v5391 = vadd.f32 %v5389, %v5390
  %v5392 = vrot.slane %v5391, 4
  %v5393 = vadd.f32 %v5391, %v5392
  %v5394 = vrot.slane %v5393, 2
  %v5395 = vadd.f32 %v5393, %v5394
  %v5396 = vrot.slane %v5395, 1
  %v5397 = vadd.f32 %v5395, %v5396
  %v5398 = vsel %vm2206, %v5315, 0.0
  %v5399 = vsel %vm2206, %v5317, 0.0
  %v5400 = vadd.f32 %v5398, %v5399
  %v5401 = vrot.slane %v5400, 4
  %v5402 = vadd.f32 %v5400, %v5401
  %v5403 = vrot.slane %v5402, 2
  %v5404 = vadd.f32 %v5402, %v5403
  %v5405 = vrot.slane %v5404, 1
  %v5406 = vadd.f32 %v5404, %v5405
  %v5407 = vsel %vm2206, %v5319, 0.0
  %v5408 = vsel %vm2206, %v5321, 0.0
  %v5409 = vadd.f32 %v5407, %v5408
  %v5410 = vrot.slane %v5409, 4
  %v5411 = vadd.f32 %v5409, %v5410
  %v5412 = vrot.slane %v5411, 2
  %v5413 = vadd.f32 %v5411, %v5412
  %v5414 = vrot.slane %v5413, 1
  %v5415 = vadd.f32 %v5413, %v5414
  %v5416 = vsel %vm2206, %v5323, 0.0
  %v5417 = vsel %vm2206, %v5325, 0.0
  %v5418 = vadd.f32 %v5416, %v5417
  %v5419 = vrot.slane %v5418, 4
  %v5420 = vadd.f32 %v5418, %v5419
  %v5421 = vrot.slane %v5420, 2
  %v5422 = vadd.f32 %v5420, %v5421
  %v5423 = vrot.slane %v5422, 1
  %v5424 = vadd.f32 %v5422, %v5423
  %v5425 = vsel %vm2206, %v5327, 0.0
  %v5426 = vsel %vm2206, %v5329, 0.0
  %v5427 = vadd.f32 %v5425, %v5426
  %v5428 = vrot.slane %v5427, 4
  %v5429 = vadd.f32 %v5427, %v5428
  %v5430 = vrot.slane %v5429, 2
  %v5431 = vadd.f32 %v5429, %v5430
  %v5432 = vrot.slane %v5431, 1
  %v5433 = vadd.f32 %v5431, %v5432
  %v5434 = vsel %vm2206, %v5331, 0.0
  %v5435 = vsel %vm2206, %v5333, 0.0
  %v5436 = vadd.f32 %v5434, %v5435
  %v5437 = vrot.slane %v5436, 4
  %v5438 = vadd.f32 %v5436, %v5437
  %v5439 = vrot.slane %v5438, 2
  %v5440 = vadd.f32 %v5438, %v5439
  %v5441 = vrot.slane %v5440, 1
  %v5442 = vadd.f32 %v5440, %v5441
  %v5443 = vsel %vm2206, %v5335, 0.0
  %v5444 = vsel %vm2206, %v5337, 0.0
  %v5445 = vadd.f32 %v5443, %v5444
  %v5446 = vrot.slane %v5445, 4
  %v5447 = vadd.f32 %v5445, %v5446
  %v5448 = vrot.slane %v5447, 2
  %v5449 = vadd.f32 %v5447, %v5448
  %v5450 = vrot.slane %v5449, 1
  %v5451 = vadd.f32 %v5449, %v5450
  %v5452 = vsel %vm2206, %v5339, 0.0
  %v5453 = vsel %vm2206, %v5341, 0.0
  %v5454 = vadd.f32 %v5452, %v5453
  %v5455 = vrot.slane %v5454, 4
  %v5456 = vadd.f32 %v5454, %v5455
  %v5457 = vrot.slane %v5456, 2
  %v5458 = vadd.f32 %v5456, %v5457
  %v5459 = vrot.slane %v5458, 1
  %v5460 = vadd.f32 %v5458, %v5459
  %v5461 = vsel %vm2206, %v5343, 0.0
  %v5462 = vsel %vm2206, %v5345, 0.0
  %v5463 = vadd.f32 %v5461, %v5462
  %v5464 = vrot.slane %v5463, 4
  %v5465 = vadd.f32 %v5463, %v5464
  %v5466 = vrot.slane %v5465, 2
  %v5467 = vadd.f32 %v5465, %v5466
  %v5468 = vrot.slane %v5467, 1
  %v5469 = vadd.f32 %v5467, %v5468
  %v5470 = vsel %vm2206, %v5347, 0.0
  %v5471 = vsel %vm2206, %v5349, 0.0
  %v5472 = vadd.f32 %v5470, %v5471
  %v5473 = vrot.slane %v5472, 4
  %v5474 = vadd.f32 %v5472, %v5473
  %v5475 = vrot.slane %v5474, 2
  %v5476 = vadd.f32 %v5474, %v5475
  %v5477 = vrot.slane %v5476, 1
  %v5478 = vadd.f32 %v5476, %v5477
  %v5479 = vsel %vm2206, %v5351, 0.0
  %v5480 = vsel %vm2206, %v5353, 0.0
  %v5481 = vadd.f32 %v5479, %v5480
  %v5482 = vrot.slane %v5481, 4
  %v5483 = vadd.f32 %v5481, %v5482
  %v5484 = vrot.slane %v5483, 2
  %v5485 = vadd.f32 %v5483, %v5484
  %v5486 = vrot.slane %v5485, 1
  %v5487 = vadd.f32 %v5485, %v5486
  %v5488 = vsel %vm2206, %v5355, 0.0
  %v5489 = vsel %vm2206, %v5357, 0.0
  %v5490 = vadd.f32 %v5488, %v5489
  %v5491 = vrot.slane %v5490, 4
  %v5492 = vadd.f32 %v5490, %v5491
  %v5493 = vrot.slane %v5492, 2
  %v5494 = vadd.f32 %v5492, %v5493
  %v5495 = vrot.slane %v5494, 1
  %v5496 = vadd.f32 %v5494, %v5495
  %v5497 = vsel %vm2206, %v5359, 0.0
  %v5498 = vsel %vm2206, %v5361, 0.0
  %v5499 = vadd.f32 %v5497, %v5498
  %v5500 = vrot.slane %v5499, 4
  %v5501 = vadd.f32 %v5499, %v5500
  %v5502 = vrot.slane %v5501, 2
  %v5503 = vadd.f32 %v5501, %v5502
  %v5504 = vrot.slane %v5503, 1
  %v5505 = vadd.f32 %v5503, %v5504
  %v5506 = vrcp.pop %v5370
  %v5507 = vrcp.pop %v5379
  %v5508 = vrcp.pop %v5388
  %v5509 = vrcp.pop %v5397
  %v5510 = vrcp.pop %v5406
  %v5511 = vrcp.pop %v5415
  %v5512 = vrcp.pop %v5424
  %v5513 = vrcp.pop %v5433
  %v5514 = vrcp.pop %v5442
  %v5515 = vrcp.pop %v5451
  %v5516 = vrcp.pop %v5460
  %v5517 = vrcp.pop %v5469
  %v5518 = vrcp.pop %v5478
  %v5519 = vrcp.pop %v5487
  %v5520 = vrcp.pop %v5496
  %v5521 = vrcp.pop %v5505
  %v5522 = vmul.f32 %v5299, %v5506
  %v5523 = vmul.f32 %v5301, %v5506
  %v5524 = vmul.f32 %v5303, %v5507
  %v5525 = vmul.f32 %v5305, %v5507
  %v5526 = vmul.f32 %v5307, %v5508
  %v5527 = vmul.f32 %v5309, %v5508
  %v5528 = vmul.f32 %v5311, %v5509
  %v5529 = vmul.f32 %v5313, %v5509
  %v5530 = vmul.f32 %v5315, %v5510
  %v5531 = vmul.f32 %v5317, %v5510
  %v5532 = vmul.f32 %v5319, %v5511
  %v5533 = vmul.f32 %v5321, %v5511
  %v5534 = vmul.f32 %v5323, %v5512
  %v5535 = vmul.f32 %v5325, %v5512
  %v5536 = vmul.f32 %v5327, %v5513
  %v5537 = vmul.f32 %v5329, %v5513
  %v5538 = vmul.f32 %v5331, %v5514
  %v5539 = vmul.f32 %v5333, %v5514
  %v5540 = vmul.f32 %v5335, %v5515
  %v5541 = vmul.f32 %v5337, %v5515
  %v5542 = vmul.f32 %v5339, %v5516
  %v5543 = vmul.f32 %v5341, %v5516
  %v5544 = vmul.f32 %v5343, %v5517
  %v5545 = vmul.f32 %v5345, %v5517
  %v5546 = vmul.f32 %v5347, %v5518
  %v5547 = vmul.f32 %v5349, %v5518
  %v5548 = vmul.f32 %v5351, %v5519
  %v5549 = vmul.f32 %v5353, %v5519
  %v5550 = vmul.f32 %v5355, %v5520
  %v5551 = vmul.f32 %v5357, %v5520
  %v5552 = vmul.f32 %v5359, %v5521
  %v5553 = vmul.f32 %v5361, %v5521
  %v5554 = vmul.f32 %v5522, %v4520
  %v5555 = vmul.f32 %v5523, %v4523
  %v5556 = vmul.f32 %v5524, %v4520
  %v5557 = vmul.f32 %v5525, %v4523
  %v5558 = vmul.f32 %v5526, %v4520
  %v5559 = vmul.f32 %v5527, %v4523
  %v5560 = vmul.f32 %v5528, %v4520
  %v5561 = vmul.f32 %v5529, %v4523
  %v5562 = vmul.f32 %v5530, %v4520
  %v5563 = vmul.f32 %v5531, %v4523
  %v5564 = vmul.f32 %v5532, %v4520
  %v5565 = vmul.f32 %v5533, %v4523
  %v5566 = vmul.f32 %v5534, %v4520
  %v5567 = vmul.f32 %v5535, %v4523
  %v5568 = vmul.f32 %v5536, %v4520
  %v5569 = vmul.f32 %v5537, %v4523
  %v5570 = vmul.f32 %v5538, %v4520
  %v5571 = vmul.f32 %v5539, %v4523
  %v5572 = vmul.f32 %v5540, %v4520
  %v5573 = vmul.f32 %v5541, %v4523
  %v5574 = vmul.f32 %v5542, %v4520
  %v5575 = vmul.f32 %v5543, %v4523
  %v5576 = vmul.f32 %v5544, %v4520
  %v5577 = vmul.f32 %v5545, %v4523
  %v5578 = vmul.f32 %v5546, %v4520
  %v5579 = vmul.f32 %v5547, %v4523
  %v5580 = vmul.f32 %v5548, %v4520
  %v5581 = vmul.f32 %v5549, %v4523
  %v5582 = vmul.f32 %v5550, %v4520
  %v5583 = vmul.f32 %v5551, %v4523
  %v5584 = vmul.f32 %v5552, %v4520
  %v5585 = vmul.f32 %v5553, %v4523
  %v5586 = vsel %vm2206, %v5554, 0.0
  %v5587 = vsel %vm2206, %v5555, 0.0
  %v5588 = vadd.f32 %v5586, %v5587
  %v5589 = vrot.slane %v5588, 4
  %v5590 = vadd.f32 %v5588, %v5589
  %v5591 = vrot.slane %v5590, 2
  %v5592 = vadd.f32 %v5590, %v5591
  %v5593 = vrot.slane %v5592, 1
  %v5594 = vadd.f32 %v5592, %v5593
  %v5595 = vsel %vm2206, %v5556, 0.0
  %v5596 = vsel %vm2206, %v5557, 0.0
  %v5597 = vadd.f32 %v5595, %v5596
  %v5598 = vrot.slane %v5597, 4
  %v5599 = vadd.f32 %v5597, %v5598
  %v5600 = vrot.slane %v5599, 2
  %v5601 = vadd.f32 %v5599, %v5600
  %v5602 = vrot.slane %v5601, 1
  %v5603 = vadd.f32 %v5601, %v5602
  %v5604 = vsel %vm2206, %v5558, 0.0
  %v5605 = vsel %vm2206, %v5559, 0.0
  %v5606 = vadd.f32 %v5604, %v5605
  %v5607 = vrot.slane %v5606, 4
  %v5608 = vadd.f32 %v5606, %v5607
  %v5609 = vrot.slane %v5608, 2
  %v5610 = vadd.f32 %v5608, %v5609
  %v5611 = vrot.slane %v5610, 1
  %v5612 = vadd.f32 %v5610, %v5611
  %v5613 = vsel %vm2206, %v5560, 0.0
  %v5614 = vsel %vm2206, %v5561, 0.0
  %v5615 = vadd.f32 %v5613, %v5614
  %v5616 = vrot.slane %v5615, 4
  %v5617 = vadd.f32 %v5615, %v5616
  %v5618 = vrot.slane %v5617, 2
  %v5619 = vadd.f32 %v5617, %v5618
  %v5620 = vrot.slane %v5619, 1
  %v5621 = vadd.f32 %v5619, %v5620
  %v5622 = vsel %vm2206, %v5562, 0.0
  %v5623 = vsel %vm2206, %v5563, 0.0
  %v5624 = vadd.f32 %v5622, %v5623
  %v5625 = vrot.slane %v5624, 4
  %v5626 = vadd.f32 %v5624, %v5625
  %v5627 = vrot.slane %v5626, 2
  %v5628 = vadd.f32 %v5626, %v5627
  %v5629 = vrot.slane %v5628, 1
  %v5630 = vadd.f32 %v5628, %v5629
  %v5631 = vsel %vm2206, %v5564, 0.0
  %v5632 = vsel %vm2206, %v5565, 0.0
  %v5633 = vadd.f32 %v5631, %v5632
  %v5634 = vrot.slane %v5633, 4
  %v5635 = vadd.f32 %v5633, %v5634
  %v5636 = vrot.slane %v5635, 2
  %v5637 = vadd.f32 %v5635, %v5636
  %v5638 = vrot.slane %v5637, 1
  %v5639 = vadd.f32 %v5637, %v5638
  %v5640 = vsel %vm2206, %v5566, 0.0
  %v5641 = vsel %vm2206, %v5567, 0.0
  %v5642 = vadd.f32 %v5640, %v5641
  %v5643 = vrot.slane %v5642, 4
  %v5644 = vadd.f32 %v5642, %v5643
  %v5645 = vrot.slane %v5644, 2
  %v5646 = vadd.f32 %v5644, %v5645
  %v5647 = vrot.slane %v5646, 1
  %v5648 = vadd.f32 %v5646, %v5647
  %v5649 = vsel %vm2206, %v5568, 0.0
  %v5650 = vsel %vm2206, %v5569, 0.0
  %v5651 = vadd.f32 %v5649, %v5650
  %v5652 = vrot.slane %v5651, 4
  %v5653 = vadd.f32 %v5651, %v5652
  %v5654 = vrot.slane %v5653, 2
  %v5655 = vadd.f32 %v5653, %v5654
  %v5656 = vrot.slane %v5655, 1
  %v5657 = vadd.f32 %v5655, %v5656
  %v5658 = vsel %vm2206, %v5570, 0.0
  %v5659 = vsel %vm2206, %v5571, 0.0
  %v5660 = vadd.f32 %v5658, %v5659
  %v5661 = vrot.slane %v5660, 4
  %v5662 = vadd.f32 %v5660, %v5661
  %v5663 = vrot.slane %v5662, 2
  %v5664 = vadd.f32 %v5662, %v5663
  %v5665 = vrot.slane %v5664, 1
  %v5666 = vadd.f32 %v5664, %v5665
  %v5667 = vsel %vm2206, %v5572, 0.0
  %v5668 = vsel %vm2206, %v5573, 0.0
  %v5669 = vadd.f32 %v5667, %v5668
  %v5670 = vrot.slane %v5669, 4
  %v5671 = vadd.f32 %v5669, %v5670
  %v5672 = vrot.slane %v5671, 2
  %v5673 = vadd.f32 %v5671, %v5672
  %v5674 = vrot.slane %v5673, 1
  %v5675 = vadd.f32 %v5673, %v5674
  %v5676 = vsel %vm2206, %v5574, 0.0
  %v5677 = vsel %vm2206, %v5575, 0.0
  %v5678 = vadd.f32 %v5676, %v5677
  %v5679 = vrot.slane %v5678, 4
  %v5680 = vadd.f32 %v5678, %v5679
  %v5681 = vrot.slane %v5680, 2
  %v5682 = vadd.f32 %v5680, %v5681
  %v5683 = vrot.slane %v5682, 1
  %v5684 = vadd.f32 %v5682, %v5683
  %v5685 = vsel %vm2206, %v5576, 0.0
  %v5686 = vsel %vm2206, %v5577, 0.0
  %v5687 = vadd.f32 %v5685, %v5686
  %v5688 = vrot.slane %v5687, 4
  %v5689 = vadd.f32 %v5687, %v5688
  %v5690 = vrot.slane %v5689, 2
  %v5691 = vadd.f32 %v5689, %v5690
  %v5692 = vrot.slane %v5691, 1
  %v5693 = vadd.f32 %v5691, %v5692
  %v5694 = vsel %vm2206, %v5578, 0.0
  %v5695 = vsel %vm2206, %v5579, 0.0
  %v5696 = vadd.f32 %v5694, %v5695
  %v5697 = vrot.slane %v5696, 4
  %v5698 = vadd.f32 %v5696, %v5697
  %v5699 = vrot.slane %v5698, 2
  %v5700 = vadd.f32 %v5698, %v5699
  %v5701 = vrot.slane %v5700, 1
  %v5702 = vadd.f32 %v5700, %v5701
  %v5703 = vsel %vm2206, %v5580, 0.0
  %v5704 = vsel %vm2206, %v5581, 0.0
  %v5705 = vadd.f32 %v5703, %v5704
  %v5706 = vrot.slane %v5705, 4
  %v5707 = vadd.f32 %v5705, %v5706
  %v5708 = vrot.slane %v5707, 2
  %v5709 = vadd.f32 %v5707, %v5708
  %v5710 = vrot.slane %v5709, 1
  %v5711 = vadd.f32 %v5709, %v5710
  %v5712 = vsel %vm2206, %v5582, 0.0
  %v5713 = vsel %vm2206, %v5583, 0.0
  %v5714 = vadd.f32 %v5712, %v5713
  %v5715 = vrot.slane %v5714, 4
  %v5716 = vadd.f32 %v5714, %v5715
  %v5717 = vrot.slane %v5716, 2
  %v5718 = vadd.f32 %v5716, %v5717
  %v5719 = vrot.slane %v5718, 1
  %v5720 = vadd.f32 %v5718, %v5719
  %v5721 = vsel %vm2206, %v5584, 0.0
  %v5722 = vsel %vm2206, %v5585, 0.0
  %v5723 = vadd.f32 %v5721, %v5722
  %v5724 = vrot.slane %v5723, 4
  %v5725 = vadd.f32 %v5723, %v5724
  %v5726 = vrot.slane %v5725, 2
  %v5727 = vadd.f32 %v5725, %v5726
  %v5728 = vrot.slane %v5727, 1
  %v5729 = vadd.f32 %v5727, %v5728
  %v5731 = vperm.slane %v4447, 0
  %v5733 = vadd.f32 %v5594, %v5731
  %v5734 = vadd.f32 %v5603, %v5731
  %v5735 = vadd.f32 %v5612, %v5731
  %v5736 = vadd.f32 %v5621, %v5731
  %v5737 = vadd.f32 %v5630, %v5731
  %v5738 = vadd.f32 %v5639, %v5731
  %v5739 = vadd.f32 %v5648, %v5731
  %v5740 = vadd.f32 %v5657, %v5731
  %v5741 = vadd.f32 %v5666, %v5731
  %v5742 = vadd.f32 %v5675, %v5731
  %v5743 = vadd.f32 %v5684, %v5731
  %v5744 = vadd.f32 %v5693, %v5731
  %v5745 = vadd.f32 %v5702, %v5731
  %v5746 = vadd.f32 %v5711, %v5731
  %v5747 = vadd.f32 %v5720, %v5731
  %v5748 = vadd.f32 %v5729, %v5731
  %vm5749 = vcmp.gt.f32.partialorder %v5733, 0.0
  %vm5750 = vcmp.gt.f32.partialorder %v5734, 0.0
  %vm5751 = vcmp.gt.f32.partialorder %v5735, 0.0
  %vm5752 = vcmp.gt.f32.partialorder %v5736, 0.0
  %vm5753 = vcmp.gt.f32.partialorder %v5737, 0.0
  %vm5754 = vcmp.gt.f32.partialorder %v5738, 0.0
  %vm5755 = vcmp.gt.f32.partialorder %v5739, 0.0
  %vm5756 = vcmp.gt.f32.partialorder %v5740, 0.0
  %vm5757 = vcmp.gt.f32.partialorder %v5741, 0.0
  %vm5758 = vcmp.gt.f32.partialorder %v5742, 0.0
  %vm5759 = vcmp.gt.f32.partialorder %v5743, 0.0
  %vm5760 = vcmp.gt.f32.partialorder %v5744, 0.0
  %vm5761 = vcmp.gt.f32.partialorder %v5745, 0.0
  %vm5762 = vcmp.gt.f32.partialorder %v5746, 0.0
  %vm5763 = vcmp.gt.f32.partialorder %v5747, 0.0
  %vm5764 = vcmp.gt.f32.partialorder %v5748, 0.0
  %v5765 = vmul.f32 %v5733, 0.01
  %v5766 = vmul.f32 %v5734, 0.01
  %v5767 = vmul.f32 %v5735, 0.01
  %v5768 = vmul.f32 %v5736, 0.01
  %v5769 = vmul.f32 %v5737, 0.01
  %v5770 = vmul.f32 %v5738, 0.01
  %v5771 = vmul.f32 %v5739, 0.01
  %v5772 = vmul.f32 %v5740, 0.01
  %v5773 = vmul.f32 %v5741, 0.01
  %v5774 = vmul.f32 %v5742, 0.01
  %v5775 = vmul.f32 %v5743, 0.01
  %v5776 = vmul.f32 %v5744, 0.01
  %v5777 = vmul.f32 %v5745, 0.01
  %v5778 = vmul.f32 %v5746, 0.01
  %v5779 = vmul.f32 %v5747, 0.01
  %v5780 = vmul.f32 %v5748, 0.01
  %v5781 = vsel %vm5749, %v5733, %v5765
  %v5782 = vsel %vm5750, %v5734, %v5766
  %v5783 = vsel %vm5751, %v5735, %v5767
  %v5784 = vsel %vm5752, %v5736, %v5768
  %v5785 = vsel %vm5753, %v5737, %v5769
  %v5786 = vsel %vm5754, %v5738, %v5770
  %v5787 = vsel %vm5755, %v5739, %v5771
  %v5788 = vsel %vm5756, %v5740, %v5772
  %v5789 = vsel %vm5757, %v5741, %v5773
  %v5790 = vsel %vm5758, %v5742, %v5774
  %v5791 = vsel %vm5759, %v5743, %v5775
  %v5792 = vsel %vm5760, %v5744, %v5776
  %v5793 = vsel %vm5761, %v5745, %v5777
  %v5794 = vsel %vm5762, %v5746, %v5778
  %v5795 = vsel %vm5763, %v5747, %v5779
  %v5796 = vsel %vm5764, %v5748, %v5780
  %v5797 = vld [vmem:[%s67] sm:$0xff]
  %v5798 = vld [vmem:[%s67 + $0x8] sm:$0x7f]
  %v5799 = vld [vmem:[#allocation2] sm:$0x1]
  %v5800 = vld [vmem:[%s71] sm:$0xff]
  %v5801 = vld [vmem:[%s71 + $0x8] sm:$0x7f]
  %v5802 = vld [vmem:[%s73] sm:$0x1]
  %v5803 = vld [vmem:[%s75] sm:$0xff]
  %v5804 = vld [vmem:[%s75 + $0x8] sm:$0x3]
  %v5805 = vld [vmem:[#allocation3] sm:$0x1]
  %v5807 = vperm.slane %v5799, 0
  %v5825 = vrot.slane %v5782, 7
  %v5826 = vsel %vm1789, %v5825, %v5781
  %v5827 = vrot.slane %v5783, 6
  %v5828 = vsel %vm1792, %v5827, %v5826
  %v5829 = vrot.slane %v5784, 5
  %v5830 = vsel %vm1795, %v5829, %v5828
  %v5831 = vrot.slane %v5785, 4
  %v5832 = vsel %vm1798, %v5831, %v5830
  %v5833 = vrot.slane %v5786, 3
  %v5834 = vsel %vm1801, %v5833, %v5832
  %v5835 = vrot.slane %v5787, 2
  %v5836 = vsel %vm1804, %v5835, %v5834
  %v5837 = vrot.slane %v5788, 1
  %v5838 = vsel %vm1807, %v5837, %v5836
  %v5839 = vrot.slane %v5790, 7
  %v5840 = vsel %vm1789, %v5839, %v5789
  %v5841 = vrot.slane %v5791, 6
  %v5842 = vsel %vm1792, %v5841, %v5840
  %v5843 = vrot.slane %v5792, 5
  %v5844 = vsel %vm1795, %v5843, %v5842
  %v5845 = vrot.slane %v5793, 4
  %v5846 = vsel %vm1798, %v5845, %v5844
  %v5847 = vrot.slane %v5794, 3
  %v5848 = vsel %vm1801, %v5847, %v5846
  %v5849 = vrot.slane %v5795, 2
  %v5850 = vsel %vm1804, %v5849, %v5848
  %v5851 = vrot.slane %v5796, 1
  %v5852 = vsel %vm1807, %v5851, %v5850
  %v5853 = vsel %vm2206, %v5838, 0
  %v5855 = vsel %vm2206, %v5852, 0
  %v5858 = vsel %vm2303, %v5798, 0
  %5860 = vmatpush.msra.mxu0 0.0
  %5861 = vmatpush.msra.mxu0 0.0
  %5862 = vmatpush.msra.mxu0 0.0
  %5863 = vmatpush.msra.mxu0 0.0
  %5864 = vmatpush.msra.mxu0 0.0
  %5865 = vmatpush.msra.mxu0 0.0
  %5866 = vmatpush.msra.mxu0 0.0
  %5867 = vmatpush.msra.mxu0 0.0
  %5868 = vmatpush.msra.mxu0 0.0
  %5869 = vmatpush.msra.mxu0 0.0
  %5870 = vmatpush.msra.mxu0 0.0
  %5871 = vmatpush.msra.mxu0 0.0
  %5872 = vmatpush.msra.mxu0 0.0
  %5873 = vmatpush.msra.mxu0 0.0
  %5874 = vmatpush.msra.mxu0 %v5858
  %5875 = vmatpush.msra.mxu0 %v5797
  %5876 = vmatmul.f32.gmra.mxu0 %v5853
  %v5877 = vpop.f32.mrf.mxu0
  %v5878 = vadd.f32 %v5807, %v5877
  %5879 = vmatmul.f32.gmra.mxu0 %v5855
  %v5880 = vpop.f32.mrf.mxu0
  %v5881 = vadd.f32 %v5807, %v5880
  %5882 = vdwg.mxu0
  %vm5883 = vcmp.gt.f32.partialorder %v233, 0.0
  %vm5884 = vcmp.gt.f32.partialorder %v234, 0.0
  %5886 = vset.pattern.permute.xlu0 0
  %5887 = vperm.xlu0 %5886, %v5878
  %v5888 = vpop.permute.xlu0 %5887
  %5891 = vset.pattern.permute.xlu0 0
  %5892 = vperm.xlu0 %5891, %v5881
  %v5893 = vpop.permute.xlu0 %5892
  %v5895 = vsel %vm5883, %v5888, -1e+30
  %v5896 = vsel %vm5884, %v5893, -1e+30
  %vm5897 = vcmask 15360
  %v5898 = vsel %vm5897, %v5895, -inf
  %v5899 = vsel %vm5897, %v5896, -inf
  %v5900 = vmax.f32 %v5898, %v5899
  %v5901 = vrot.slane %v5900, 4
  %v5902 = vmax.f32 %v5900, %v5901
  %v5903 = vrot.slane %v5902, 2
  %v5904 = vmax.f32 %v5902, %v5903
  %v5905 = vrot.slane %v5904, 1
  %v5906 = vmax.f32 %v5904, %v5905
  %v5907 = vmul.f32 %v233, %v5906
  %v5908 = vmul.f32 %v234, %v5906
  %v5909 = vsel %vm5897, %v5907, 0.0
  %5910 = vadd.xlane.f32.xlu0 %v5909
  %v5911 = vpop.xlane.xlu0 %5910
  %v5912 = vsel %vm5897, %v5908, 0.0
  %5913 = vadd.xlane.f32.xlu0 %v5912
  %v5914 = vpop.xlane.xlu0 %5913
  %v5915 = vsub.f32 %v5878, %v5911
  %v5916 = vsub.f32 %v5881, %v5914
  %v5917 = vmul.f32 %v5915, 1.442695
  %v5918 = vpow.pop %v5917
  %v5919 = vmul.f32 %v5916, 1.442695
  %v5920 = vpow.pop %v5919
  %v5922 = vsel %vm248, %v232, 0
  %5924 = vmatpush.msra.mxu0 0.0
  %5925 = vmatpush.msra.mxu0 0.0
  %5926 = vmatpush.msra.mxu0 0.0
  %5927 = vmatpush.msra.mxu0 0.0
  %5928 = vmatpush.msra.mxu0 0.0
  %5929 = vmatpush.msra.mxu0 0.0
  %5930 = vmatpush.msra.mxu0 0.0
  %5931 = vmatpush.msra.mxu0 0.0
  %5932 = vmatpush.msra.mxu0 0.0
  %5933 = vmatpush.msra.mxu0 0.0
  %5934 = vmatpush.msra.mxu0 0.0
  %5935 = vmatpush.msra.mxu0 0.0
  %5936 = vmatpush.msra.mxu0 0.0
  %5937 = vmatpush.msra.mxu0 0.0
  %5938 = vmatpush.msra.mxu0 %v5920
  %5939 = vmatpush.msra.mxu0 %v5918
  %5940 = vmatmul.f32.gmra.mxu0 %v5922
  %v5941 = vpop.f32.mrf.mxu0
  %v5942 = vadd.f32 0.0, %v5941
  %5943 = vdwg.mxu0
  %5945 = vset.pattern.permute.xlu0 0
  %5946 = vperm.xlu0 %5945, %v5918
  %v5947 = vpop.permute.xlu0 %5946
  %5950 = vset.pattern.permute.xlu0 0
  %5951 = vperm.xlu0 %5950, %v5920
  %v5952 = vpop.permute.xlu0 %5951
  %v5956 = vmul.f32 %v5947, %v5838
  %v5957 = vmul.f32 %v5952, %v5852
  %5958 = vmatpush.msra.mxu0 0.0
  %5959 = vmatpush.msra.mxu0 0.0
  %5960 = vmatpush.msra.mxu0 0.0
  %5961 = vmatpush.msra.mxu0 0.0
  %5962 = vmatpush.msra.mxu0 0.0
  %5963 = vmatpush.msra.mxu0 0.0
  %5964 = vmatpush.msra.mxu0 0.0
  %5965 = vmatpush.msra.mxu0 0.0
  %5966 = vmatpush.msra.mxu0 0.0
  %5967 = vmatpush.msra.mxu0 0.0
  %5968 = vmatpush.msra.mxu0 0.0
  %5969 = vmatpush.msra.mxu0 0.0
  %5970 = vmatpush.msra.mxu0 0.0
  %5971 = vmatpush.msra.mxu0 0.0
  %5972 = vmatpush.msra.mxu0 %v5957
  %5973 = vmatpush.msra.mxu0 %v5956
  %5974 = vmatmul.f32.gmra.mxu0 %v5922
  %v5975 = vpop.f32.mrf.mxu0
  %v5976 = vadd.f32 0.0, %v5975
  %5977 = vdwg.mxu0
  %v5978 = vrcp.pop %v5942
  %5980 = vset.pattern.permute.xlu0 0
  %5981 = vperm.xlu0 %5980, %v5978
  %v5982 = vpop.permute.xlu0 %5981
  %v5984 = vmul.f32 %v5976, %v5982
  %v5986 = vperm.slane %v5802, 0
  %v5989 = vsel %vm2206, %v5984, 0
  %v5992 = vsel %vm2303, %v5801, 0
  %5994 = vmatpush.msra.mxu0 0.0
  %5995 = vmatpush.msra.mxu0 0.0
  %5996 = vmatpush.msra.mxu0 0.0
  %5997 = vmatpush.msra.mxu0 0.0
  %5998 = vmatpush.msra.mxu0 0.0
  %5999 = vmatpush.msra.mxu0 0.0
  %6000 = vmatpush.msra.mxu0 0.0
  %6001 = vmatpush.msra.mxu0 0.0
  %6002 = vmatpush.msra.mxu0 0.0
  %6003 = vmatpush.msra.mxu0 0.0
  %6004 = vmatpush.msra.mxu0 0.0
  %6005 = vmatpush.msra.mxu0 0.0
  %6006 = vmatpush.msra.mxu0 0.0
  %6007 = vmatpush.msra.mxu0 0.0
  %6008 = vmatpush.msra.mxu0 %v5992
  %6009 = vmatpush.msra.mxu0 %v5800
  %6010 = vmatmul.f32.gmra.mxu0 %v5989
  %v6011 = vpop.f32.mrf.mxu0
  %v6012 = vadd.f32 %v5986, %v6011
  %6013 = vdwg.mxu0
  %vm6014 = vcmp.gt.f32.partialorder %v6012, 0.0
  %v6015 = vmul.f32 %v6012, 0.01
  %v6016 = vsel %vm6014, %v6012, %v6015
  %v6018 = vperm.slane %v5805, 0
  %vm6020 = vcmask 80896
  %v6022 = vsel %vm6020, %v6016, 0
  %vm6024 = vcmask 1041408
  %v6026 = vsel %vm6024, %v5804, 0
  %6028 = vmatpush.msra.mxu0 0.0
  %6029 = vmatpush.msra.mxu0 0.0
  %6030 = vmatpush.msra.mxu0 0.0
  %6031 = vmatpush.msra.mxu0 0.0
  %6032 = vmatpush.msra.mxu0 0.0
  %6033 = vmatpush.msra.mxu0 0.0
  %6034 = vmatpush.msra.mxu0 0.0
  %6035 = vmatpush.msra.mxu0 0.0
  %6036 = vmatpush.msra.mxu0 0.0
  %6037 = vmatpush.msra.mxu0 0.0
  %6038 = vmatpush.msra.mxu0 0.0
  %6039 = vmatpush.msra.mxu0 0.0
  %6040 = vmatpush.msra.mxu0 0.0
  %6041 = vmatpush.msra.mxu0 0.0
  %6042 = vmatpush.msra.mxu0 %v6026
  %6043 = vmatpush.msra.mxu0 %v5803
  %6044 = vmatmul.f32.gmra.mxu0 %v6022
  %v6045 = vpop.f32.mrf.mxu0
  %v6046 = vadd.f32 %v6018, %v6045
  %6047 = vdwg.mxu0
  %vm6048 = vcmask 1024
  %6049 = vst.msk [vmem:[%s79] sm:$0x3] %vm6048, %v6046
  // Predicated region
  $region158: #{graph_conv_attention_forward.1} parent=0 // pred_check
    _
  $region159: #{graph_conv_attention_forward.1} parent=0 // pred_check_branch
    %6051 = sbr.rel (0) target = $region161
  $region160: #{graph_conv_attention_forward.1} parent=0 // pred_region
    _
  $region161: #{graph_conv_attention_forward.1} parent=0 // pred_fallthru
    _
  // Predicated region
  $region162: #{graph_conv_attention_forward.1} parent=0 // pred_check
    _
  $region163: #{graph_conv_attention_forward.1} parent=0 // pred_check_branch
    %6053 = sbr.rel (0) target = $region165
  $region164: #{graph_conv_attention_forward.1} parent=0 // pred_region
    _
  $region165: #{graph_conv_attention_forward.1} parent=0 // pred_fallthru
    _

</llo_original>
